<compile_context>
chip_gen: v6e
topology: v6e:2x2x1
jax: 0.10.0
libtpu: 0.0.40
codegen_flags: <defaults>
</compile_context>

<pallas_src>
import functools

import jax
import jax.numpy as jnp
from jax import lax
from jax.experimental import pallas as pl
from jax.experimental.pallas import tpu as pltpu


# ----------------------------- fused Pallas kernel ---------------------------

def _fused_bilstm_kernel(*refs, num_layers, T, Bp, H):
    """Fused bidirectional multi-layer LSTM + output linear.

    refs layout (all whole-array VMEM):
      inputs : x (T*Bp, E)
               per layer: w_il_f (in, 8H), w_il_b (in, 8H), b_il (1, 8H),
                          w_blk (2H, 8H)        [interleaved-gate layout]
               w_out (2H, OPAD), b_out (1, OPAD)
      output : logits (T*Bp, OPAD)
      scratch: per layer (T*Bp, 2H) layer-output buffer (fwd|bwd halves).
    """
    idx = 0
    x_ref = refs[idx]; idx += 1
    layers = []
    for _ in range(num_layers):
        layers.append(refs[idx:idx + 4]); idx += 4
    w_out_ref = refs[idx]; b_out_ref = refs[idx + 1]; idx += 2
    out_ref = refs[idx]; idx += 1
    lay_bufs = refs[idx:idx + num_layers]

    f32 = jnp.float32
    H2 = 2 * H

    cur = x_ref[...]                                        # (T*Bp, in_dim)
    for l in range(num_layers):
        w_il_f, w_il_b, b_il, w_blk_ref = layers[l]

        # Hoisted input projections over ALL timesteps (off the serial chain).
        # fwd weights live in the fwd interleaved columns, bwd in the bwd
        # columns (the other half of each is zero), so a plain add composes
        # the per-step gate input with no lane shuffles.
        proj_f = jnp.dot(cur, w_il_f[...],
                         preferred_element_type=f32) + b_il[...]   # (T*Bp, 8H)
        proj_b = jnp.dot(cur, w_il_b[...],
                         preferred_element_type=f32)               # (T*Bp, 8H)
        w_blk = w_blk_ref[...]                                      # (2H, 8H)
        out_buf = lay_bufs[l]

        # Fused fwd+bwd recurrence: at step s the fwd chain is at time s and
        # the bwd chain at time T-1-s; block-diag w_blk keeps them independent.
        h = jnp.zeros((Bp, H2), f32)
        c = jnp.zeros((Bp, H2), f32)
        for s in range(T):                                  # static unroll
            rb_f = s * Bp                                   # sublane-tile aligned
            rb_b = (T - 1 - s) * Bp
            g_in = proj_f[rb_f:rb_f + Bp, :] + proj_b[rb_b:rb_b + Bp, :]
            gates = g_in + jnp.dot(h, w_blk, preferred_element_type=f32)
            act = jnp.tanh(gates)           # single EUP transcendental
            sig = 0.5 * act + 0.5           # i/f/o (weights pre-scaled by 0.5)
            i_g = sig[:, 0 * H2:1 * H2]
            f_g = sig[:, 1 * H2:2 * H2]
            g_g = act[:, 2 * H2:3 * H2]
            o_g = sig[:, 3 * H2:4 * H2]
            c = f_g * c + i_g * g_g
            h = o_g * jnp.tanh(c)
            # fwd half -> time s, bwd half -> time T-1-s ("free" concat).
            out_buf[rb_f:rb_f + Bp, 0:H] = h[:, 0:H]
            out_buf[rb_b:rb_b + Bp, H:H2] = h[:, H:H2]
        cur = out_buf[...]                                  # (T*Bp, 2H)

    # Final linear fused into the same kernel; lane-dense (padded) output.
    out_ref[...] = (jnp.dot(cur, w_out_ref[...], preferred_element_type=f32)
                    + b_out_ref[...]).astype(out_ref.dtype)


# ------------------------- kernel-side weight preparation ---------------------

def _prepare_layer_weights(w_ih_f, w_hh_f, b_f, w_ih_b, w_hh_b, b_b, H):
    """Build interleaved-gate fused weights from canonical (torch-layout^T) params.

    Canonical inputs (unscaled): w_ih_* (in, 4H), w_hh_* (H, 4H), b_* (1, 4H),
    gate order (i, f, g, o).  i/f/o columns are pre-scaled by 0.5 here so the
    kernel can use a single tanh (sigmoid(z) = 0.5*tanh(z/2)+0.5).
    NOTE: when importing trained torch weights, pass the UNscaled weights and
    b_* = bias_ih + bias_hh; this function applies the 0.5 scaling itself.
    """
    in_dim = w_ih_f.shape[0]
    z_ih = jnp.zeros((in_dim, H), jnp.float32)
    z_hh = jnp.zeros((H, H), jnp.float32)
    cols_f, cols_b, cols_bias, cols_top, cols_bot = [], [], [], [], []
    for g in range(4):                       # gate order i, f, g, o
        s = 1.0 if g == 2 else 0.5           # only the g gate stays unscaled
        sl = slice(g * H, (g + 1) * H)
        cols_f += [w_ih_f[:, sl] * s, z_ih]
        cols_b += [z_ih, w_ih_b[:, sl] * s]
        cols_bias += [b_f[:, sl] * s, b_b[:, sl] * s]
        cols_top += [w_hh_f[:, sl] * s, z_hh]
        cols_bot += [z_hh, w_hh_b[:, sl] * s]
    w_il_f = jnp.concatenate(cols_f, axis=1)                 # (in, 8H)
    w_il_b = jnp.concatenate(cols_b, axis=1)                 # (in, 8H)
    b_il = jnp.concatenate(cols_bias, axis=1)                # (1, 8H)
    w_blk = jnp.concatenate([jnp.concatenate(cols_top, axis=1),
                             jnp.concatenate(cols_bot, axis=1)], axis=0)  # (2H, 8H)
    return w_il_f, w_il_b, b_il, w_blk


# ------------------------------ JAX wrapper ----------------------------------

_VMEM = pl.BlockSpec(memory_space=pltpu.MemorySpace.VMEM)


def lstm_classifier_forward(tokens, params, *, num_layers, hidden_size,
                            output_size):
    """tokens: (B, T) int32 indices -> logits (B, T, output_size)."""
    B, T = tokens.shape
    H = hidden_size
    O = output_size
    Bp = max(8, ((B + 7) // 8) * 8)            # fill the 8 sublanes
    OPAD = ((O + 127) // 128) * 128            # lane-dense output stores

    emb = params["embedding"][tokens]                       # (B, T, E) gather
    emb = jnp.pad(emb, ((0, Bp - B), (0, 0), (0, 0)))       # pad batch rows
    x = jnp.transpose(emb, (1, 0, 2)).reshape(T * Bp, -1)   # time-major, flat

    inputs = [x]
    for l in range(num_layers):
        inputs += list(_prepare_layer_weights(
            params[f"w_ih_l{l}"], params[f"w_hh_l{l}"], params[f"b_l{l}"],
            params[f"w_ih_l{l}_rev"], params[f"w_hh_l{l}_rev"],
            params[f"b_l{l}_rev"], H))
    w_out_pad = jnp.pad(params["w_out"], ((0, 0), (0, OPAD - O)))
    b_out_pad = jnp.pad(params["b_out"], ((0, 0), (0, OPAD - O)))
    inputs += [w_out_pad, b_out_pad]

    kernel = functools.partial(_fused_bilstm_kernel, num_layers=num_layers,
                               T=T, Bp=Bp, H=H)
    out_flat = pl.pallas_call(
        kernel,
        out_shape=jax.ShapeDtypeStruct((T * Bp, OPAD), jnp.float32),
        in_specs=[_VMEM] * len(inputs),
        out_specs=_VMEM,
        scratch_shapes=[pltpu.VMEM((T * Bp, 2 * H), jnp.float32)
                        for _ in range(num_layers)],
        compiler_params=pltpu.CompilerParams(
            vmem_limit_bytes=32 * 1024 * 1024),
    )(*inputs)

    out = out_flat.reshape(T, Bp, OPAD)[:, :B, :O]          # drop padding
    return jnp.transpose(out, (1, 0, 2))                    # (B, T, O)


# ---------------------------- parameter creation -----------------------------

def _xavier_normal(key, shape):
    fan_out, fan_in = shape[0], shape[1]
    std = (2.0 / (fan_in + fan_out)) ** 0.5
    return std * jax.random.normal(key, shape, dtype=jnp.float32)


def init_params(key, input_size, hidden_size, output_size, num_embeddings,
                num_layers):
    """Mirrors LSTMClassifier.init_weight(): xavier_normal weights, zero biases.

    Parameters are stored in canonical (unscaled) form; the kernel-side fusion
    and 0.5 pre-scaling happen in _prepare_layer_weights.
    """
    params = {}
    keys = jax.random.split(key, 2 + 4 * num_layers)
    k = iter(keys)

    # nn.Embedding(input_size, num_embeddings): weight (input_size, num_embeddings)
    params["embedding"] = _xavier_normal(next(k), (input_size, num_embeddings))

    H = hidden_size
    for layer in range(num_layers):
        in_dim = num_embeddings if layer == 0 else 2 * hidden_size
        for suffix in ("", "_rev"):
            # torch weight_ih_l{k}: (4H, in_dim); stored transposed (in_dim, 4H)
            w_ih = _xavier_normal(next(k), (4 * H, in_dim)).T
            w_hh = _xavier_normal(next(k), (4 * H, H)).T
            params[f"w_ih_l{layer}{suffix}"] = jnp.asarray(w_ih)
            params[f"w_hh_l{layer}{suffix}"] = jnp.asarray(w_hh)
            # bias_ih + bias_hh, both initialized to 0 -> combined zeros (1, 4H).
            # Note: when loading trained torch weights, store bias_ih + bias_hh here.
            params[f"b_l{layer}{suffix}"] = jnp.zeros((1, 4 * H), jnp.float32)

    # nn.Linear(2H, output_size): weight (output_size, 2H); stored transposed
    params["w_out"] = _xavier_normal(next(k), (output_size, 2 * H)).T
    params["b_out"] = jnp.zeros((1, output_size), jnp.float32)
    return params


# ------------------------------ pure-JAX reference ---------------------------

def _reference_forward(tokens, params, *, num_layers, hidden_size, output_size):
    emb = params["embedding"][tokens]                       # (B, T, E)
    x = jnp.transpose(emb, (1, 0, 2))                       # (T, B, E)
    H = hidden_size

    def run_dir(x_seq, w_ih, w_hh, b, reverse):
        B = x_seq.shape[1]

        def cell(carry, x_t):
            h, c = carry
            gates = x_t @ w_ih + h @ w_hh + b
            i_g = jax.nn.sigmoid(gates[:, 0 * H:1 * H])
            f_g = jax.nn.sigmoid(gates[:, 1 * H:2 * H])
            g_g = jnp.tanh(gates[:, 2 * H:3 * H])
            o_g = jax.nn.sigmoid(gates[:, 3 * H:4 * H])
            c_new = f_g * c + i_g * g_g
            h_new = o_g * jnp.tanh(c_new)
            return (h_new, c_new), h_new

        init = (jnp.zeros((B, H), jnp.float32), jnp.zeros((B, H), jnp.float32))
        _, hs = lax.scan(cell, init, x_seq, reverse=reverse)
        return hs                                           # (T, B, H)

    for l in range(num_layers):
        fwd = run_dir(x, params[f"w_ih_l{l}"], params[f"w_hh_l{l}"],
                      params[f"b_l{l}"], reverse=False)
        bwd = run_dir(x, params[f"w_ih_l{l}_rev"], params[f"w_hh_l{l}_rev"],
                      params[f"b_l{l}_rev"], reverse=True)
        x = jnp.concatenate([fwd, bwd], axis=-1)            # (T, B, 2H)

    y = x @ params["w_out"] + params["b_out"]               # (T, B, O)
    return jnp.transpose(y, (1, 0, 2))


# ----------------------------------- main -------------------------------------

if __name__ == "__main__":
    # Module hyperparameters (small, consistent with the forward pass).
    input_size = 16        # vocab size for the embedding
    num_embeddings = 16    # embedding dim (LSTM input size)
    hidden_size = 32
    output_size = 8
    num_layers = 2

    batch, seq = 2, 8

    key = jax.random.PRNGKey(0)
    pkey, dkey = jax.random.split(key)
    params = init_params(pkey, input_size, hidden_size, output_size,
                         num_embeddings, num_layers)

    tokens = jax.random.randint(dkey, (batch, seq), 0, input_size,
                                dtype=jnp.int32)

    fwd = jax.jit(functools.partial(lstm_classifier_forward,
                                    num_layers=num_layers,
                                    hidden_size=hidden_size,
                                    output_size=output_size))
    logits = fwd(tokens, params)
    jax.block_until_ready(logits)

    assert logits.shape == (batch, seq, output_size)
    assert logits.dtype == jnp.float32

    ref = _reference_forward(tokens, params, num_layers=num_layers,
                             hidden_size=hidden_size, output_size=output_size)
    assert jnp.allclose(logits, ref, rtol=1e-4, atol=1e-4), (
        float(jnp.max(jnp.abs(logits - ref))))

    print("KERNEL_OK")
</pallas_src>

<mosaic_0001>
module attributes {stable_mosaic.version = 11 : i64} {
  func.func @_fused_bilstm_kernel(%arg0: memref<64x16xf32, #tpu.memory_space<vmem>>, %arg1: memref<16x256xf32, #tpu.memory_space<vmem>>, %arg2: memref<16x256xf32, #tpu.memory_space<vmem>>, %arg3: memref<1x256xf32, #tpu.memory_space<vmem>>, %arg4: memref<64x256xf32, #tpu.memory_space<vmem>>, %arg5: memref<64x256xf32, #tpu.memory_space<vmem>>, %arg6: memref<64x256xf32, #tpu.memory_space<vmem>>, %arg7: memref<1x256xf32, #tpu.memory_space<vmem>>, %arg8: memref<64x256xf32, #tpu.memory_space<vmem>>, %arg9: memref<64x128xf32, #tpu.memory_space<vmem>>, %arg10: memref<1x128xf32, #tpu.memory_space<vmem>>, %arg11: memref<64x128xf32, #tpu.memory_space<vmem>>, %arg12: memref<64x64xf32, #tpu.memory_space<vmem>>, %arg13: memref<64x64xf32, #tpu.memory_space<vmem>>) attributes {dimension_semantics = [], scalar_prefetch = 0 : i64, scratch_operands = 2 : i64, tpu.core_type = #tpu.core_type<tc>} {
    %c0 = arith.constant 0 : index
    %c0_0 = arith.constant 0 : index
    %0 = vector.load %arg0[%c0, %c0_0] : memref<64x16xf32, #tpu.memory_space<vmem>>, vector<64x16xf32>
    %c0_1 = arith.constant 0 : index
    %c0_2 = arith.constant 0 : index
    %1 = vector.load %arg1[%c0_1, %c0_2] : memref<16x256xf32, #tpu.memory_space<vmem>>, vector<16x256xf32>
    %cst = arith.constant dense<0.000000e+00> : vector<64x256xf32>
    %2 = tpu.matmul %0, %1, %cst {dimension_numbers = #tpu.dot_dimension_numbers<[1], [0], [0], [1], [0, 0, 1, 1], [], []>} : vector<64x16xf32>, vector<16x256xf32>, vector<64x256xf32> -> vector<64x256xf32>
    %c0_3 = arith.constant 0 : index
    %c0_4 = arith.constant 0 : index
    %3 = vector.load %arg3[%c0_3, %c0_4] : memref<1x256xf32, #tpu.memory_space<vmem>>, vector<1x256xf32>
    %4 = vector.broadcast %3 : vector<1x256xf32> to vector<64x256xf32>
    %5 = arith.addf %2, %4 : vector<64x256xf32>
    %c0_5 = arith.constant 0 : index
    %c0_6 = arith.constant 0 : index
    %6 = vector.load %arg2[%c0_5, %c0_6] : memref<16x256xf32, #tpu.memory_space<vmem>>, vector<16x256xf32>
    %cst_7 = arith.constant dense<0.000000e+00> : vector<64x256xf32>
    %7 = tpu.matmul %0, %6, %cst_7 {dimension_numbers = #tpu.dot_dimension_numbers<[1], [0], [0], [1], [0, 0, 1, 1], [], []>} : vector<64x16xf32>, vector<16x256xf32>, vector<64x256xf32> -> vector<64x256xf32>
    %c0_8 = arith.constant 0 : index
    %c0_9 = arith.constant 0 : index
    %8 = vector.load %arg4[%c0_8, %c0_9] : memref<64x256xf32, #tpu.memory_space<vmem>>, vector<64x256xf32>
    %cst_10 = arith.constant 0.000000e+00 : f32
    %9 = vector.broadcast %cst_10 : f32 to vector<8x64xf32>
    %cst_11 = arith.constant 0.000000e+00 : f32
    %10 = vector.broadcast %cst_11 : f32 to vector<8x64xf32>
    %11 = vector.extract_strided_slice %5 {offsets = [0, 0], sizes = [8, 256], strides = [1, 1]} : vector<64x256xf32> to vector<8x256xf32>
    %12 = vector.extract_strided_slice %7 {offsets = [56, 0], sizes = [8, 256], strides = [1, 1]} : vector<64x256xf32> to vector<8x256xf32>
    %13 = arith.addf %11, %12 : vector<8x256xf32>
    %cst_12 = arith.constant dense<0.000000e+00> : vector<8x256xf32>
    %14 = tpu.matmul %9, %8, %cst_12 {dimension_numbers = #tpu.dot_dimension_numbers<[1], [0], [0], [1], [0, 0, 1, 1], [], []>} : vector<8x64xf32>, vector<64x256xf32>, vector<8x256xf32> -> vector<8x256xf32>
    %15 = arith.addf %13, %14 : vector<8x256xf32>
    %16 = math.tanh %15 : vector<8x256xf32>
    %cst_13 = arith.constant 5.000000e-01 : f32
    %17 = vector.broadcast %cst_13 : f32 to vector<8x256xf32>
    %18 = arith.mulf %17, %16 : vector<8x256xf32>
    %cst_14 = arith.constant 5.000000e-01 : f32
    %19 = vector.broadcast %cst_14 : f32 to vector<8x256xf32>
    %20 = arith.addf %18, %19 : vector<8x256xf32>
    %21 = vector.extract_strided_slice %20 {offsets = [0, 0], sizes = [8, 64], strides = [1, 1]} : vector<8x256xf32> to vector<8x64xf32>
    %22 = vector.extract_strided_slice %20 {offsets = [0, 64], sizes = [8, 64], strides = [1, 1]} : vector<8x256xf32> to vector<8x64xf32>
    %23 = vector.extract_strided_slice %16 {offsets = [0, 128], sizes = [8, 64], strides = [1, 1]} : vector<8x256xf32> to vector<8x64xf32>
    %24 = vector.extract_strided_slice %20 {offsets = [0, 192], sizes = [8, 64], strides = [1, 1]} : vector<8x256xf32> to vector<8x64xf32>
    %25 = arith.mulf %22, %10 : vector<8x64xf32>
    %26 = arith.mulf %21, %23 : vector<8x64xf32>
    %27 = arith.addf %25, %26 : vector<8x64xf32>
    %28 = math.tanh %27 : vector<8x64xf32>
    %29 = arith.mulf %24, %28 : vector<8x64xf32>
    %30 = vector.extract_strided_slice %29 {offsets = [0, 0], sizes = [8, 32], strides = [1, 1]} : vector<8x64xf32> to vector<8x32xf32>
    %c0_15 = arith.constant 0 : index
    %c0_16 = arith.constant 0 : index
    %31 = vector.load %arg12[%c0_15, %c0_16] : memref<64x64xf32, #tpu.memory_space<vmem>>, vector<8x32xf32>
    tpu.vector_store %arg12[%c0_15, %c0_16], %30 {strides = array<i32>} : memref<64x64xf32, #tpu.memory_space<vmem>>, vector<8x32xf32>,
    %32 = vector.extract_strided_slice %29 {offsets = [0, 32], sizes = [8, 32], strides = [1, 1]} : vector<8x64xf32> to vector<8x32xf32>
    %c56 = arith.constant 56 : index
    %c32 = arith.constant 32 : index
    %33 = vector.load %arg12[%c56, %c32] : memref<64x64xf32, #tpu.memory_space<vmem>>, vector<8x32xf32>
    tpu.vector_store %arg12[%c56, %c32], %32 {strides = array<i32>} : memref<64x64xf32, #tpu.memory_space<vmem>>, vector<8x32xf32>,
    %34 = vector.extract_strided_slice %5 {offsets = [8, 0], sizes = [8, 256], strides = [1, 1]} : vector<64x256xf32> to vector<8x256xf32>
    %35 = vector.extract_strided_slice %7 {offsets = [48, 0], sizes = [8, 256], strides = [1, 1]} : vector<64x256xf32> to vector<8x256xf32>
    %36 = arith.addf %34, %35 : vector<8x256xf32>
    %cst_17 = arith.constant dense<0.000000e+00> : vector<8x256xf32>
    %37 = tpu.matmul %29, %8, %cst_17 {dimension_numbers = #tpu.dot_dimension_numbers<[1], [0], [0], [1], [0, 0, 1, 1], [], []>} : vector<8x64xf32>, vector<64x256xf32>, vector<8x256xf32> -> vector<8x256xf32>
    %38 = arith.addf %36, %37 : vector<8x256xf32>
    %39 = math.tanh %38 : vector<8x256xf32>
    %cst_18 = arith.constant 5.000000e-01 : f32
    %40 = vector.broadcast %cst_18 : f32 to vector<8x256xf32>
    %41 = arith.mulf %40, %39 : vector<8x256xf32>
    %cst_19 = arith.constant 5.000000e-01 : f32
    %42 = vector.broadcast %cst_19 : f32 to vector<8x256xf32>
    %43 = arith.addf %41, %42 : vector<8x256xf32>
    %44 = vector.extract_strided_slice %43 {offsets = [0, 0], sizes = [8, 64], strides = [1, 1]} : vector<8x256xf32> to vector<8x64xf32>
    %45 = vector.extract_strided_slice %43 {offsets = [0, 64], sizes = [8, 64], strides = [1, 1]} : vector<8x256xf32> to vector<8x64xf32>
    %46 = vector.extract_strided_slice %39 {offsets = [0, 128], sizes = [8, 64], strides = [1, 1]} : vector<8x256xf32> to vector<8x64xf32>
    %47 = vector.extract_strided_slice %43 {offsets = [0, 192], sizes = [8, 64], strides = [1, 1]} : vector<8x256xf32> to vector<8x64xf32>
    %48 = arith.mulf %45, %27 : vector<8x64xf32>
    %49 = arith.mulf %44, %46 : vector<8x64xf32>
    %50 = arith.addf %48, %49 : vector<8x64xf32>
    %51 = math.tanh %50 : vector<8x64xf32>
    %52 = arith.mulf %47, %51 : vector<8x64xf32>
    %53 = vector.extract_strided_slice %52 {offsets = [0, 0], sizes = [8, 32], strides = [1, 1]} : vector<8x64xf32> to vector<8x32xf32>
    %c8 = arith.constant 8 : index
    %c0_20 = arith.constant 0 : index
    %54 = vector.load %arg12[%c8, %c0_20] : memref<64x64xf32, #tpu.memory_space<vmem>>, vector<8x32xf32>
    tpu.vector_store %arg12[%c8, %c0_20], %53 {strides = array<i32>} : memref<64x64xf32, #tpu.memory_space<vmem>>, vector<8x32xf32>,
    %55 = vector.extract_strided_slice %52 {offsets = [0, 32], sizes = [8, 32], strides = [1, 1]} : vector<8x64xf32> to vector<8x32xf32>
    %c48 = arith.constant 48 : index
    %c32_21 = arith.constant 32 : index
    %56 = vector.load %arg12[%c48, %c32_21] : memref<64x64xf32, #tpu.memory_space<vmem>>, vector<8x32xf32>
    tpu.vector_store %arg12[%c48, %c32_21], %55 {strides = array<i32>} : memref<64x64xf32, #tpu.memory_space<vmem>>, vector<8x32xf32>,
    %57 = vector.extract_strided_slice %5 {offsets = [16, 0], sizes = [8, 256], strides = [1, 1]} : vector<64x256xf32> to vector<8x256xf32>
    %58 = vector.extract_strided_slice %7 {offsets = [40, 0], sizes = [8, 256], strides = [1, 1]} : vector<64x256xf32> to vector<8x256xf32>
    %59 = arith.addf %57, %58 : vector<8x256xf32>
    %cst_22 = arith.constant dense<0.000000e+00> : vector<8x256xf32>
    %60 = tpu.matmul %52, %8, %cst_22 {dimension_numbers = #tpu.dot_dimension_numbers<[1], [0], [0], [1], [0, 0, 1, 1], [], []>} : vector<8x64xf32>, vector<64x256xf32>, vector<8x256xf32> -> vector<8x256xf32>
    %61 = arith.addf %59, %60 : vector<8x256xf32>
    %62 = math.tanh %61 : vector<8x256xf32>
    %cst_23 = arith.constant 5.000000e-01 : f32
    %63 = vector.broadcast %cst_23 : f32 to vector<8x256xf32>
    %64 = arith.mulf %63, %62 : vector<8x256xf32>
    %cst_24 = arith.constant 5.000000e-01 : f32
    %65 = vector.broadcast %cst_24 : f32 to vector<8x256xf32>
    %66 = arith.addf %64, %65 : vector<8x256xf32>
    %67 = vector.extract_strided_slice %66 {offsets = [0, 0], sizes = [8, 64], strides = [1, 1]} : vector<8x256xf32> to vector<8x64xf32>
    %68 = vector.extract_strided_slice %66 {offsets = [0, 64], sizes = [8, 64], strides = [1, 1]} : vector<8x256xf32> to vector<8x64xf32>
    %69 = vector.extract_strided_slice %62 {offsets = [0, 128], sizes = [8, 64], strides = [1, 1]} : vector<8x256xf32> to vector<8x64xf32>
    %70 = vector.extract_strided_slice %66 {offsets = [0, 192], sizes = [8, 64], strides = [1, 1]} : vector<8x256xf32> to vector<8x64xf32>
    %71 = arith.mulf %68, %50 : vector<8x64xf32>
    %72 = arith.mulf %67, %69 : vector<8x64xf32>
    %73 = arith.addf %71, %72 : vector<8x64xf32>
    %74 = math.tanh %73 : vector<8x64xf32>
    %75 = arith.mulf %70, %74 : vector<8x64xf32>
    %76 = vector.extract_strided_slice %75 {offsets = [0, 0], sizes = [8, 32], strides = [1, 1]} : vector<8x64xf32> to vector<8x32xf32>
    %c16 = arith.constant 16 : index
    %c0_25 = arith.constant 0 : index
    %77 = vector.load %arg12[%c16, %c0_25] : memref<64x64xf32, #tpu.memory_space<vmem>>, vector<8x32xf32>
    tpu.vector_store %arg12[%c16, %c0_25], %76 {strides = array<i32>} : memref<64x64xf32, #tpu.memory_space<vmem>>, vector<8x32xf32>,
    %78 = vector.extract_strided_slice %75 {offsets = [0, 32], sizes = [8, 32], strides = [1, 1]} : vector<8x64xf32> to vector<8x32xf32>
    %c40 = arith.constant 40 : index
    %c32_26 = arith.constant 32 : index
    %79 = vector.load %arg12[%c40, %c32_26] : memref<64x64xf32, #tpu.memory_space<vmem>>, vector<8x32xf32>
    tpu.vector_store %arg12[%c40, %c32_26], %78 {strides = array<i32>} : memref<64x64xf32, #tpu.memory_space<vmem>>, vector<8x32xf32>,
    %80 = vector.extract_strided_slice %5 {offsets = [24, 0], sizes = [8, 256], strides = [1, 1]} : vector<64x256xf32> to vector<8x256xf32>
    %81 = vector.extract_strided_slice %7 {offsets = [32, 0], sizes = [8, 256], strides = [1, 1]} : vector<64x256xf32> to vector<8x256xf32>
    %82 = arith.addf %80, %81 : vector<8x256xf32>
    %cst_27 = arith.constant dense<0.000000e+00> : vector<8x256xf32>
    %83 = tpu.matmul %75, %8, %cst_27 {dimension_numbers = #tpu.dot_dimension_numbers<[1], [0], [0], [1], [0, 0, 1, 1], [], []>} : vector<8x64xf32>, vector<64x256xf32>, vector<8x256xf32> -> vector<8x256xf32>
    %84 = arith.addf %82, %83 : vector<8x256xf32>
    %85 = math.tanh %84 : vector<8x256xf32>
    %cst_28 = arith.constant 5.000000e-01 : f32
    %86 = vector.broadcast %cst_28 : f32 to vector<8x256xf32>
    %87 = arith.mulf %86, %85 : vector<8x256xf32>
    %cst_29 = arith.constant 5.000000e-01 : f32
    %88 = vector.broadcast %cst_29 : f32 to vector<8x256xf32>
    %89 = arith.addf %87, %88 : vector<8x256xf32>
    %90 = vector.extract_strided_slice %89 {offsets = [0, 0], sizes = [8, 64], strides = [1, 1]} : vector<8x256xf32> to vector<8x64xf32>
    %91 = vector.extract_strided_slice %89 {offsets = [0, 64], sizes = [8, 64], strides = [1, 1]} : vector<8x256xf32> to vector<8x64xf32>
    %92 = vector.extract_strided_slice %85 {offsets = [0, 128], sizes = [8, 64], strides = [1, 1]} : vector<8x256xf32> to vector<8x64xf32>
    %93 = vector.extract_strided_slice %89 {offsets = [0, 192], sizes = [8, 64], strides = [1, 1]} : vector<8x256xf32> to vector<8x64xf32>
    %94 = arith.mulf %91, %73 : vector<8x64xf32>
    %95 = arith.mulf %90, %92 : vector<8x64xf32>
    %96 = arith.addf %94, %95 : vector<8x64xf32>
    %97 = math.tanh %96 : vector<8x64xf32>
    %98 = arith.mulf %93, %97 : vector<8x64xf32>
    %99 = vector.extract_strided_slice %98 {offsets = [0, 0], sizes = [8, 32], strides = [1, 1]} : vector<8x64xf32> to vector<8x32xf32>
    %c24 = arith.constant 24 : index
    %c0_30 = arith.constant 0 : index
    %100 = vector.load %arg12[%c24, %c0_30] : memref<64x64xf32, #tpu.memory_space<vmem>>, vector<8x32xf32>
    tpu.vector_store %arg12[%c24, %c0_30], %99 {strides = array<i32>} : memref<64x64xf32, #tpu.memory_space<vmem>>, vector<8x32xf32>,
    %101 = vector.extract_strided_slice %98 {offsets = [0, 32], sizes = [8, 32], strides = [1, 1]} : vector<8x64xf32> to vector<8x32xf32>
    %c32_31 = arith.constant 32 : index
    %c32_32 = arith.constant 32 : index
    %102 = vector.load %arg12[%c32_31, %c32_32] : memref<64x64xf32, #tpu.memory_space<vmem>>, vector<8x32xf32>
    tpu.vector_store %arg12[%c32_31, %c32_32], %101 {strides = array<i32>} : memref<64x64xf32, #tpu.memory_space<vmem>>, vector<8x32xf32>,
    %103 = vector.extract_strided_slice %5 {offsets = [32, 0], sizes = [8, 256], strides = [1, 1]} : vector<64x256xf32> to vector<8x256xf32>
    %104 = vector.extract_strided_slice %7 {offsets = [24, 0], sizes = [8, 256], strides = [1, 1]} : vector<64x256xf32> to vector<8x256xf32>
    %105 = arith.addf %103, %104 : vector<8x256xf32>
    %cst_33 = arith.constant dense<0.000000e+00> : vector<8x256xf32>
    %106 = tpu.matmul %98, %8, %cst_33 {dimension_numbers = #tpu.dot_dimension_numbers<[1], [0], [0], [1], [0, 0, 1, 1], [], []>} : vector<8x64xf32>, vector<64x256xf32>, vector<8x256xf32> -> vector<8x256xf32>
    %107 = arith.addf %105, %106 : vector<8x256xf32>
    %108 = math.tanh %107 : vector<8x256xf32>
    %cst_34 = arith.constant 5.000000e-01 : f32
    %109 = vector.broadcast %cst_34 : f32 to vector<8x256xf32>
    %110 = arith.mulf %109, %108 : vector<8x256xf32>
    %cst_35 = arith.constant 5.000000e-01 : f32
    %111 = vector.broadcast %cst_35 : f32 to vector<8x256xf32>
    %112 = arith.addf %110, %111 : vector<8x256xf32>
    %113 = vector.extract_strided_slice %112 {offsets = [0, 0], sizes = [8, 64], strides = [1, 1]} : vector<8x256xf32> to vector<8x64xf32>
    %114 = vector.extract_strided_slice %112 {offsets = [0, 64], sizes = [8, 64], strides = [1, 1]} : vector<8x256xf32> to vector<8x64xf32>
    %115 = vector.extract_strided_slice %108 {offsets = [0, 128], sizes = [8, 64], strides = [1, 1]} : vector<8x256xf32> to vector<8x64xf32>
    %116 = vector.extract_strided_slice %112 {offsets = [0, 192], sizes = [8, 64], strides = [1, 1]} : vector<8x256xf32> to vector<8x64xf32>
    %117 = arith.mulf %114, %96 : vector<8x64xf32>
    %118 = arith.mulf %113, %115 : vector<8x64xf32>
    %119 = arith.addf %117, %118 : vector<8x64xf32>
    %120 = math.tanh %119 : vector<8x64xf32>
    %121 = arith.mulf %116, %120 : vector<8x64xf32>
    %122 = vector.extract_strided_slice %121 {offsets = [0, 0], sizes = [8, 32], strides = [1, 1]} : vector<8x64xf32> to vector<8x32xf32>
    %c32_36 = arith.constant 32 : index
    %c0_37 = arith.constant 0 : index
    %123 = vector.load %arg12[%c32_36, %c0_37] : memref<64x64xf32, #tpu.memory_space<vmem>>, vector<8x32xf32>
    tpu.vector_store %arg12[%c32_36, %c0_37], %122 {strides = array<i32>} : memref<64x64xf32, #tpu.memory_space<vmem>>, vector<8x32xf32>,
    %124 = vector.extract_strided_slice %121 {offsets = [0, 32], sizes = [8, 32], strides = [1, 1]} : vector<8x64xf32> to vector<8x32xf32>
    %c24_38 = arith.constant 24 : index
    %c32_39 = arith.constant 32 : index
    %125 = vector.load %arg12[%c24_38, %c32_39] : memref<64x64xf32, #tpu.memory_space<vmem>>, vector<8x32xf32>
    tpu.vector_store %arg12[%c24_38, %c32_39], %124 {strides = array<i32>} : memref<64x64xf32, #tpu.memory_space<vmem>>, vector<8x32xf32>,
    %126 = vector.extract_strided_slice %5 {offsets = [40, 0], sizes = [8, 256], strides = [1, 1]} : vector<64x256xf32> to vector<8x256xf32>
    %127 = vector.extract_strided_slice %7 {offsets = [16, 0], sizes = [8, 256], strides = [1, 1]} : vector<64x256xf32> to vector<8x256xf32>
    %128 = arith.addf %126, %127 : vector<8x256xf32>
    %cst_40 = arith.constant dense<0.000000e+00> : vector<8x256xf32>
    %129 = tpu.matmul %121, %8, %cst_40 {dimension_numbers = #tpu.dot_dimension_numbers<[1], [0], [0], [1], [0, 0, 1, 1], [], []>} : vector<8x64xf32>, vector<64x256xf32>, vector<8x256xf32> -> vector<8x256xf32>
    %130 = arith.addf %128, %129 : vector<8x256xf32>
    %131 = math.tanh %130 : vector<8x256xf32>
    %cst_41 = arith.constant 5.000000e-01 : f32
    %132 = vector.broadcast %cst_41 : f32 to vector<8x256xf32>
    %133 = arith.mulf %132, %131 : vector<8x256xf32>
    %cst_42 = arith.constant 5.000000e-01 : f32
    %134 = vector.broadcast %cst_42 : f32 to vector<8x256xf32>
    %135 = arith.addf %133, %134 : vector<8x256xf32>
    %136 = vector.extract_strided_slice %135 {offsets = [0, 0], sizes = [8, 64], strides = [1, 1]} : vector<8x256xf32> to vector<8x64xf32>
    %137 = vector.extract_strided_slice %135 {offsets = [0, 64], sizes = [8, 64], strides = [1, 1]} : vector<8x256xf32> to vector<8x64xf32>
    %138 = vector.extract_strided_slice %131 {offsets = [0, 128], sizes = [8, 64], strides = [1, 1]} : vector<8x256xf32> to vector<8x64xf32>
    %139 = vector.extract_strided_slice %135 {offsets = [0, 192], sizes = [8, 64], strides = [1, 1]} : vector<8x256xf32> to vector<8x64xf32>
    %140 = arith.mulf %137, %119 : vector<8x64xf32>
    %141 = arith.mulf %136, %138 : vector<8x64xf32>
    %142 = arith.addf %140, %141 : vector<8x64xf32>
    %143 = math.tanh %142 : vector<8x64xf32>
    %144 = arith.mulf %139, %143 : vector<8x64xf32>
    %145 = vector.extract_strided_slice %144 {offsets = [0, 0], sizes = [8, 32], strides = [1, 1]} : vector<8x64xf32> to vector<8x32xf32>
    %c40_43 = arith.constant 40 : index
    %c0_44 = arith.constant 0 : index
    %146 = vector.load %arg12[%c40_43, %c0_44] : memref<64x64xf32, #tpu.memory_space<vmem>>, vector<8x32xf32>
    tpu.vector_store %arg12[%c40_43, %c0_44], %145 {strides = array<i32>} : memref<64x64xf32, #tpu.memory_space<vmem>>, vector<8x32xf32>,
    %147 = vector.extract_strided_slice %144 {offsets = [0, 32], sizes = [8, 32], strides = [1, 1]} : vector<8x64xf32> to vector<8x32xf32>
    %c16_45 = arith.constant 16 : index
    %c32_46 = arith.constant 32 : index
    %148 = vector.load %arg12[%c16_45, %c32_46] : memref<64x64xf32, #tpu.memory_space<vmem>>, vector<8x32xf32>
    tpu.vector_store %arg12[%c16_45, %c32_46], %147 {strides = array<i32>} : memref<64x64xf32, #tpu.memory_space<vmem>>, vector<8x32xf32>,
    %149 = vector.extract_strided_slice %5 {offsets = [48, 0], sizes = [8, 256], strides = [1, 1]} : vector<64x256xf32> to vector<8x256xf32>
    %150 = vector.extract_strided_slice %7 {offsets = [8, 0], sizes = [8, 256], strides = [1, 1]} : vector<64x256xf32> to vector<8x256xf32>
    %151 = arith.addf %149, %150 : vector<8x256xf32>
    %cst_47 = arith.constant dense<0.000000e+00> : vector<8x256xf32>
    %152 = tpu.matmul %144, %8, %cst_47 {dimension_numbers = #tpu.dot_dimension_numbers<[1], [0], [0], [1], [0, 0, 1, 1], [], []>} : vector<8x64xf32>, vector<64x256xf32>, vector<8x256xf32> -> vector<8x256xf32>
    %153 = arith.addf %151, %152 : vector<8x256xf32>
    %154 = math.tanh %153 : vector<8x256xf32>
    %cst_48 = arith.constant 5.000000e-01 : f32
    %155 = vector.broadcast %cst_48 : f32 to vector<8x256xf32>
    %156 = arith.mulf %155, %154 : vector<8x256xf32>
    %cst_49 = arith.constant 5.000000e-01 : f32
    %157 = vector.broadcast %cst_49 : f32 to vector<8x256xf32>
    %158 = arith.addf %156, %157 : vector<8x256xf32>
    %159 = vector.extract_strided_slice %158 {offsets = [0, 0], sizes = [8, 64], strides = [1, 1]} : vector<8x256xf32> to vector<8x64xf32>
    %160 = vector.extract_strided_slice %158 {offsets = [0, 64], sizes = [8, 64], strides = [1, 1]} : vector<8x256xf32> to vector<8x64xf32>
    %161 = vector.extract_strided_slice %154 {offsets = [0, 128], sizes = [8, 64], strides = [1, 1]} : vector<8x256xf32> to vector<8x64xf32>
    %162 = vector.extract_strided_slice %158 {offsets = [0, 192], sizes = [8, 64], strides = [1, 1]} : vector<8x256xf32> to vector<8x64xf32>
    %163 = arith.mulf %160, %142 : vector<8x64xf32>
    %164 = arith.mulf %159, %161 : vector<8x64xf32>
    %165 = arith.addf %163, %164 : vector<8x64xf32>
    %166 = math.tanh %165 : vector<8x64xf32>
    %167 = arith.mulf %162, %166 : vector<8x64xf32>
    %168 = vector.extract_strided_slice %167 {offsets = [0, 0], sizes = [8, 32], strides = [1, 1]} : vector<8x64xf32> to vector<8x32xf32>
    %c48_50 = arith.constant 48 : index
    %c0_51 = arith.constant 0 : index
    %169 = vector.load %arg12[%c48_50, %c0_51] : memref<64x64xf32, #tpu.memory_space<vmem>>, vector<8x32xf32>
    tpu.vector_store %arg12[%c48_50, %c0_51], %168 {strides = array<i32>} : memref<64x64xf32, #tpu.memory_space<vmem>>, vector<8x32xf32>,
    %170 = vector.extract_strided_slice %167 {offsets = [0, 32], sizes = [8, 32], strides = [1, 1]} : vector<8x64xf32> to vector<8x32xf32>
    %c8_52 = arith.constant 8 : index
    %c32_53 = arith.constant 32 : index
    %171 = vector.load %arg12[%c8_52, %c32_53] : memref<64x64xf32, #tpu.memory_space<vmem>>, vector<8x32xf32>
    tpu.vector_store %arg12[%c8_52, %c32_53], %170 {strides = array<i32>} : memref<64x64xf32, #tpu.memory_space<vmem>>, vector<8x32xf32>,
    %172 = vector.extract_strided_slice %5 {offsets = [56, 0], sizes = [8, 256], strides = [1, 1]} : vector<64x256xf32> to vector<8x256xf32>
    %173 = vector.extract_strided_slice %7 {offsets = [0, 0], sizes = [8, 256], strides = [1, 1]} : vector<64x256xf32> to vector<8x256xf32>
    %174 = arith.addf %172, %173 : vector<8x256xf32>
    %cst_54 = arith.constant dense<0.000000e+00> : vector<8x256xf32>
    %175 = tpu.matmul %167, %8, %cst_54 {dimension_numbers = #tpu.dot_dimension_numbers<[1], [0], [0], [1], [0, 0, 1, 1], [], []>} : vector<8x64xf32>, vector<64x256xf32>, vector<8x256xf32> -> vector<8x256xf32>
    %176 = arith.addf %174, %175 : vector<8x256xf32>
    %177 = math.tanh %176 : vector<8x256xf32>
    %cst_55 = arith.constant 5.000000e-01 : f32
    %178 = vector.broadcast %cst_55 : f32 to vector<8x256xf32>
    %179 = arith.mulf %178, %177 : vector<8x256xf32>
    %cst_56 = arith.constant 5.000000e-01 : f32
    %180 = vector.broadcast %cst_56 : f32 to vector<8x256xf32>
    %181 = arith.addf %179, %180 : vector<8x256xf32>
    %182 = vector.extract_strided_slice %181 {offsets = [0, 0], sizes = [8, 64], strides = [1, 1]} : vector<8x256xf32> to vector<8x64xf32>
    %183 = vector.extract_strided_slice %181 {offsets = [0, 64], sizes = [8, 64], strides = [1, 1]} : vector<8x256xf32> to vector<8x64xf32>
    %184 = vector.extract_strided_slice %177 {offsets = [0, 128], sizes = [8, 64], strides = [1, 1]} : vector<8x256xf32> to vector<8x64xf32>
    %185 = vector.extract_strided_slice %181 {offsets = [0, 192], sizes = [8, 64], strides = [1, 1]} : vector<8x256xf32> to vector<8x64xf32>
    %186 = arith.mulf %183, %165 : vector<8x64xf32>
    %187 = arith.mulf %182, %184 : vector<8x64xf32>
    %188 = arith.addf %186, %187 : vector<8x64xf32>
    %189 = math.tanh %188 : vector<8x64xf32>
    %190 = arith.mulf %185, %189 : vector<8x64xf32>
    %191 = vector.extract_strided_slice %190 {offsets = [0, 0], sizes = [8, 32], strides = [1, 1]} : vector<8x64xf32> to vector<8x32xf32>
    %c56_57 = arith.constant 56 : index
    %c0_58 = arith.constant 0 : index
    %192 = vector.load %arg12[%c56_57, %c0_58] : memref<64x64xf32, #tpu.memory_space<vmem>>, vector<8x32xf32>
    tpu.vector_store %arg12[%c56_57, %c0_58], %191 {strides = array<i32>} : memref<64x64xf32, #tpu.memory_space<vmem>>, vector<8x32xf32>,
    %193 = vector.extract_strided_slice %190 {offsets = [0, 32], sizes = [8, 32], strides = [1, 1]} : vector<8x64xf32> to vector<8x32xf32>
    %c0_59 = arith.constant 0 : index
    %c32_60 = arith.constant 32 : index
    %194 = vector.load %arg12[%c0_59, %c32_60] : memref<64x64xf32, #tpu.memory_space<vmem>>, vector<8x32xf32>
    tpu.vector_store %arg12[%c0_59, %c32_60], %193 {strides = array<i32>} : memref<64x64xf32, #tpu.memory_space<vmem>>, vector<8x32xf32>,
    %c0_61 = arith.constant 0 : index
    %c0_62 = arith.constant 0 : index
    %195 = vector.load %arg12[%c0_61, %c0_62] : memref<64x64xf32, #tpu.memory_space<vmem>>, vector<64x64xf32>
    %c0_63 = arith.constant 0 : index
    %c0_64 = arith.constant 0 : index
    %196 = vector.load %arg5[%c0_63, %c0_64] : memref<64x256xf32, #tpu.memory_space<vmem>>, vector<64x256xf32>
    %cst_65 = arith.constant dense<0.000000e+00> : vector<64x256xf32>
    %197 = tpu.matmul %195, %196, %cst_65 {dimension_numbers = #tpu.dot_dimension_numbers<[1], [0], [0], [1], [0, 0, 1, 1], [], []>} : vector<64x64xf32>, vector<64x256xf32>, vector<64x256xf32> -> vector<64x256xf32>
    %c0_66 = arith.constant 0 : index
    %c0_67 = arith.constant 0 : index
    %198 = vector.load %arg7[%c0_66, %c0_67] : memref<1x256xf32, #tpu.memory_space<vmem>>, vector<1x256xf32>
    %199 = vector.broadcast %198 : vector<1x256xf32> to vector<64x256xf32>
    %200 = arith.addf %197, %199 : vector<64x256xf32>
    %c0_68 = arith.constant 0 : index
    %c0_69 = arith.constant 0 : index
    %201 = vector.load %arg6[%c0_68, %c0_69] : memref<64x256xf32, #tpu.memory_space<vmem>>, vector<64x256xf32>
    %cst_70 = arith.constant dense<0.000000e+00> : vector<64x256xf32>
    %202 = tpu.matmul %195, %201, %cst_70 {dimension_numbers = #tpu.dot_dimension_numbers<[1], [0], [0], [1], [0, 0, 1, 1], [], []>} : vector<64x64xf32>, vector<64x256xf32>, vector<64x256xf32> -> vector<64x256xf32>
    %c0_71 = arith.constant 0 : index
    %c0_72 = arith.constant 0 : index
    %203 = vector.load %arg8[%c0_71, %c0_72] : memref<64x256xf32, #tpu.memory_space<vmem>>, vector<64x256xf32>
    %cst_73 = arith.constant 0.000000e+00 : f32
    %204 = vector.broadcast %cst_73 : f32 to vector<8x64xf32>
    %cst_74 = arith.constant 0.000000e+00 : f32
    %205 = vector.broadcast %cst_74 : f32 to vector<8x64xf32>
    %206 = vector.extract_strided_slice %200 {offsets = [0, 0], sizes = [8, 256], strides = [1, 1]} : vector<64x256xf32> to vector<8x256xf32>
    %207 = vector.extract_strided_slice %202 {offsets = [56, 0], sizes = [8, 256], strides = [1, 1]} : vector<64x256xf32> to vector<8x256xf32>
    %208 = arith.addf %206, %207 : vector<8x256xf32>
    %cst_75 = arith.constant dense<0.000000e+00> : vector<8x256xf32>
    %209 = tpu.matmul %204, %203, %cst_75 {dimension_numbers = #tpu.dot_dimension_numbers<[1], [0], [0], [1], [0, 0, 1, 1], [], []>} : vector<8x64xf32>, vector<64x256xf32>, vector<8x256xf32> -> vector<8x256xf32>
    %210 = arith.addf %208, %209 : vector<8x256xf32>
    %211 = math.tanh %210 : vector<8x256xf32>
    %cst_76 = arith.constant 5.000000e-01 : f32
    %212 = vector.broadcast %cst_76 : f32 to vector<8x256xf32>
    %213 = arith.mulf %212, %211 : vector<8x256xf32>
    %cst_77 = arith.constant 5.000000e-01 : f32
    %214 = vector.broadcast %cst_77 : f32 to vector<8x256xf32>
    %215 = arith.addf %213, %214 : vector<8x256xf32>
    %216 = vector.extract_strided_slice %215 {offsets = [0, 0], sizes = [8, 64], strides = [1, 1]} : vector<8x256xf32> to vector<8x64xf32>
    %217 = vector.extract_strided_slice %215 {offsets = [0, 64], sizes = [8, 64], strides = [1, 1]} : vector<8x256xf32> to vector<8x64xf32>
    %218 = vector.extract_strided_slice %211 {offsets = [0, 128], sizes = [8, 64], strides = [1, 1]} : vector<8x256xf32> to vector<8x64xf32>
    %219 = vector.extract_strided_slice %215 {offsets = [0, 192], sizes = [8, 64], strides = [1, 1]} : vector<8x256xf32> to vector<8x64xf32>
    %220 = arith.mulf %217, %205 : vector<8x64xf32>
    %221 = arith.mulf %216, %218 : vector<8x64xf32>
    %222 = arith.addf %220, %221 : vector<8x64xf32>
    %223 = math.tanh %222 : vector<8x64xf32>
    %224 = arith.mulf %219, %223 : vector<8x64xf32>
    %225 = vector.extract_strided_slice %224 {offsets = [0, 0], sizes = [8, 32], strides = [1, 1]} : vector<8x64xf32> to vector<8x32xf32>
    %c0_78 = arith.constant 0 : index
    %c0_79 = arith.constant 0 : index
    %226 = vector.load %arg13[%c0_78, %c0_79] : memref<64x64xf32, #tpu.memory_space<vmem>>, vector<8x32xf32>
    tpu.vector_store %arg13[%c0_78, %c0_79], %225 {strides = array<i32>} : memref<64x64xf32, #tpu.memory_space<vmem>>, vector<8x32xf32>,
    %227 = vector.extract_strided_slice %224 {offsets = [0, 32], sizes = [8, 32], strides = [1, 1]} : vector<8x64xf32> to vector<8x32xf32>
    %c56_80 = arith.constant 56 : index
    %c32_81 = arith.constant 32 : index
    %228 = vector.load %arg13[%c56_80, %c32_81] : memref<64x64xf32, #tpu.memory_space<vmem>>, vector<8x32xf32>
    tpu.vector_store %arg13[%c56_80, %c32_81], %227 {strides = array<i32>} : memref<64x64xf32, #tpu.memory_space<vmem>>, vector<8x32xf32>,
    %229 = vector.extract_strided_slice %200 {offsets = [8, 0], sizes = [8, 256], strides = [1, 1]} : vector<64x256xf32> to vector<8x256xf32>
    %230 = vector.extract_strided_slice %202 {offsets = [48, 0], sizes = [8, 256], strides = [1, 1]} : vector<64x256xf32> to vector<8x256xf32>
    %231 = arith.addf %229, %230 : vector<8x256xf32>
    %cst_82 = arith.constant dense<0.000000e+00> : vector<8x256xf32>
    %232 = tpu.matmul %224, %203, %cst_82 {dimension_numbers = #tpu.dot_dimension_numbers<[1], [0], [0], [1], [0, 0, 1, 1], [], []>} : vector<8x64xf32>, vector<64x256xf32>, vector<8x256xf32> -> vector<8x256xf32>
    %233 = arith.addf %231, %232 : vector<8x256xf32>
    %234 = math.tanh %233 : vector<8x256xf32>
    %cst_83 = arith.constant 5.000000e-01 : f32
    %235 = vector.broadcast %cst_83 : f32 to vector<8x256xf32>
    %236 = arith.mulf %235, %234 : vector<8x256xf32>
    %cst_84 = arith.constant 5.000000e-01 : f32
    %237 = vector.broadcast %cst_84 : f32 to vector<8x256xf32>
    %238 = arith.addf %236, %237 : vector<8x256xf32>
    %239 = vector.extract_strided_slice %238 {offsets = [0, 0], sizes = [8, 64], strides = [1, 1]} : vector<8x256xf32> to vector<8x64xf32>
    %240 = vector.extract_strided_slice %238 {offsets = [0, 64], sizes = [8, 64], strides = [1, 1]} : vector<8x256xf32> to vector<8x64xf32>
    %241 = vector.extract_strided_slice %234 {offsets = [0, 128], sizes = [8, 64], strides = [1, 1]} : vector<8x256xf32> to vector<8x64xf32>
    %242 = vector.extract_strided_slice %238 {offsets = [0, 192], sizes = [8, 64], strides = [1, 1]} : vector<8x256xf32> to vector<8x64xf32>
    %243 = arith.mulf %240, %222 : vector<8x64xf32>
    %244 = arith.mulf %239, %241 : vector<8x64xf32>
    %245 = arith.addf %243, %244 : vector<8x64xf32>
    %246 = math.tanh %245 : vector<8x64xf32>
    %247 = arith.mulf %242, %246 : vector<8x64xf32>
    %248 = vector.extract_strided_slice %247 {offsets = [0, 0], sizes = [8, 32], strides = [1, 1]} : vector<8x64xf32> to vector<8x32xf32>
    %c8_85 = arith.constant 8 : index
    %c0_86 = arith.constant 0 : index
    %249 = vector.load %arg13[%c8_85, %c0_86] : memref<64x64xf32, #tpu.memory_space<vmem>>, vector<8x32xf32>
    tpu.vector_store %arg13[%c8_85, %c0_86], %248 {strides = array<i32>} : memref<64x64xf32, #tpu.memory_space<vmem>>, vector<8x32xf32>,
    %250 = vector.extract_strided_slice %247 {offsets = [0, 32], sizes = [8, 32], strides = [1, 1]} : vector<8x64xf32> to vector<8x32xf32>
    %c48_87 = arith.constant 48 : index
    %c32_88 = arith.constant 32 : index
    %251 = vector.load %arg13[%c48_87, %c32_88] : memref<64x64xf32, #tpu.memory_space<vmem>>, vector<8x32xf32>
    tpu.vector_store %arg13[%c48_87, %c32_88], %250 {strides = array<i32>} : memref<64x64xf32, #tpu.memory_space<vmem>>, vector<8x32xf32>,
    %252 = vector.extract_strided_slice %200 {offsets = [16, 0], sizes = [8, 256], strides = [1, 1]} : vector<64x256xf32> to vector<8x256xf32>
    %253 = vector.extract_strided_slice %202 {offsets = [40, 0], sizes = [8, 256], strides = [1, 1]} : vector<64x256xf32> to vector<8x256xf32>
    %254 = arith.addf %252, %253 : vector<8x256xf32>
    %cst_89 = arith.constant dense<0.000000e+00> : vector<8x256xf32>
    %255 = tpu.matmul %247, %203, %cst_89 {dimension_numbers = #tpu.dot_dimension_numbers<[1], [0], [0], [1], [0, 0, 1, 1], [], []>} : vector<8x64xf32>, vector<64x256xf32>, vector<8x256xf32> -> vector<8x256xf32>
    %256 = arith.addf %254, %255 : vector<8x256xf32>
    %257 = math.tanh %256 : vector<8x256xf32>
    %cst_90 = arith.constant 5.000000e-01 : f32
    %258 = vector.broadcast %cst_90 : f32 to vector<8x256xf32>
    %259 = arith.mulf %258, %257 : vector<8x256xf32>
    %cst_91 = arith.constant 5.000000e-01 : f32
    %260 = vector.broadcast %cst_91 : f32 to vector<8x256xf32>
    %261 = arith.addf %259, %260 : vector<8x256xf32>
    %262 = vector.extract_strided_slice %261 {offsets = [0, 0], sizes = [8, 64], strides = [1, 1]} : vector<8x256xf32> to vector<8x64xf32>
    %263 = vector.extract_strided_slice %261 {offsets = [0, 64], sizes = [8, 64], strides = [1, 1]} : vector<8x256xf32> to vector<8x64xf32>
    %264 = vector.extract_strided_slice %257 {offsets = [0, 128], sizes = [8, 64], strides = [1, 1]} : vector<8x256xf32> to vector<8x64xf32>
    %265 = vector.extract_strided_slice %261 {offsets = [0, 192], sizes = [8, 64], strides = [1, 1]} : vector<8x256xf32> to vector<8x64xf32>
    %266 = arith.mulf %263, %245 : vector<8x64xf32>
    %267 = arith.mulf %262, %264 : vector<8x64xf32>
    %268 = arith.addf %266, %267 : vector<8x64xf32>
    %269 = math.tanh %268 : vector<8x64xf32>
    %270 = arith.mulf %265, %269 : vector<8x64xf32>
    %271 = vector.extract_strided_slice %270 {offsets = [0, 0], sizes = [8, 32], strides = [1, 1]} : vector<8x64xf32> to vector<8x32xf32>
    %c16_92 = arith.constant 16 : index
    %c0_93 = arith.constant 0 : index
    %272 = vector.load %arg13[%c16_92, %c0_93] : memref<64x64xf32, #tpu.memory_space<vmem>>, vector<8x32xf32>
    tpu.vector_store %arg13[%c16_92, %c0_93], %271 {strides = array<i32>} : memref<64x64xf32, #tpu.memory_space<vmem>>, vector<8x32xf32>,
    %273 = vector.extract_strided_slice %270 {offsets = [0, 32], sizes = [8, 32], strides = [1, 1]} : vector<8x64xf32> to vector<8x32xf32>
    %c40_94 = arith.constant 40 : index
    %c32_95 = arith.constant 32 : index
    %274 = vector.load %arg13[%c40_94, %c32_95] : memref<64x64xf32, #tpu.memory_space<vmem>>, vector<8x32xf32>
    tpu.vector_store %arg13[%c40_94, %c32_95], %273 {strides = array<i32>} : memref<64x64xf32, #tpu.memory_space<vmem>>, vector<8x32xf32>,
    %275 = vector.extract_strided_slice %200 {offsets = [24, 0], sizes = [8, 256], strides = [1, 1]} : vector<64x256xf32> to vector<8x256xf32>
    %276 = vector.extract_strided_slice %202 {offsets = [32, 0], sizes = [8, 256], strides = [1, 1]} : vector<64x256xf32> to vector<8x256xf32>
    %277 = arith.addf %275, %276 : vector<8x256xf32>
    %cst_96 = arith.constant dense<0.000000e+00> : vector<8x256xf32>
    %278 = tpu.matmul %270, %203, %cst_96 {dimension_numbers = #tpu.dot_dimension_numbers<[1], [0], [0], [1], [0, 0, 1, 1], [], []>} : vector<8x64xf32>, vector<64x256xf32>, vector<8x256xf32> -> vector<8x256xf32>
    %279 = arith.addf %277, %278 : vector<8x256xf32>
    %280 = math.tanh %279 : vector<8x256xf32>
    %cst_97 = arith.constant 5.000000e-01 : f32
    %281 = vector.broadcast %cst_97 : f32 to vector<8x256xf32>
    %282 = arith.mulf %281, %280 : vector<8x256xf32>
    %cst_98 = arith.constant 5.000000e-01 : f32
    %283 = vector.broadcast %cst_98 : f32 to vector<8x256xf32>
    %284 = arith.addf %282, %283 : vector<8x256xf32>
    %285 = vector.extract_strided_slice %284 {offsets = [0, 0], sizes = [8, 64], strides = [1, 1]} : vector<8x256xf32> to vector<8x64xf32>
    %286 = vector.extract_strided_slice %284 {offsets = [0, 64], sizes = [8, 64], strides = [1, 1]} : vector<8x256xf32> to vector<8x64xf32>
    %287 = vector.extract_strided_slice %280 {offsets = [0, 128], sizes = [8, 64], strides = [1, 1]} : vector<8x256xf32> to vector<8x64xf32>
    %288 = vector.extract_strided_slice %284 {offsets = [0, 192], sizes = [8, 64], strides = [1, 1]} : vector<8x256xf32> to vector<8x64xf32>
    %289 = arith.mulf %286, %268 : vector<8x64xf32>
    %290 = arith.mulf %285, %287 : vector<8x64xf32>
    %291 = arith.addf %289, %290 : vector<8x64xf32>
    %292 = math.tanh %291 : vector<8x64xf32>
    %293 = arith.mulf %288, %292 : vector<8x64xf32>
    %294 = vector.extract_strided_slice %293 {offsets = [0, 0], sizes = [8, 32], strides = [1, 1]} : vector<8x64xf32> to vector<8x32xf32>
    %c24_99 = arith.constant 24 : index
    %c0_100 = arith.constant 0 : index
    %295 = vector.load %arg13[%c24_99, %c0_100] : memref<64x64xf32, #tpu.memory_space<vmem>>, vector<8x32xf32>
    tpu.vector_store %arg13[%c24_99, %c0_100], %294 {strides = array<i32>} : memref<64x64xf32, #tpu.memory_space<vmem>>, vector<8x32xf32>,
    %296 = vector.extract_strided_slice %293 {offsets = [0, 32], sizes = [8, 32], strides = [1, 1]} : vector<8x64xf32> to vector<8x32xf32>
    %c32_101 = arith.constant 32 : index
    %c32_102 = arith.constant 32 : index
    %297 = vector.load %arg13[%c32_101, %c32_102] : memref<64x64xf32, #tpu.memory_space<vmem>>, vector<8x32xf32>
    tpu.vector_store %arg13[%c32_101, %c32_102], %296 {strides = array<i32>} : memref<64x64xf32, #tpu.memory_space<vmem>>, vector<8x32xf32>,
    %298 = vector.extract_strided_slice %200 {offsets = [32, 0], sizes = [8, 256], strides = [1, 1]} : vector<64x256xf32> to vector<8x256xf32>
    %299 = vector.extract_strided_slice %202 {offsets = [24, 0], sizes = [8, 256], strides = [1, 1]} : vector<64x256xf32> to vector<8x256xf32>
    %300 = arith.addf %298, %299 : vector<8x256xf32>
    %cst_103 = arith.constant dense<0.000000e+00> : vector<8x256xf32>
    %301 = tpu.matmul %293, %203, %cst_103 {dimension_numbers = #tpu.dot_dimension_numbers<[1], [0], [0], [1], [0, 0, 1, 1], [], []>} : vector<8x64xf32>, vector<64x256xf32>, vector<8x256xf32> -> vector<8x256xf32>
    %302 = arith.addf %300, %301 : vector<8x256xf32>
    %303 = math.tanh %302 : vector<8x256xf32>
    %cst_104 = arith.constant 5.000000e-01 : f32
    %304 = vector.broadcast %cst_104 : f32 to vector<8x256xf32>
    %305 = arith.mulf %304, %303 : vector<8x256xf32>
    %cst_105 = arith.constant 5.000000e-01 : f32
    %306 = vector.broadcast %cst_105 : f32 to vector<8x256xf32>
    %307 = arith.addf %305, %306 : vector<8x256xf32>
    %308 = vector.extract_strided_slice %307 {offsets = [0, 0], sizes = [8, 64], strides = [1, 1]} : vector<8x256xf32> to vector<8x64xf32>
    %309 = vector.extract_strided_slice %307 {offsets = [0, 64], sizes = [8, 64], strides = [1, 1]} : vector<8x256xf32> to vector<8x64xf32>
    %310 = vector.extract_strided_slice %303 {offsets = [0, 128], sizes = [8, 64], strides = [1, 1]} : vector<8x256xf32> to vector<8x64xf32>
    %311 = vector.extract_strided_slice %307 {offsets = [0, 192], sizes = [8, 64], strides = [1, 1]} : vector<8x256xf32> to vector<8x64xf32>
    %312 = arith.mulf %309, %291 : vector<8x64xf32>
    %313 = arith.mulf %308, %310 : vector<8x64xf32>
    %314 = arith.addf %312, %313 : vector<8x64xf32>
    %315 = math.tanh %314 : vector<8x64xf32>
    %316 = arith.mulf %311, %315 : vector<8x64xf32>
    %317 = vector.extract_strided_slice %316 {offsets = [0, 0], sizes = [8, 32], strides = [1, 1]} : vector<8x64xf32> to vector<8x32xf32>
    %c32_106 = arith.constant 32 : index
    %c0_107 = arith.constant 0 : index
    %318 = vector.load %arg13[%c32_106, %c0_107] : memref<64x64xf32, #tpu.memory_space<vmem>>, vector<8x32xf32>
    tpu.vector_store %arg13[%c32_106, %c0_107], %317 {strides = array<i32>} : memref<64x64xf32, #tpu.memory_space<vmem>>, vector<8x32xf32>,
    %319 = vector.extract_strided_slice %316 {offsets = [0, 32], sizes = [8, 32], strides = [1, 1]} : vector<8x64xf32> to vector<8x32xf32>
    %c24_108 = arith.constant 24 : index
    %c32_109 = arith.constant 32 : index
    %320 = vector.load %arg13[%c24_108, %c32_109] : memref<64x64xf32, #tpu.memory_space<vmem>>, vector<8x32xf32>
    tpu.vector_store %arg13[%c24_108, %c32_109], %319 {strides = array<i32>} : memref<64x64xf32, #tpu.memory_space<vmem>>, vector<8x32xf32>,
    %321 = vector.extract_strided_slice %200 {offsets = [40, 0], sizes = [8, 256], strides = [1, 1]} : vector<64x256xf32> to vector<8x256xf32>
    %322 = vector.extract_strided_slice %202 {offsets = [16, 0], sizes = [8, 256], strides = [1, 1]} : vector<64x256xf32> to vector<8x256xf32>
    %323 = arith.addf %321, %322 : vector<8x256xf32>
    %cst_110 = arith.constant dense<0.000000e+00> : vector<8x256xf32>
    %324 = tpu.matmul %316, %203, %cst_110 {dimension_numbers = #tpu.dot_dimension_numbers<[1], [0], [0], [1], [0, 0, 1, 1], [], []>} : vector<8x64xf32>, vector<64x256xf32>, vector<8x256xf32> -> vector<8x256xf32>
    %325 = arith.addf %323, %324 : vector<8x256xf32>
    %326 = math.tanh %325 : vector<8x256xf32>
    %cst_111 = arith.constant 5.000000e-01 : f32
    %327 = vector.broadcast %cst_111 : f32 to vector<8x256xf32>
    %328 = arith.mulf %327, %326 : vector<8x256xf32>
    %cst_112 = arith.constant 5.000000e-01 : f32
    %329 = vector.broadcast %cst_112 : f32 to vector<8x256xf32>
    %330 = arith.addf %328, %329 : vector<8x256xf32>
    %331 = vector.extract_strided_slice %330 {offsets = [0, 0], sizes = [8, 64], strides = [1, 1]} : vector<8x256xf32> to vector<8x64xf32>
    %332 = vector.extract_strided_slice %330 {offsets = [0, 64], sizes = [8, 64], strides = [1, 1]} : vector<8x256xf32> to vector<8x64xf32>
    %333 = vector.extract_strided_slice %326 {offsets = [0, 128], sizes = [8, 64], strides = [1, 1]} : vector<8x256xf32> to vector<8x64xf32>
    %334 = vector.extract_strided_slice %330 {offsets = [0, 192], sizes = [8, 64], strides = [1, 1]} : vector<8x256xf32> to vector<8x64xf32>
    %335 = arith.mulf %332, %314 : vector<8x64xf32>
    %336 = arith.mulf %331, %333 : vector<8x64xf32>
    %337 = arith.addf %335, %336 : vector<8x64xf32>
    %338 = math.tanh %337 : vector<8x64xf32>
    %339 = arith.mulf %334, %338 : vector<8x64xf32>
    %340 = vector.extract_strided_slice %339 {offsets = [0, 0], sizes = [8, 32], strides = [1, 1]} : vector<8x64xf32> to vector<8x32xf32>
    %c40_113 = arith.constant 40 : index
    %c0_114 = arith.constant 0 : index
    %341 = vector.load %arg13[%c40_113, %c0_114] : memref<64x64xf32, #tpu.memory_space<vmem>>, vector<8x32xf32>
    tpu.vector_store %arg13[%c40_113, %c0_114], %340 {strides = array<i32>} : memref<64x64xf32, #tpu.memory_space<vmem>>, vector<8x32xf32>,
    %342 = vector.extract_strided_slice %339 {offsets = [0, 32], sizes = [8, 32], strides = [1, 1]} : vector<8x64xf32> to vector<8x32xf32>
    %c16_115 = arith.constant 16 : index
    %c32_116 = arith.constant 32 : index
    %343 = vector.load %arg13[%c16_115, %c32_116] : memref<64x64xf32, #tpu.memory_space<vmem>>, vector<8x32xf32>
    tpu.vector_store %arg13[%c16_115, %c32_116], %342 {strides = array<i32>} : memref<64x64xf32, #tpu.memory_space<vmem>>, vector<8x32xf32>,
    %344 = vector.extract_strided_slice %200 {offsets = [48, 0], sizes = [8, 256], strides = [1, 1]} : vector<64x256xf32> to vector<8x256xf32>
    %345 = vector.extract_strided_slice %202 {offsets = [8, 0], sizes = [8, 256], strides = [1, 1]} : vector<64x256xf32> to vector<8x256xf32>
    %346 = arith.addf %344, %345 : vector<8x256xf32>
    %cst_117 = arith.constant dense<0.000000e+00> : vector<8x256xf32>
    %347 = tpu.matmul %339, %203, %cst_117 {dimension_numbers = #tpu.dot_dimension_numbers<[1], [0], [0], [1], [0, 0, 1, 1], [], []>} : vector<8x64xf32>, vector<64x256xf32>, vector<8x256xf32> -> vector<8x256xf32>
    %348 = arith.addf %346, %347 : vector<8x256xf32>
    %349 = math.tanh %348 : vector<8x256xf32>
    %cst_118 = arith.constant 5.000000e-01 : f32
    %350 = vector.broadcast %cst_118 : f32 to vector<8x256xf32>
    %351 = arith.mulf %350, %349 : vector<8x256xf32>
    %cst_119 = arith.constant 5.000000e-01 : f32
    %352 = vector.broadcast %cst_119 : f32 to vector<8x256xf32>
    %353 = arith.addf %351, %352 : vector<8x256xf32>
    %354 = vector.extract_strided_slice %353 {offsets = [0, 0], sizes = [8, 64], strides = [1, 1]} : vector<8x256xf32> to vector<8x64xf32>
    %355 = vector.extract_strided_slice %353 {offsets = [0, 64], sizes = [8, 64], strides = [1, 1]} : vector<8x256xf32> to vector<8x64xf32>
    %356 = vector.extract_strided_slice %349 {offsets = [0, 128], sizes = [8, 64], strides = [1, 1]} : vector<8x256xf32> to vector<8x64xf32>
    %357 = vector.extract_strided_slice %353 {offsets = [0, 192], sizes = [8, 64], strides = [1, 1]} : vector<8x256xf32> to vector<8x64xf32>
    %358 = arith.mulf %355, %337 : vector<8x64xf32>
    %359 = arith.mulf %354, %356 : vector<8x64xf32>
    %360 = arith.addf %358, %359 : vector<8x64xf32>
    %361 = math.tanh %360 : vector<8x64xf32>
    %362 = arith.mulf %357, %361 : vector<8x64xf32>
    %363 = vector.extract_strided_slice %362 {offsets = [0, 0], sizes = [8, 32], strides = [1, 1]} : vector<8x64xf32> to vector<8x32xf32>
    %c48_120 = arith.constant 48 : index
    %c0_121 = arith.constant 0 : index
    %364 = vector.load %arg13[%c48_120, %c0_121] : memref<64x64xf32, #tpu.memory_space<vmem>>, vector<8x32xf32>
    tpu.vector_store %arg13[%c48_120, %c0_121], %363 {strides = array<i32>} : memref<64x64xf32, #tpu.memory_space<vmem>>, vector<8x32xf32>,
    %365 = vector.extract_strided_slice %362 {offsets = [0, 32], sizes = [8, 32], strides = [1, 1]} : vector<8x64xf32> to vector<8x32xf32>
    %c8_122 = arith.constant 8 : index
    %c32_123 = arith.constant 32 : index
    %366 = vector.load %arg13[%c8_122, %c32_123] : memref<64x64xf32, #tpu.memory_space<vmem>>, vector<8x32xf32>
    tpu.vector_store %arg13[%c8_122, %c32_123], %365 {strides = array<i32>} : memref<64x64xf32, #tpu.memory_space<vmem>>, vector<8x32xf32>,
    %367 = vector.extract_strided_slice %200 {offsets = [56, 0], sizes = [8, 256], strides = [1, 1]} : vector<64x256xf32> to vector<8x256xf32>
    %368 = vector.extract_strided_slice %202 {offsets = [0, 0], sizes = [8, 256], strides = [1, 1]} : vector<64x256xf32> to vector<8x256xf32>
    %369 = arith.addf %367, %368 : vector<8x256xf32>
    %cst_124 = arith.constant dense<0.000000e+00> : vector<8x256xf32>
    %370 = tpu.matmul %362, %203, %cst_124 {dimension_numbers = #tpu.dot_dimension_numbers<[1], [0], [0], [1], [0, 0, 1, 1], [], []>} : vector<8x64xf32>, vector<64x256xf32>, vector<8x256xf32> -> vector<8x256xf32>
    %371 = arith.addf %369, %370 : vector<8x256xf32>
    %372 = math.tanh %371 : vector<8x256xf32>
    %cst_125 = arith.constant 5.000000e-01 : f32
    %373 = vector.broadcast %cst_125 : f32 to vector<8x256xf32>
    %374 = arith.mulf %373, %372 : vector<8x256xf32>
    %cst_126 = arith.constant 5.000000e-01 : f32
    %375 = vector.broadcast %cst_126 : f32 to vector<8x256xf32>
    %376 = arith.addf %374, %375 : vector<8x256xf32>
    %377 = vector.extract_strided_slice %376 {offsets = [0, 0], sizes = [8, 64], strides = [1, 1]} : vector<8x256xf32> to vector<8x64xf32>
    %378 = vector.extract_strided_slice %376 {offsets = [0, 64], sizes = [8, 64], strides = [1, 1]} : vector<8x256xf32> to vector<8x64xf32>
    %379 = vector.extract_strided_slice %372 {offsets = [0, 128], sizes = [8, 64], strides = [1, 1]} : vector<8x256xf32> to vector<8x64xf32>
    %380 = vector.extract_strided_slice %376 {offsets = [0, 192], sizes = [8, 64], strides = [1, 1]} : vector<8x256xf32> to vector<8x64xf32>
    %381 = arith.mulf %378, %360 : vector<8x64xf32>
    %382 = arith.mulf %377, %379 : vector<8x64xf32>
    %383 = arith.addf %381, %382 : vector<8x64xf32>
    %384 = math.tanh %383 : vector<8x64xf32>
    %385 = arith.mulf %380, %384 : vector<8x64xf32>
    %386 = vector.extract_strided_slice %385 {offsets = [0, 0], sizes = [8, 32], strides = [1, 1]} : vector<8x64xf32> to vector<8x32xf32>
    %c56_127 = arith.constant 56 : index
    %c0_128 = arith.constant 0 : index
    %387 = vector.load %arg13[%c56_127, %c0_128] : memref<64x64xf32, #tpu.memory_space<vmem>>, vector<8x32xf32>
    tpu.vector_store %arg13[%c56_127, %c0_128], %386 {strides = array<i32>} : memref<64x64xf32, #tpu.memory_space<vmem>>, vector<8x32xf32>,
    %388 = vector.extract_strided_slice %385 {offsets = [0, 32], sizes = [8, 32], strides = [1, 1]} : vector<8x64xf32> to vector<8x32xf32>
    %c0_129 = arith.constant 0 : index
    %c32_130 = arith.constant 32 : index
    %389 = vector.load %arg13[%c0_129, %c32_130] : memref<64x64xf32, #tpu.memory_space<vmem>>, vector<8x32xf32>
    tpu.vector_store %arg13[%c0_129, %c32_130], %388 {strides = array<i32>} : memref<64x64xf32, #tpu.memory_space<vmem>>, vector<8x32xf32>,
    %c0_131 = arith.constant 0 : index
    %c0_132 = arith.constant 0 : index
    %390 = vector.load %arg13[%c0_131, %c0_132] : memref<64x64xf32, #tpu.memory_space<vmem>>, vector<64x64xf32>
    %c0_133 = arith.constant 0 : index
    %c0_134 = arith.constant 0 : index
    %391 = vector.load %arg9[%c0_133, %c0_134] : memref<64x128xf32, #tpu.memory_space<vmem>>, vector<64x128xf32>
    %cst_135 = arith.constant dense<0.000000e+00> : vector<64x128xf32>
    %392 = tpu.matmul %390, %391, %cst_135 {dimension_numbers = #tpu.dot_dimension_numbers<[1], [0], [0], [1], [0, 0, 1, 1], [], []>} : vector<64x64xf32>, vector<64x128xf32>, vector<64x128xf32> -> vector<64x128xf32>
    %c0_136 = arith.constant 0 : index
    %c0_137 = arith.constant 0 : index
    %393 = vector.load %arg10[%c0_136, %c0_137] : memref<1x128xf32, #tpu.memory_space<vmem>>, vector<1x128xf32>
    %394 = vector.broadcast %393 : vector<1x128xf32> to vector<64x128xf32>
    %395 = arith.addf %392, %394 : vector<64x128xf32>
    %c0_138 = arith.constant 0 : index
    %c0_139 = arith.constant 0 : index
    %396 = vector.load %arg11[%c0_138, %c0_139] : memref<64x128xf32, #tpu.memory_space<vmem>>, vector<64x128xf32>
    tpu.vector_store %arg11[%c0_138, %c0_139], %395 {strides = array<i32>} : memref<64x128xf32, #tpu.memory_space<vmem>>, vector<64x128xf32>,
    return
  }
}

</mosaic_0001>

<llo_original>
// kernel: lstm_classifier_forward.1
$region0: #{lstm_classifier_forward.1}
  #allocation0 [shape = 'u32[]', space=smem, size = 0x4, offset = 0x4, fixed_abs, tag = 'smem constant byte address 0x4 - core index']
  #allocation1 [shape = 'u32[144,128]{1,0:T(1,128)}', space=vmem, size = 0x12000, scoped, tag = 'internal scratch']
  #allocation2 [shape = 'f32[64,64]{1,0:T(8,128)}', space=vmem, size = 0x8000, scoped, tag = 'scratch operand']
  #allocation3 [shape = 'f32[64,64]{1,0:T(8,128)}', space=vmem, size = 0x8000, scoped, tag = 'scratch operand']
  %s0 = inlined_call_operand.vmem [shape: f32[64,16], index: 0, kind: input, shape index: {}]
  %s1 = inlined_call_operand.vmem [shape: f32[16,256], index: 1, kind: input, shape index: {}]
  %s2 = inlined_call_operand.vmem [shape: f32[16,256], index: 2, kind: input, shape index: {}]
  %s3 = inlined_call_operand.vmem [shape: f32[1,256], index: 3, kind: input, shape index: {}]
  %s4 = inlined_call_operand.vmem [shape: f32[64,256], index: 4, kind: input, shape index: {}]
  %s5 = inlined_call_operand.vmem [shape: f32[64,256], index: 5, kind: input, shape index: {}]
  %s6 = inlined_call_operand.vmem [shape: f32[64,256], index: 6, kind: input, shape index: {}]
  %s7 = inlined_call_operand.vmem [shape: f32[1,256], index: 7, kind: input, shape index: {}]
  %s8 = inlined_call_operand.vmem [shape: f32[64,256], index: 8, kind: input, shape index: {}]
  %s9 = inlined_call_operand.vmem [shape: f32[64,128], index: 9, kind: input, shape index: {}]
  %s10 = inlined_call_operand.vmem [shape: f32[1,128], index: 10, kind: input, shape index: {}]
  %s11 = inlined_call_operand.vmem [shape: f32[64,128], index: 11, kind: output, shape index: {}]
  %s12 = sld [smem:[#allocation0]]
  $region54: #{lstm_classifier_forward.1} parent=0
    _
  %s14 = ssub.s32 1, %s12
  %s15 = scalar_select 0, %s14, %s12
  // Predicated region
  $region2: #{lstm_classifier_forward.1} parent=0 // pred_check
    _
  $region3: #{lstm_classifier_forward.1} parent=0 // pred_check_branch
    %17 = sbr.rel (0) target = $region5
  $region4: #{lstm_classifier_forward.1} parent=0 // pred_region
    _
  $region5: #{lstm_classifier_forward.1} parent=0 // pred_fallthru
    _
  // Predicated region
  $region6: #{lstm_classifier_forward.1} parent=0 // pred_check
    _
  $region7: #{lstm_classifier_forward.1} parent=0 // pred_check_branch
    %19 = sbr.rel (0) target = $region9
  $region8: #{lstm_classifier_forward.1} parent=0 // pred_region
    _
  $region9: #{lstm_classifier_forward.1} parent=0 // pred_fallthru
    _
  // Predicated region
  $region10: #{lstm_classifier_forward.1} parent=0 // pred_check
    _
  $region11: #{lstm_classifier_forward.1} parent=0 // pred_check_branch
    %21 = sbr.rel (0) target = $region13
  $region12: #{lstm_classifier_forward.1} parent=0 // pred_region
    _
  $region13: #{lstm_classifier_forward.1} parent=0 // pred_fallthru
    _
  // Predicated region
  $region14: #{lstm_classifier_forward.1} parent=0 // pred_check
    _
  $region15: #{lstm_classifier_forward.1} parent=0 // pred_check_branch
    %23 = sbr.rel (0) target = $region17
  $region16: #{lstm_classifier_forward.1} parent=0 // pred_region
    _
  $region17: #{lstm_classifier_forward.1} parent=0 // pred_fallthru
    _
  // Predicated region
  $region18: #{lstm_classifier_forward.1} parent=0 // pred_check
    _
  $region19: #{lstm_classifier_forward.1} parent=0 // pred_check_branch
    %25 = sbr.rel (0) target = $region21
  $region20: #{lstm_classifier_forward.1} parent=0 // pred_region
    _
  $region21: #{lstm_classifier_forward.1} parent=0 // pred_fallthru
    _
  // Predicated region
  $region22: #{lstm_classifier_forward.1} parent=0 // pred_check
    _
  $region23: #{lstm_classifier_forward.1} parent=0 // pred_check_branch
    %27 = sbr.rel (0) target = $region25
  $region24: #{lstm_classifier_forward.1} parent=0 // pred_region
    _
  $region25: #{lstm_classifier_forward.1} parent=0 // pred_fallthru
    _
  // Predicated region
  $region26: #{lstm_classifier_forward.1} parent=0 // pred_check
    _
  $region27: #{lstm_classifier_forward.1} parent=0 // pred_check_branch
    %29 = sbr.rel (0) target = $region29
  $region28: #{lstm_classifier_forward.1} parent=0 // pred_region
    _
  $region29: #{lstm_classifier_forward.1} parent=0 // pred_fallthru
    _
  // Predicated region
  $region30: #{lstm_classifier_forward.1} parent=0 // pred_check
    _
  $region31: #{lstm_classifier_forward.1} parent=0 // pred_check_branch
    %31 = sbr.rel (0) target = $region33
  $region32: #{lstm_classifier_forward.1} parent=0 // pred_region
    _
  $region33: #{lstm_classifier_forward.1} parent=0 // pred_fallthru
    _
  // Predicated region
  $region34: #{lstm_classifier_forward.1} parent=0 // pred_check
    _
  $region35: #{lstm_classifier_forward.1} parent=0 // pred_check_branch
    %33 = sbr.rel (0) target = $region37
  $region36: #{lstm_classifier_forward.1} parent=0 // pred_region
    _
  $region37: #{lstm_classifier_forward.1} parent=0 // pred_fallthru
    _
  // Predicated region
  $region38: #{lstm_classifier_forward.1} parent=0 // pred_check
    _
  $region39: #{lstm_classifier_forward.1} parent=0 // pred_check_branch
    %35 = sbr.rel (0) target = $region41
  $region40: #{lstm_classifier_forward.1} parent=0 // pred_region
    _
  $region41: #{lstm_classifier_forward.1} parent=0 // pred_fallthru
    _
  // Predicated region
  $region42: #{lstm_classifier_forward.1} parent=0 // pred_check
    _
  $region43: #{lstm_classifier_forward.1} parent=0 // pred_check_branch
    %37 = sbr.rel (0) target = $region45
  $region44: #{lstm_classifier_forward.1} parent=0 // pred_region
    _
  $region45: #{lstm_classifier_forward.1} parent=0 // pred_fallthru
    _
  %v38 = vld [vmem:[%s0] sm:$0xff]
  %v39 = vld [vmem:[%s0 + $0x8] sm:$0xff]
  %v40 = vld [vmem:[%s0 + $0x10] sm:$0xff]
  %v41 = vld [vmem:[%s0 + $0x18] sm:$0xff]
  %v42 = vld [vmem:[%s0 + $0x20] sm:$0xff]
  %v43 = vld [vmem:[%s0 + $0x28] sm:$0xff]
  %v44 = vld [vmem:[%s0 + $0x30] sm:$0xff]
  %v45 = vld [vmem:[%s0 + $0x38] sm:$0xff]
  %v46 = vld [vmem:[%s1] sm:$0xff]
  %v47 = vld [vmem:[%s1 + $0x8] sm:$0xff]
  %v48 = vld [vmem:[%s1 + $0x10] sm:$0xff]
  %v49 = vld [vmem:[%s1 + $0x18] sm:$0xff]
  %v50 = vld [vmem:[%s3] sm:$0x3]
  %v52 = vlaneseq
  %v53 = vshrl.u32 %v52, 7
  %v54 = vsub.s32 0, %v53
  %v55 = vrot.slane %v50, %v54
  %v56 = vlaneseq
  %v57 = vshrl.u32 %v56, 7
  %v58 = vsub.s32 1, %v57
  %v59 = vrot.slane %v50, %v58
  %vm62 = vcmask 130048
  %v64 = vsel %vm62, %v38, 0
  %v67 = vsel %vm62, %v39, 0
  %v70 = vsel %vm62, %v40, 0
  %v73 = vsel %vm62, %v41, 0
  %v76 = vsel %vm62, %v42, 0
  %v79 = vsel %vm62, %v43, 0
  %v82 = vsel %vm62, %v44, 0
  %v85 = vsel %vm62, %v45, 0
  %87 = vmatprep.subr.mxu0 0.0
  %88 = vmatpush1.msra.mxu0 0.0
  %89 = vmatprep.subr.mxu0 0.0
  %90 = vmatpush1.msra.mxu0 0.0
  %91 = vmatprep.subr.mxu0 0.0
  %92 = vmatpush1.msra.mxu0 0.0
  %93 = vmatprep.subr.mxu0 0.0
  %94 = vmatpush1.msra.mxu0 0.0
  %95 = vmatprep.subr.mxu0 0.0
  %96 = vmatpush1.msra.mxu0 0.0
  %97 = vmatprep.subr.mxu0 0.0
  %98 = vmatpush1.msra.mxu0 0.0
  %99 = vmatprep.subr.mxu0 0.0
  %100 = vmatpush1.msra.mxu0 0.0
  %101 = vmatprep.subr.mxu0 0.0
  %102 = vmatpush1.msra.mxu0 0.0
  %103 = vmatprep.subr.mxu0 0.0
  %104 = vmatpush1.msra.mxu0 0.0
  %105 = vmatprep.subr.mxu0 0.0
  %106 = vmatpush1.msra.mxu0 0.0
  %107 = vmatprep.subr.mxu0 0.0
  %108 = vmatpush1.msra.mxu0 0.0
  %109 = vmatprep.subr.mxu0 0.0
  %110 = vmatpush1.msra.mxu0 0.0
  %111 = vmatprep.subr.mxu0 0.0
  %112 = vmatpush1.msra.mxu0 0.0
  %113 = vmatprep.subr.mxu0 0.0
  %114 = vmatpush1.msra.mxu0 0.0
  %115 = vmatprep.subr.mxu0 %v49
  %116 = vmatpush1.msra.mxu0 %v48
  %117 = vmatprep.subr.mxu0 %v47
  %118 = vmatpush1.msra.mxu0 %v46
  %119 = vmatprep.subr.mxu0 0.0
  %120 = vmatpush2.msra.mxu0 0.0
  %121 = vmatprep.subr.mxu0 0.0
  %122 = vmatpush2.msra.mxu0 0.0
  %123 = vmatprep.subr.mxu0 0.0
  %124 = vmatpush2.msra.mxu0 0.0
  %125 = vmatprep.subr.mxu0 0.0
  %126 = vmatpush2.msra.mxu0 0.0
  %127 = vmatprep.subr.mxu0 0.0
  %128 = vmatpush2.msra.mxu0 0.0
  %129 = vmatprep.subr.mxu0 0.0
  %130 = vmatpush2.msra.mxu0 0.0
  %131 = vmatprep.subr.mxu0 0.0
  %132 = vmatpush2.msra.mxu0 0.0
  %133 = vmatprep.subr.mxu0 0.0
  %134 = vmatpush2.msra.mxu0 0.0
  %135 = vmatprep.subr.mxu0 0.0
  %136 = vmatpush2.msra.mxu0 0.0
  %137 = vmatprep.subr.mxu0 0.0
  %138 = vmatpush2.msra.mxu0 0.0
  %139 = vmatprep.subr.mxu0 0.0
  %140 = vmatpush2.msra.mxu0 0.0
  %141 = vmatprep.subr.mxu0 0.0
  %142 = vmatpush2.msra.mxu0 0.0
  %143 = vmatprep.subr.mxu0 0.0
  %144 = vmatpush2.msra.mxu0 0.0
  %145 = vmatprep.subr.mxu0 0.0
  %146 = vmatpush2.msra.mxu0 0.0
  %147 = vmatprep.subr.mxu0 0.0
  %148 = vmatpush2.msra.mxu0 0.0
  %149 = vmatprep.subr.mxu0 0.0
  %150 = vmatpush2.msra.mxu0 0.0
  %151 = vmatprep.mubr.f32.mxu0 0.0
  %152 = vmatmul.mubr.f32.gmra.mxu0 %v64
  %v153 = vpop.f32.mrf.mxu0
  %v154 = vadd.f32 %v55, %v153
  %v155 = vpop.f32.mrf.mxu0
  %v156 = vadd.f32 %v59, %v155
  %157 = vmatprep.mubr.f32.mxu0 0.0
  %158 = vmatmul.mubr.f32.gmra.mxu0 %v67
  %v159 = vpop.f32.mrf.mxu0
  %v160 = vadd.f32 %v55, %v159
  %v161 = vpop.f32.mrf.mxu0
  %v162 = vadd.f32 %v59, %v161
  %163 = vmatprep.mubr.f32.mxu0 0.0
  %164 = vmatmul.mubr.f32.gmra.mxu0 %v70
  %v165 = vpop.f32.mrf.mxu0
  %v166 = vadd.f32 %v55, %v165
  %v167 = vpop.f32.mrf.mxu0
  %v168 = vadd.f32 %v59, %v167
  %169 = vmatprep.mubr.f32.mxu0 0.0
  %170 = vmatmul.mubr.f32.gmra.mxu0 %v73
  %v171 = vpop.f32.mrf.mxu0
  %v172 = vadd.f32 %v55, %v171
  %v173 = vpop.f32.mrf.mxu0
  %v174 = vadd.f32 %v59, %v173
  %175 = vmatprep.mubr.f32.mxu0 0.0
  %176 = vmatmul.mubr.f32.gmra.mxu0 %v76
  %v177 = vpop.f32.mrf.mxu0
  %v178 = vadd.f32 %v55, %v177
  %v179 = vpop.f32.mrf.mxu0
  %v180 = vadd.f32 %v59, %v179
  %181 = vmatprep.mubr.f32.mxu0 0.0
  %182 = vmatmul.mubr.f32.gmra.mxu0 %v79
  %v183 = vpop.f32.mrf.mxu0
  %v184 = vadd.f32 %v55, %v183
  %v185 = vpop.f32.mrf.mxu0
  %v186 = vadd.f32 %v59, %v185
  %187 = vmatprep.mubr.f32.mxu0 0.0
  %188 = vmatmul.mubr.f32.gmra.mxu0 %v82
  %v189 = vpop.f32.mrf.mxu0
  %v190 = vadd.f32 %v55, %v189
  %v191 = vpop.f32.mrf.mxu0
  %v192 = vadd.f32 %v59, %v191
  %193 = vmatprep.mubr.f32.mxu0 0.0
  %194 = vmatmul.mubr.f32.gmra.mxu0 %v85
  %v195 = vpop.f32.mrf.mxu0
  %v196 = vadd.f32 %v55, %v195
  %v197 = vpop.f32.mrf.mxu0
  %v198 = vadd.f32 %v59, %v197
  %199 = vdwg.mxu0
  %v200 = vld [vmem:[%s2] sm:$0xff]
  %v201 = vld [vmem:[%s2 + $0x8] sm:$0xff]
  %v202 = vld [vmem:[%s2 + $0x10] sm:$0xff]
  %v203 = vld [vmem:[%s2 + $0x18] sm:$0xff]
  %204 = vmatprep.subr.mxu0 0.0
  %205 = vmatpush1.msra.mxu0 0.0
  %206 = vmatprep.subr.mxu0 0.0
  %207 = vmatpush1.msra.mxu0 0.0
  %208 = vmatprep.subr.mxu0 0.0
  %209 = vmatpush1.msra.mxu0 0.0
  %210 = vmatprep.subr.mxu0 0.0
  %211 = vmatpush1.msra.mxu0 0.0
  %212 = vmatprep.subr.mxu0 0.0
  %213 = vmatpush1.msra.mxu0 0.0
  %214 = vmatprep.subr.mxu0 0.0
  %215 = vmatpush1.msra.mxu0 0.0
  %216 = vmatprep.subr.mxu0 0.0
  %217 = vmatpush1.msra.mxu0 0.0
  %218 = vmatprep.subr.mxu0 0.0
  %219 = vmatpush1.msra.mxu0 0.0
  %220 = vmatprep.subr.mxu0 0.0
  %221 = vmatpush1.msra.mxu0 0.0
  %222 = vmatprep.subr.mxu0 0.0
  %223 = vmatpush1.msra.mxu0 0.0
  %224 = vmatprep.subr.mxu0 0.0
  %225 = vmatpush1.msra.mxu0 0.0
  %226 = vmatprep.subr.mxu0 0.0
  %227 = vmatpush1.msra.mxu0 0.0
  %228 = vmatprep.subr.mxu0 0.0
  %229 = vmatpush1.msra.mxu0 0.0
  %230 = vmatprep.subr.mxu0 0.0
  %231 = vmatpush1.msra.mxu0 0.0
  %232 = vmatprep.subr.mxu0 %v203
  %233 = vmatpush1.msra.mxu0 %v202
  %234 = vmatprep.subr.mxu0 %v201
  %235 = vmatpush1.msra.mxu0 %v200
  %236 = vmatprep.subr.mxu0 0.0
  %237 = vmatpush2.msra.mxu0 0.0
  %238 = vmatprep.subr.mxu0 0.0
  %239 = vmatpush2.msra.mxu0 0.0
  %240 = vmatprep.subr.mxu0 0.0
  %241 = vmatpush2.msra.mxu0 0.0
  %242 = vmatprep.subr.mxu0 0.0
  %243 = vmatpush2.msra.mxu0 0.0
  %244 = vmatprep.subr.mxu0 0.0
  %245 = vmatpush2.msra.mxu0 0.0
  %246 = vmatprep.subr.mxu0 0.0
  %247 = vmatpush2.msra.mxu0 0.0
  %248 = vmatprep.subr.mxu0 0.0
  %249 = vmatpush2.msra.mxu0 0.0
  %250 = vmatprep.subr.mxu0 0.0
  %251 = vmatpush2.msra.mxu0 0.0
  %252 = vmatprep.subr.mxu0 0.0
  %253 = vmatpush2.msra.mxu0 0.0
  %254 = vmatprep.subr.mxu0 0.0
  %255 = vmatpush2.msra.mxu0 0.0
  %256 = vmatprep.subr.mxu0 0.0
  %257 = vmatpush2.msra.mxu0 0.0
  %258 = vmatprep.subr.mxu0 0.0
  %259 = vmatpush2.msra.mxu0 0.0
  %260 = vmatprep.subr.mxu0 0.0
  %261 = vmatpush2.msra.mxu0 0.0
  %262 = vmatprep.subr.mxu0 0.0
  %263 = vmatpush2.msra.mxu0 0.0
  %264 = vmatprep.subr.mxu0 0.0
  %265 = vmatpush2.msra.mxu0 0.0
  %266 = vmatprep.subr.mxu0 0.0
  %267 = vmatpush2.msra.mxu0 0.0
  %268 = vmatprep.mubr.f32.mxu0 0.0
  %269 = vmatmul.mubr.f32.gmra.mxu0 %v64
  %v270 = vpop.f32.mrf.mxu0
  %v271 = vadd.f32 0.0, %v270
  %v272 = vpop.f32.mrf.mxu0
  %v273 = vadd.f32 0.0, %v272
  %274 = vmatprep.mubr.f32.mxu0 0.0
  %275 = vmatmul.mubr.f32.gmra.mxu0 %v67
  %v276 = vpop.f32.mrf.mxu0
  %v277 = vadd.f32 0.0, %v276
  %v278 = vpop.f32.mrf.mxu0
  %v279 = vadd.f32 0.0, %v278
  %280 = vmatprep.mubr.f32.mxu0 0.0
  %281 = vmatmul.mubr.f32.gmra.mxu0 %v70
  %v282 = vpop.f32.mrf.mxu0
  %v283 = vadd.f32 0.0, %v282
  %v284 = vpop.f32.mrf.mxu0
  %v285 = vadd.f32 0.0, %v284
  %286 = vmatprep.mubr.f32.mxu0 0.0
  %287 = vmatmul.mubr.f32.gmra.mxu0 %v73
  %v288 = vpop.f32.mrf.mxu0
  %v289 = vadd.f32 0.0, %v288
  %v290 = vpop.f32.mrf.mxu0
  %v291 = vadd.f32 0.0, %v290
  %292 = vmatprep.mubr.f32.mxu0 0.0
  %293 = vmatmul.mubr.f32.gmra.mxu0 %v76
  %v294 = vpop.f32.mrf.mxu0
  %v295 = vadd.f32 0.0, %v294
  %v296 = vpop.f32.mrf.mxu0
  %v297 = vadd.f32 0.0, %v296
  %298 = vmatprep.mubr.f32.mxu0 0.0
  %299 = vmatmul.mubr.f32.gmra.mxu0 %v79
  %v300 = vpop.f32.mrf.mxu0
  %v301 = vadd.f32 0.0, %v300
  %v302 = vpop.f32.mrf.mxu0
  %v303 = vadd.f32 0.0, %v302
  %304 = vmatprep.mubr.f32.mxu0 0.0
  %305 = vmatmul.mubr.f32.gmra.mxu0 %v82
  %v306 = vpop.f32.mrf.mxu0
  %v307 = vadd.f32 0.0, %v306
  %v308 = vpop.f32.mrf.mxu0
  %v309 = vadd.f32 0.0, %v308
  %310 = vmatprep.mubr.f32.mxu0 0.0
  %311 = vmatmul.mubr.f32.gmra.mxu0 %v85
  %v312 = vpop.f32.mrf.mxu0
  %v313 = vadd.f32 0.0, %v312
  %v314 = vpop.f32.mrf.mxu0
  %v315 = vadd.f32 0.0, %v314
  %316 = vdwg.mxu0
  %v317 = vld [vmem:[%s4] sm:$0xff]
  %v318 = vld [vmem:[%s4 + $0x8] sm:$0xff]
  %v319 = vld [vmem:[%s4 + $0x10] sm:$0xff]
  %v320 = vld [vmem:[%s4 + $0x18] sm:$0xff]
  %v321 = vld [vmem:[%s4 + $0x20] sm:$0xff]
  %v322 = vld [vmem:[%s4 + $0x28] sm:$0xff]
  %v323 = vld [vmem:[%s4 + $0x30] sm:$0xff]
  %v324 = vld [vmem:[%s4 + $0x38] sm:$0xff]
  %v325 = vld [vmem:[%s4 + $0x40] sm:$0xff]
  %v326 = vld [vmem:[%s4 + $0x48] sm:$0xff]
  %v327 = vld [vmem:[%s4 + $0x50] sm:$0xff]
  %v328 = vld [vmem:[%s4 + $0x58] sm:$0xff]
  %v329 = vld [vmem:[%s4 + $0x60] sm:$0xff]
  %v330 = vld [vmem:[%s4 + $0x68] sm:$0xff]
  %v331 = vld [vmem:[%s4 + $0x70] sm:$0xff]
  %v332 = vld [vmem:[%s4 + $0x78] sm:$0xff]
  %v333 = vadd.f32 %v154, %v313
  %v334 = vadd.f32 %v156, %v315
  %vm335 = vcmask 523264
  %v337 = vsel %vm335, 0.0, 0
  %339 = vmatprep.subr.mxu0 0.0
  %340 = vmatpush1.msra.mxu0 0.0
  %341 = vmatprep.subr.mxu0 0.0
  %342 = vmatpush1.msra.mxu0 0.0
  %343 = vmatprep.subr.mxu0 0.0
  %344 = vmatpush1.msra.mxu0 0.0
  %345 = vmatprep.subr.mxu0 0.0
  %346 = vmatpush1.msra.mxu0 0.0
  %347 = vmatprep.subr.mxu0 0.0
  %348 = vmatpush1.msra.mxu0 0.0
  %349 = vmatprep.subr.mxu0 0.0
  %350 = vmatpush1.msra.mxu0 0.0
  %351 = vmatprep.subr.mxu0 0.0
  %352 = vmatpush1.msra.mxu0 0.0
  %353 = vmatprep.subr.mxu0 0.0
  %354 = vmatpush1.msra.mxu0 0.0
  %355 = vmatprep.subr.mxu0 %v332
  %356 = vmatpush1.msra.mxu0 %v331
  %357 = vmatprep.subr.mxu0 %v330
  %358 = vmatpush1.msra.mxu0 %v329
  %359 = vmatprep.subr.mxu0 %v328
  %360 = vmatpush1.msra.mxu0 %v327
  %361 = vmatprep.subr.mxu0 %v326
  %362 = vmatpush1.msra.mxu0 %v325
  %363 = vmatprep.subr.mxu0 %v324
  %364 = vmatpush1.msra.mxu0 %v323
  %365 = vmatprep.subr.mxu0 %v322
  %366 = vmatpush1.msra.mxu0 %v321
  %367 = vmatprep.subr.mxu0 %v320
  %368 = vmatpush1.msra.mxu0 %v319
  %369 = vmatprep.subr.mxu0 %v318
  %370 = vmatpush1.msra.mxu0 %v317
  %371 = vmatprep.subr.mxu0 0.0
  %372 = vmatpush2.msra.mxu0 0.0
  %373 = vmatprep.subr.mxu0 0.0
  %374 = vmatpush2.msra.mxu0 0.0
  %375 = vmatprep.subr.mxu0 0.0
  %376 = vmatpush2.msra.mxu0 0.0
  %377 = vmatprep.subr.mxu0 0.0
  %378 = vmatpush2.msra.mxu0 0.0
  %379 = vmatprep.subr.mxu0 0.0
  %380 = vmatpush2.msra.mxu0 0.0
  %381 = vmatprep.subr.mxu0 0.0
  %382 = vmatpush2.msra.mxu0 0.0
  %383 = vmatprep.subr.mxu0 0.0
  %384 = vmatpush2.msra.mxu0 0.0
  %385 = vmatprep.subr.mxu0 0.0
  %386 = vmatpush2.msra.mxu0 0.0
  %387 = vmatprep.subr.mxu0 0.0
  %388 = vmatpush2.msra.mxu0 0.0
  %389 = vmatprep.subr.mxu0 0.0
  %390 = vmatpush2.msra.mxu0 0.0
  %391 = vmatprep.subr.mxu0 0.0
  %392 = vmatpush2.msra.mxu0 0.0
  %393 = vmatprep.subr.mxu0 0.0
  %394 = vmatpush2.msra.mxu0 0.0
  %395 = vmatprep.subr.mxu0 0.0
  %396 = vmatpush2.msra.mxu0 0.0
  %397 = vmatprep.subr.mxu0 0.0
  %398 = vmatpush2.msra.mxu0 0.0
  %399 = vmatprep.subr.mxu0 0.0
  %400 = vmatpush2.msra.mxu0 0.0
  %401 = vmatprep.subr.mxu0 0.0
  %402 = vmatpush2.msra.mxu0 0.0
  %403 = vmatprep.mubr.f32.mxu0 0.0
  %404 = vmatmul.mubr.f32.gmra.mxu0 %v337
  %v405 = vpop.f32.mrf.mxu0
  %v406 = vadd.f32 0.0, %v405
  %v407 = vpop.f32.mrf.mxu0
  %v408 = vadd.f32 0.0, %v407
  %409 = vdwg.mxu0
  %v410 = vadd.f32 %v333, %v406
  %v411 = vadd.f32 %v334, %v408
  %v412 = vtanh.pop %v410
  %v413 = vtanh.pop %v411
  %v414 = vmul.f32 %v412, 0.5
  %v415 = vmul.f32 %v413, 0.5
  %v416 = vadd.f32 %v414, 0.5
  %v417 = vadd.f32 %v415, 0.5
  %v418 = vmul.f32 %v416, 0.0
  %v419 = vmul.f32 %v416, %v413
  %421 = vrot.lane.b32.xlu0 %v419, 64
  %v422 = vpop.permute.xlu0 %421
  %v424 = vadd.f32 %v418, %v422
  %v425 = vtanh.pop %v424
  %v426 = vmul.f32 %v417, %v425
  %428 = vrot.lane.b32.xlu0 %v426, 64
  %v429 = vpop.permute.xlu0 %428
  %vm431 = vcmask 261120
  %432 = vst.msk [vmem:[#allocation2] sm:$0xff] %vm431, %v429
  %vm433 = vcmask 523520
  %434 = vst.msk [vmem:[#allocation2 + $0x38] sm:$0xff] %vm433, %v429
  %v435 = vadd.f32 %v160, %v307
  %v436 = vadd.f32 %v162, %v309
  %v437 = vsel %vm335, %v429, 0
  %439 = vmatprep.subr.mxu0 0.0
  %440 = vmatpush1.msra.mxu0 0.0
  %441 = vmatprep.subr.mxu0 0.0
  %442 = vmatpush1.msra.mxu0 0.0
  %443 = vmatprep.subr.mxu0 0.0
  %444 = vmatpush1.msra.mxu0 0.0
  %445 = vmatprep.subr.mxu0 0.0
  %446 = vmatpush1.msra.mxu0 0.0
  %447 = vmatprep.subr.mxu0 0.0
  %448 = vmatpush1.msra.mxu0 0.0
  %449 = vmatprep.subr.mxu0 0.0
  %450 = vmatpush1.msra.mxu0 0.0
  %451 = vmatprep.subr.mxu0 0.0
  %452 = vmatpush1.msra.mxu0 0.0
  %453 = vmatprep.subr.mxu0 0.0
  %454 = vmatpush1.msra.mxu0 0.0
  %455 = vmatprep.subr.mxu0 %v332
  %456 = vmatpush1.msra.mxu0 %v331
  %457 = vmatprep.subr.mxu0 %v330
  %458 = vmatpush1.msra.mxu0 %v329
  %459 = vmatprep.subr.mxu0 %v328
  %460 = vmatpush1.msra.mxu0 %v327
  %461 = vmatprep.subr.mxu0 %v326
  %462 = vmatpush1.msra.mxu0 %v325
  %463 = vmatprep.subr.mxu0 %v324
  %464 = vmatpush1.msra.mxu0 %v323
  %465 = vmatprep.subr.mxu0 %v322
  %466 = vmatpush1.msra.mxu0 %v321
  %467 = vmatprep.subr.mxu0 %v320
  %468 = vmatpush1.msra.mxu0 %v319
  %469 = vmatprep.subr.mxu0 %v318
  %470 = vmatpush1.msra.mxu0 %v317
  %471 = vmatprep.subr.mxu0 0.0
  %472 = vmatpush2.msra.mxu0 0.0
  %473 = vmatprep.subr.mxu0 0.0
  %474 = vmatpush2.msra.mxu0 0.0
  %475 = vmatprep.subr.mxu0 0.0
  %476 = vmatpush2.msra.mxu0 0.0
  %477 = vmatprep.subr.mxu0 0.0
  %478 = vmatpush2.msra.mxu0 0.0
  %479 = vmatprep.subr.mxu0 0.0
  %480 = vmatpush2.msra.mxu0 0.0
  %481 = vmatprep.subr.mxu0 0.0
  %482 = vmatpush2.msra.mxu0 0.0
  %483 = vmatprep.subr.mxu0 0.0
  %484 = vmatpush2.msra.mxu0 0.0
  %485 = vmatprep.subr.mxu0 0.0
  %486 = vmatpush2.msra.mxu0 0.0
  %487 = vmatprep.subr.mxu0 0.0
  %488 = vmatpush2.msra.mxu0 0.0
  %489 = vmatprep.subr.mxu0 0.0
  %490 = vmatpush2.msra.mxu0 0.0
  %491 = vmatprep.subr.mxu0 0.0
  %492 = vmatpush2.msra.mxu0 0.0
  %493 = vmatprep.subr.mxu0 0.0
  %494 = vmatpush2.msra.mxu0 0.0
  %495 = vmatprep.subr.mxu0 0.0
  %496 = vmatpush2.msra.mxu0 0.0
  %497 = vmatprep.subr.mxu0 0.0
  %498 = vmatpush2.msra.mxu0 0.0
  %499 = vmatprep.subr.mxu0 0.0
  %500 = vmatpush2.msra.mxu0 0.0
  %501 = vmatprep.subr.mxu0 0.0
  %502 = vmatpush2.msra.mxu0 0.0
  %503 = vmatprep.mubr.f32.mxu0 0.0
  %504 = vmatmul.mubr.f32.gmra.mxu0 %v437
  %v505 = vpop.f32.mrf.mxu0
  %v506 = vadd.f32 0.0, %v505
  %v507 = vpop.f32.mrf.mxu0
  %v508 = vadd.f32 0.0, %v507
  %509 = vdwg.mxu0
  %v510 = vadd.f32 %v435, %v506
  %v511 = vadd.f32 %v436, %v508
  %v512 = vtanh.pop %v510
  %v513 = vtanh.pop %v511
  %v514 = vmul.f32 %v512, 0.5
  %v515 = vmul.f32 %v513, 0.5
  %v516 = vadd.f32 %v514, 0.5
  %v517 = vadd.f32 %v515, 0.5
  %v518 = vmul.f32 %v516, %v424
  %v519 = vmul.f32 %v516, %v513
  %521 = vrot.lane.b32.xlu0 %v519, 64
  %v522 = vpop.permute.xlu0 %521
  %v524 = vadd.f32 %v518, %v522
  %v525 = vtanh.pop %v524
  %v526 = vmul.f32 %v517, %v525
  %528 = vrot.lane.b32.xlu0 %v526, 64
  %v529 = vpop.permute.xlu0 %528
  %531 = vst.msk [vmem:[#allocation2 + $0x8] sm:$0xff] %vm431, %v529
  %532 = vst.msk [vmem:[#allocation2 + $0x30] sm:$0xff] %vm433, %v529
  %v533 = vadd.f32 %v166, %v301
  %v534 = vadd.f32 %v168, %v303
  %v535 = vsel %vm335, %v529, 0
  %537 = vmatprep.subr.mxu0 0.0
  %538 = vmatpush1.msra.mxu0 0.0
  %539 = vmatprep.subr.mxu0 0.0
  %540 = vmatpush1.msra.mxu0 0.0
  %541 = vmatprep.subr.mxu0 0.0
  %542 = vmatpush1.msra.mxu0 0.0
  %543 = vmatprep.subr.mxu0 0.0
  %544 = vmatpush1.msra.mxu0 0.0
  %545 = vmatprep.subr.mxu0 0.0
  %546 = vmatpush1.msra.mxu0 0.0
  %547 = vmatprep.subr.mxu0 0.0
  %548 = vmatpush1.msra.mxu0 0.0
  %549 = vmatprep.subr.mxu0 0.0
  %550 = vmatpush1.msra.mxu0 0.0
  %551 = vmatprep.subr.mxu0 0.0
  %552 = vmatpush1.msra.mxu0 0.0
  %553 = vmatprep.subr.mxu0 %v332
  %554 = vmatpush1.msra.mxu0 %v331
  %555 = vmatprep.subr.mxu0 %v330
  %556 = vmatpush1.msra.mxu0 %v329
  %557 = vmatprep.subr.mxu0 %v328
  %558 = vmatpush1.msra.mxu0 %v327
  %559 = vmatprep.subr.mxu0 %v326
  %560 = vmatpush1.msra.mxu0 %v325
  %561 = vmatprep.subr.mxu0 %v324
  %562 = vmatpush1.msra.mxu0 %v323
  %563 = vmatprep.subr.mxu0 %v322
  %564 = vmatpush1.msra.mxu0 %v321
  %565 = vmatprep.subr.mxu0 %v320
  %566 = vmatpush1.msra.mxu0 %v319
  %567 = vmatprep.subr.mxu0 %v318
  %568 = vmatpush1.msra.mxu0 %v317
  %569 = vmatprep.subr.mxu0 0.0
  %570 = vmatpush2.msra.mxu0 0.0
  %571 = vmatprep.subr.mxu0 0.0
  %572 = vmatpush2.msra.mxu0 0.0
  %573 = vmatprep.subr.mxu0 0.0
  %574 = vmatpush2.msra.mxu0 0.0
  %575 = vmatprep.subr.mxu0 0.0
  %576 = vmatpush2.msra.mxu0 0.0
  %577 = vmatprep.subr.mxu0 0.0
  %578 = vmatpush2.msra.mxu0 0.0
  %579 = vmatprep.subr.mxu0 0.0
  %580 = vmatpush2.msra.mxu0 0.0
  %581 = vmatprep.subr.mxu0 0.0
  %582 = vmatpush2.msra.mxu0 0.0
  %583 = vmatprep.subr.mxu0 0.0
  %584 = vmatpush2.msra.mxu0 0.0
  %585 = vmatprep.subr.mxu0 0.0
  %586 = vmatpush2.msra.mxu0 0.0
  %587 = vmatprep.subr.mxu0 0.0
  %588 = vmatpush2.msra.mxu0 0.0
  %589 = vmatprep.subr.mxu0 0.0
  %590 = vmatpush2.msra.mxu0 0.0
  %591 = vmatprep.subr.mxu0 0.0
  %592 = vmatpush2.msra.mxu0 0.0
  %593 = vmatprep.subr.mxu0 0.0
  %594 = vmatpush2.msra.mxu0 0.0
  %595 = vmatprep.subr.mxu0 0.0
  %596 = vmatpush2.msra.mxu0 0.0
  %597 = vmatprep.subr.mxu0 0.0
  %598 = vmatpush2.msra.mxu0 0.0
  %599 = vmatprep.subr.mxu0 0.0
  %600 = vmatpush2.msra.mxu0 0.0
  %601 = vmatprep.mubr.f32.mxu0 0.0
  %602 = vmatmul.mubr.f32.gmra.mxu0 %v535
  %v603 = vpop.f32.mrf.mxu0
  %v604 = vadd.f32 0.0, %v603
  %v605 = vpop.f32.mrf.mxu0
  %v606 = vadd.f32 0.0, %v605
  %607 = vdwg.mxu0
  %v608 = vadd.f32 %v533, %v604
  %v609 = vadd.f32 %v534, %v606
  %v610 = vtanh.pop %v608
  %v611 = vtanh.pop %v609
  %v612 = vmul.f32 %v610, 0.5
  %v613 = vmul.f32 %v611, 0.5
  %v614 = vadd.f32 %v612, 0.5
  %v615 = vadd.f32 %v613, 0.5
  %v616 = vmul.f32 %v614, %v524
  %v617 = vmul.f32 %v614, %v611
  %619 = vrot.lane.b32.xlu0 %v617, 64
  %v620 = vpop.permute.xlu0 %619
  %v622 = vadd.f32 %v616, %v620
  %v623 = vtanh.pop %v622
  %v624 = vmul.f32 %v615, %v623
  %626 = vrot.lane.b32.xlu0 %v624, 64
  %v627 = vpop.permute.xlu0 %626
  %629 = vst.msk [vmem:[#allocation2 + $0x10] sm:$0xff] %vm431, %v627
  %630 = vst.msk [vmem:[#allocation2 + $0x28] sm:$0xff] %vm433, %v627
  %v631 = vadd.f32 %v172, %v295
  %v632 = vadd.f32 %v174, %v297
  %v633 = vsel %vm335, %v627, 0
  %635 = vmatprep.subr.mxu0 0.0
  %636 = vmatpush1.msra.mxu0 0.0
  %637 = vmatprep.subr.mxu0 0.0
  %638 = vmatpush1.msra.mxu0 0.0
  %639 = vmatprep.subr.mxu0 0.0
  %640 = vmatpush1.msra.mxu0 0.0
  %641 = vmatprep.subr.mxu0 0.0
  %642 = vmatpush1.msra.mxu0 0.0
  %643 = vmatprep.subr.mxu0 0.0
  %644 = vmatpush1.msra.mxu0 0.0
  %645 = vmatprep.subr.mxu0 0.0
  %646 = vmatpush1.msra.mxu0 0.0
  %647 = vmatprep.subr.mxu0 0.0
  %648 = vmatpush1.msra.mxu0 0.0
  %649 = vmatprep.subr.mxu0 0.0
  %650 = vmatpush1.msra.mxu0 0.0
  %651 = vmatprep.subr.mxu0 %v332
  %652 = vmatpush1.msra.mxu0 %v331
  %653 = vmatprep.subr.mxu0 %v330
  %654 = vmatpush1.msra.mxu0 %v329
  %655 = vmatprep.subr.mxu0 %v328
  %656 = vmatpush1.msra.mxu0 %v327
  %657 = vmatprep.subr.mxu0 %v326
  %658 = vmatpush1.msra.mxu0 %v325
  %659 = vmatprep.subr.mxu0 %v324
  %660 = vmatpush1.msra.mxu0 %v323
  %661 = vmatprep.subr.mxu0 %v322
  %662 = vmatpush1.msra.mxu0 %v321
  %663 = vmatprep.subr.mxu0 %v320
  %664 = vmatpush1.msra.mxu0 %v319
  %665 = vmatprep.subr.mxu0 %v318
  %666 = vmatpush1.msra.mxu0 %v317
  %667 = vmatprep.subr.mxu0 0.0
  %668 = vmatpush2.msra.mxu0 0.0
  %669 = vmatprep.subr.mxu0 0.0
  %670 = vmatpush2.msra.mxu0 0.0
  %671 = vmatprep.subr.mxu0 0.0
  %672 = vmatpush2.msra.mxu0 0.0
  %673 = vmatprep.subr.mxu0 0.0
  %674 = vmatpush2.msra.mxu0 0.0
  %675 = vmatprep.subr.mxu0 0.0
  %676 = vmatpush2.msra.mxu0 0.0
  %677 = vmatprep.subr.mxu0 0.0
  %678 = vmatpush2.msra.mxu0 0.0
  %679 = vmatprep.subr.mxu0 0.0
  %680 = vmatpush2.msra.mxu0 0.0
  %681 = vmatprep.subr.mxu0 0.0
  %682 = vmatpush2.msra.mxu0 0.0
  %683 = vmatprep.subr.mxu0 0.0
  %684 = vmatpush2.msra.mxu0 0.0
  %685 = vmatprep.subr.mxu0 0.0
  %686 = vmatpush2.msra.mxu0 0.0
  %687 = vmatprep.subr.mxu0 0.0
  %688 = vmatpush2.msra.mxu0 0.0
  %689 = vmatprep.subr.mxu0 0.0
  %690 = vmatpush2.msra.mxu0 0.0
  %691 = vmatprep.subr.mxu0 0.0
  %692 = vmatpush2.msra.mxu0 0.0
  %693 = vmatprep.subr.mxu0 0.0
  %694 = vmatpush2.msra.mxu0 0.0
  %695 = vmatprep.subr.mxu0 0.0
  %696 = vmatpush2.msra.mxu0 0.0
  %697 = vmatprep.subr.mxu0 0.0
  %698 = vmatpush2.msra.mxu0 0.0
  %699 = vmatprep.mubr.f32.mxu0 0.0
  %700 = vmatmul.mubr.f32.gmra.mxu0 %v633
  %v701 = vpop.f32.mrf.mxu0
  %v702 = vadd.f32 0.0, %v701
  %v703 = vpop.f32.mrf.mxu0
  %v704 = vadd.f32 0.0, %v703
  %705 = vdwg.mxu0
  %v706 = vadd.f32 %v631, %v702
  %v707 = vadd.f32 %v632, %v704
  %v708 = vtanh.pop %v706
  %v709 = vtanh.pop %v707
  %v710 = vmul.f32 %v708, 0.5
  %v711 = vmul.f32 %v709, 0.5
  %v712 = vadd.f32 %v710, 0.5
  %v713 = vadd.f32 %v711, 0.5
  %v714 = vmul.f32 %v712, %v622
  %v715 = vmul.f32 %v712, %v709
  %717 = vrot.lane.b32.xlu0 %v715, 64
  %v718 = vpop.permute.xlu0 %717
  %v720 = vadd.f32 %v714, %v718
  %v721 = vtanh.pop %v720
  %v722 = vmul.f32 %v713, %v721
  %724 = vrot.lane.b32.xlu0 %v722, 64
  %v725 = vpop.permute.xlu0 %724
  %727 = vst.msk [vmem:[#allocation2 + $0x18] sm:$0xff] %vm431, %v725
  %728 = vst.msk [vmem:[#allocation2 + $0x20] sm:$0xff] %vm433, %v725
  %v729 = vadd.f32 %v178, %v289
  %v730 = vadd.f32 %v180, %v291
  %v731 = vsel %vm335, %v725, 0
  %733 = vmatprep.subr.mxu0 0.0
  %734 = vmatpush1.msra.mxu0 0.0
  %735 = vmatprep.subr.mxu0 0.0
  %736 = vmatpush1.msra.mxu0 0.0
  %737 = vmatprep.subr.mxu0 0.0
  %738 = vmatpush1.msra.mxu0 0.0
  %739 = vmatprep.subr.mxu0 0.0
  %740 = vmatpush1.msra.mxu0 0.0
  %741 = vmatprep.subr.mxu0 0.0
  %742 = vmatpush1.msra.mxu0 0.0
  %743 = vmatprep.subr.mxu0 0.0
  %744 = vmatpush1.msra.mxu0 0.0
  %745 = vmatprep.subr.mxu0 0.0
  %746 = vmatpush1.msra.mxu0 0.0
  %747 = vmatprep.subr.mxu0 0.0
  %748 = vmatpush1.msra.mxu0 0.0
  %749 = vmatprep.subr.mxu0 %v332
  %750 = vmatpush1.msra.mxu0 %v331
  %751 = vmatprep.subr.mxu0 %v330
  %752 = vmatpush1.msra.mxu0 %v329
  %753 = vmatprep.subr.mxu0 %v328
  %754 = vmatpush1.msra.mxu0 %v327
  %755 = vmatprep.subr.mxu0 %v326
  %756 = vmatpush1.msra.mxu0 %v325
  %757 = vmatprep.subr.mxu0 %v324
  %758 = vmatpush1.msra.mxu0 %v323
  %759 = vmatprep.subr.mxu0 %v322
  %760 = vmatpush1.msra.mxu0 %v321
  %761 = vmatprep.subr.mxu0 %v320
  %762 = vmatpush1.msra.mxu0 %v319
  %763 = vmatprep.subr.mxu0 %v318
  %764 = vmatpush1.msra.mxu0 %v317
  %765 = vmatprep.subr.mxu0 0.0
  %766 = vmatpush2.msra.mxu0 0.0
  %767 = vmatprep.subr.mxu0 0.0
  %768 = vmatpush2.msra.mxu0 0.0
  %769 = vmatprep.subr.mxu0 0.0
  %770 = vmatpush2.msra.mxu0 0.0
  %771 = vmatprep.subr.mxu0 0.0
  %772 = vmatpush2.msra.mxu0 0.0
  %773 = vmatprep.subr.mxu0 0.0
  %774 = vmatpush2.msra.mxu0 0.0
  %775 = vmatprep.subr.mxu0 0.0
  %776 = vmatpush2.msra.mxu0 0.0
  %777 = vmatprep.subr.mxu0 0.0
  %778 = vmatpush2.msra.mxu0 0.0
  %779 = vmatprep.subr.mxu0 0.0
  %780 = vmatpush2.msra.mxu0 0.0
  %781 = vmatprep.subr.mxu0 0.0
  %782 = vmatpush2.msra.mxu0 0.0
  %783 = vmatprep.subr.mxu0 0.0
  %784 = vmatpush2.msra.mxu0 0.0
  %785 = vmatprep.subr.mxu0 0.0
  %786 = vmatpush2.msra.mxu0 0.0
  %787 = vmatprep.subr.mxu0 0.0
  %788 = vmatpush2.msra.mxu0 0.0
  %789 = vmatprep.subr.mxu0 0.0
  %790 = vmatpush2.msra.mxu0 0.0
  %791 = vmatprep.subr.mxu0 0.0
  %792 = vmatpush2.msra.mxu0 0.0
  %793 = vmatprep.subr.mxu0 0.0
  %794 = vmatpush2.msra.mxu0 0.0
  %795 = vmatprep.subr.mxu0 0.0
  %796 = vmatpush2.msra.mxu0 0.0
  %797 = vmatprep.mubr.f32.mxu0 0.0
  %798 = vmatmul.mubr.f32.gmra.mxu0 %v731
  %v799 = vpop.f32.mrf.mxu0
  %v800 = vadd.f32 0.0, %v799
  %v801 = vpop.f32.mrf.mxu0
  %v802 = vadd.f32 0.0, %v801
  %803 = vdwg.mxu0
  %v804 = vadd.f32 %v729, %v800
  %v805 = vadd.f32 %v730, %v802
  %v806 = vtanh.pop %v804
  %v807 = vtanh.pop %v805
  %v808 = vmul.f32 %v806, 0.5
  %v809 = vmul.f32 %v807, 0.5
  %v810 = vadd.f32 %v808, 0.5
  %v811 = vadd.f32 %v809, 0.5
  %v812 = vmul.f32 %v810, %v720
  %v813 = vmul.f32 %v810, %v807
  %815 = vrot.lane.b32.xlu0 %v813, 64
  %v816 = vpop.permute.xlu0 %815
  %v818 = vadd.f32 %v812, %v816
  %v819 = vtanh.pop %v818
  %v820 = vmul.f32 %v811, %v819
  %822 = vrot.lane.b32.xlu0 %v820, 64
  %v823 = vpop.permute.xlu0 %822
  %825 = vst.msk [vmem:[#allocation2 + $0x20] sm:$0xff] %vm431, %v823
  %826 = vst.msk [vmem:[#allocation2 + $0x18] sm:$0xff] %vm433, %v823
  %v827 = vadd.f32 %v184, %v283
  %v828 = vadd.f32 %v186, %v285
  %v829 = vsel %vm335, %v823, 0
  %831 = vmatprep.subr.mxu0 0.0
  %832 = vmatpush1.msra.mxu0 0.0
  %833 = vmatprep.subr.mxu0 0.0
  %834 = vmatpush1.msra.mxu0 0.0
  %835 = vmatprep.subr.mxu0 0.0
  %836 = vmatpush1.msra.mxu0 0.0
  %837 = vmatprep.subr.mxu0 0.0
  %838 = vmatpush1.msra.mxu0 0.0
  %839 = vmatprep.subr.mxu0 0.0
  %840 = vmatpush1.msra.mxu0 0.0
  %841 = vmatprep.subr.mxu0 0.0
  %842 = vmatpush1.msra.mxu0 0.0
  %843 = vmatprep.subr.mxu0 0.0
  %844 = vmatpush1.msra.mxu0 0.0
  %845 = vmatprep.subr.mxu0 0.0
  %846 = vmatpush1.msra.mxu0 0.0
  %847 = vmatprep.subr.mxu0 %v332
  %848 = vmatpush1.msra.mxu0 %v331
  %849 = vmatprep.subr.mxu0 %v330
  %850 = vmatpush1.msra.mxu0 %v329
  %851 = vmatprep.subr.mxu0 %v328
  %852 = vmatpush1.msra.mxu0 %v327
  %853 = vmatprep.subr.mxu0 %v326
  %854 = vmatpush1.msra.mxu0 %v325
  %855 = vmatprep.subr.mxu0 %v324
  %856 = vmatpush1.msra.mxu0 %v323
  %857 = vmatprep.subr.mxu0 %v322
  %858 = vmatpush1.msra.mxu0 %v321
  %859 = vmatprep.subr.mxu0 %v320
  %860 = vmatpush1.msra.mxu0 %v319
  %861 = vmatprep.subr.mxu0 %v318
  %862 = vmatpush1.msra.mxu0 %v317
  %863 = vmatprep.subr.mxu0 0.0
  %864 = vmatpush2.msra.mxu0 0.0
  %865 = vmatprep.subr.mxu0 0.0
  %866 = vmatpush2.msra.mxu0 0.0
  %867 = vmatprep.subr.mxu0 0.0
  %868 = vmatpush2.msra.mxu0 0.0
  %869 = vmatprep.subr.mxu0 0.0
  %870 = vmatpush2.msra.mxu0 0.0
  %871 = vmatprep.subr.mxu0 0.0
  %872 = vmatpush2.msra.mxu0 0.0
  %873 = vmatprep.subr.mxu0 0.0
  %874 = vmatpush2.msra.mxu0 0.0
  %875 = vmatprep.subr.mxu0 0.0
  %876 = vmatpush2.msra.mxu0 0.0
  %877 = vmatprep.subr.mxu0 0.0
  %878 = vmatpush2.msra.mxu0 0.0
  %879 = vmatprep.subr.mxu0 0.0
  %880 = vmatpush2.msra.mxu0 0.0
  %881 = vmatprep.subr.mxu0 0.0
  %882 = vmatpush2.msra.mxu0 0.0
  %883 = vmatprep.subr.mxu0 0.0
  %884 = vmatpush2.msra.mxu0 0.0
  %885 = vmatprep.subr.mxu0 0.0
  %886 = vmatpush2.msra.mxu0 0.0
  %887 = vmatprep.subr.mxu0 0.0
  %888 = vmatpush2.msra.mxu0 0.0
  %889 = vmatprep.subr.mxu0 0.0
  %890 = vmatpush2.msra.mxu0 0.0
  %891 = vmatprep.subr.mxu0 0.0
  %892 = vmatpush2.msra.mxu0 0.0
  %893 = vmatprep.subr.mxu0 0.0
  %894 = vmatpush2.msra.mxu0 0.0
  %895 = vmatprep.mubr.f32.mxu0 0.0
  %896 = vmatmul.mubr.f32.gmra.mxu0 %v829
  %v897 = vpop.f32.mrf.mxu0
  %v898 = vadd.f32 0.0, %v897
  %v899 = vpop.f32.mrf.mxu0
  %v900 = vadd.f32 0.0, %v899
  %901 = vdwg.mxu0
  %v902 = vadd.f32 %v827, %v898
  %v903 = vadd.f32 %v828, %v900
  %v904 = vtanh.pop %v902
  %v905 = vtanh.pop %v903
  %v906 = vmul.f32 %v904, 0.5
  %v907 = vmul.f32 %v905, 0.5
  %v908 = vadd.f32 %v906, 0.5
  %v909 = vadd.f32 %v907, 0.5
  %v910 = vmul.f32 %v908, %v818
  %v911 = vmul.f32 %v908, %v905
  %913 = vrot.lane.b32.xlu0 %v911, 64
  %v914 = vpop.permute.xlu0 %913
  %v916 = vadd.f32 %v910, %v914
  %v917 = vtanh.pop %v916
  %v918 = vmul.f32 %v909, %v917
  %920 = vrot.lane.b32.xlu0 %v918, 64
  %v921 = vpop.permute.xlu0 %920
  %923 = vst.msk [vmem:[#allocation2 + $0x28] sm:$0xff] %vm431, %v921
  %924 = vst.msk [vmem:[#allocation2 + $0x10] sm:$0xff] %vm433, %v921
  %v925 = vadd.f32 %v190, %v277
  %v926 = vadd.f32 %v192, %v279
  %v927 = vsel %vm335, %v921, 0
  %929 = vmatprep.subr.mxu0 0.0
  %930 = vmatpush1.msra.mxu0 0.0
  %931 = vmatprep.subr.mxu0 0.0
  %932 = vmatpush1.msra.mxu0 0.0
  %933 = vmatprep.subr.mxu0 0.0
  %934 = vmatpush1.msra.mxu0 0.0
  %935 = vmatprep.subr.mxu0 0.0
  %936 = vmatpush1.msra.mxu0 0.0
  %937 = vmatprep.subr.mxu0 0.0
  %938 = vmatpush1.msra.mxu0 0.0
  %939 = vmatprep.subr.mxu0 0.0
  %940 = vmatpush1.msra.mxu0 0.0
  %941 = vmatprep.subr.mxu0 0.0
  %942 = vmatpush1.msra.mxu0 0.0
  %943 = vmatprep.subr.mxu0 0.0
  %944 = vmatpush1.msra.mxu0 0.0
  %945 = vmatprep.subr.mxu0 %v332
  %946 = vmatpush1.msra.mxu0 %v331
  %947 = vmatprep.subr.mxu0 %v330
  %948 = vmatpush1.msra.mxu0 %v329
  %949 = vmatprep.subr.mxu0 %v328
  %950 = vmatpush1.msra.mxu0 %v327
  %951 = vmatprep.subr.mxu0 %v326
  %952 = vmatpush1.msra.mxu0 %v325
  %953 = vmatprep.subr.mxu0 %v324
  %954 = vmatpush1.msra.mxu0 %v323
  %955 = vmatprep.subr.mxu0 %v322
  %956 = vmatpush1.msra.mxu0 %v321
  %957 = vmatprep.subr.mxu0 %v320
  %958 = vmatpush1.msra.mxu0 %v319
  %959 = vmatprep.subr.mxu0 %v318
  %960 = vmatpush1.msra.mxu0 %v317
  %961 = vmatprep.subr.mxu0 0.0
  %962 = vmatpush2.msra.mxu0 0.0
  %963 = vmatprep.subr.mxu0 0.0
  %964 = vmatpush2.msra.mxu0 0.0
  %965 = vmatprep.subr.mxu0 0.0
  %966 = vmatpush2.msra.mxu0 0.0
  %967 = vmatprep.subr.mxu0 0.0
  %968 = vmatpush2.msra.mxu0 0.0
  %969 = vmatprep.subr.mxu0 0.0
  %970 = vmatpush2.msra.mxu0 0.0
  %971 = vmatprep.subr.mxu0 0.0
  %972 = vmatpush2.msra.mxu0 0.0
  %973 = vmatprep.subr.mxu0 0.0
  %974 = vmatpush2.msra.mxu0 0.0
  %975 = vmatprep.subr.mxu0 0.0
  %976 = vmatpush2.msra.mxu0 0.0
  %977 = vmatprep.subr.mxu0 0.0
  %978 = vmatpush2.msra.mxu0 0.0
  %979 = vmatprep.subr.mxu0 0.0
  %980 = vmatpush2.msra.mxu0 0.0
  %981 = vmatprep.subr.mxu0 0.0
  %982 = vmatpush2.msra.mxu0 0.0
  %983 = vmatprep.subr.mxu0 0.0
  %984 = vmatpush2.msra.mxu0 0.0
  %985 = vmatprep.subr.mxu0 0.0
  %986 = vmatpush2.msra.mxu0 0.0
  %987 = vmatprep.subr.mxu0 0.0
  %988 = vmatpush2.msra.mxu0 0.0
  %989 = vmatprep.subr.mxu0 0.0
  %990 = vmatpush2.msra.mxu0 0.0
  %991 = vmatprep.subr.mxu0 0.0
  %992 = vmatpush2.msra.mxu0 0.0
  %993 = vmatprep.mubr.f32.mxu0 0.0
  %994 = vmatmul.mubr.f32.gmra.mxu0 %v927
  %v995 = vpop.f32.mrf.mxu0
  %v996 = vadd.f32 0.0, %v995
  %v997 = vpop.f32.mrf.mxu0
  %v998 = vadd.f32 0.0, %v997
  %999 = vdwg.mxu0
  %v1000 = vadd.f32 %v925, %v996
  %v1001 = vadd.f32 %v926, %v998
  %v1002 = vtanh.pop %v1000
  %v1003 = vtanh.pop %v1001
  %v1004 = vmul.f32 %v1002, 0.5
  %v1005 = vmul.f32 %v1003, 0.5
  %v1006 = vadd.f32 %v1004, 0.5
  %v1007 = vadd.f32 %v1005, 0.5
  %v1008 = vmul.f32 %v1006, %v916
  %v1009 = vmul.f32 %v1006, %v1003
  %1011 = vrot.lane.b32.xlu0 %v1009, 64
  %v1012 = vpop.permute.xlu0 %1011
  %v1014 = vadd.f32 %v1008, %v1012
  %v1015 = vtanh.pop %v1014
  %v1016 = vmul.f32 %v1007, %v1015
  %1018 = vrot.lane.b32.xlu0 %v1016, 64
  %v1019 = vpop.permute.xlu0 %1018
  %1021 = vst.msk [vmem:[#allocation2 + $0x30] sm:$0xff] %vm431, %v1019
  %1022 = vst.msk [vmem:[#allocation2 + $0x8] sm:$0xff] %vm433, %v1019
  %v1023 = vadd.f32 %v196, %v271
  %v1024 = vadd.f32 %v198, %v273
  %v1025 = vsel %vm335, %v1019, 0
  %1027 = vmatprep.subr.mxu0 0.0
  %1028 = vmatpush1.msra.mxu0 0.0
  %1029 = vmatprep.subr.mxu0 0.0
  %1030 = vmatpush1.msra.mxu0 0.0
  %1031 = vmatprep.subr.mxu0 0.0
  %1032 = vmatpush1.msra.mxu0 0.0
  %1033 = vmatprep.subr.mxu0 0.0
  %1034 = vmatpush1.msra.mxu0 0.0
  %1035 = vmatprep.subr.mxu0 0.0
  %1036 = vmatpush1.msra.mxu0 0.0
  %1037 = vmatprep.subr.mxu0 0.0
  %1038 = vmatpush1.msra.mxu0 0.0
  %1039 = vmatprep.subr.mxu0 0.0
  %1040 = vmatpush1.msra.mxu0 0.0
  %1041 = vmatprep.subr.mxu0 0.0
  %1042 = vmatpush1.msra.mxu0 0.0
  %1043 = vmatprep.subr.mxu0 %v332
  %1044 = vmatpush1.msra.mxu0 %v331
  %1045 = vmatprep.subr.mxu0 %v330
  %1046 = vmatpush1.msra.mxu0 %v329
  %1047 = vmatprep.subr.mxu0 %v328
  %1048 = vmatpush1.msra.mxu0 %v327
  %1049 = vmatprep.subr.mxu0 %v326
  %1050 = vmatpush1.msra.mxu0 %v325
  %1051 = vmatprep.subr.mxu0 %v324
  %1052 = vmatpush1.msra.mxu0 %v323
  %1053 = vmatprep.subr.mxu0 %v322
  %1054 = vmatpush1.msra.mxu0 %v321
  %1055 = vmatprep.subr.mxu0 %v320
  %1056 = vmatpush1.msra.mxu0 %v319
  %1057 = vmatprep.subr.mxu0 %v318
  %1058 = vmatpush1.msra.mxu0 %v317
  %1059 = vmatprep.subr.mxu0 0.0
  %1060 = vmatpush2.msra.mxu0 0.0
  %1061 = vmatprep.subr.mxu0 0.0
  %1062 = vmatpush2.msra.mxu0 0.0
  %1063 = vmatprep.subr.mxu0 0.0
  %1064 = vmatpush2.msra.mxu0 0.0
  %1065 = vmatprep.subr.mxu0 0.0
  %1066 = vmatpush2.msra.mxu0 0.0
  %1067 = vmatprep.subr.mxu0 0.0
  %1068 = vmatpush2.msra.mxu0 0.0
  %1069 = vmatprep.subr.mxu0 0.0
  %1070 = vmatpush2.msra.mxu0 0.0
  %1071 = vmatprep.subr.mxu0 0.0
  %1072 = vmatpush2.msra.mxu0 0.0
  %1073 = vmatprep.subr.mxu0 0.0
  %1074 = vmatpush2.msra.mxu0 0.0
  %1075 = vmatprep.subr.mxu0 0.0
  %1076 = vmatpush2.msra.mxu0 0.0
  %1077 = vmatprep.subr.mxu0 0.0
  %1078 = vmatpush2.msra.mxu0 0.0
  %1079 = vmatprep.subr.mxu0 0.0
  %1080 = vmatpush2.msra.mxu0 0.0
  %1081 = vmatprep.subr.mxu0 0.0
  %1082 = vmatpush2.msra.mxu0 0.0
  %1083 = vmatprep.subr.mxu0 0.0
  %1084 = vmatpush2.msra.mxu0 0.0
  %1085 = vmatprep.subr.mxu0 0.0
  %1086 = vmatpush2.msra.mxu0 0.0
  %1087 = vmatprep.subr.mxu0 0.0
  %1088 = vmatpush2.msra.mxu0 0.0
  %1089 = vmatprep.subr.mxu0 0.0
  %1090 = vmatpush2.msra.mxu0 0.0
  %1091 = vmatprep.mubr.f32.mxu0 0.0
  %1092 = vmatmul.mubr.f32.gmra.mxu0 %v1025
  %v1093 = vpop.f32.mrf.mxu0
  %v1094 = vadd.f32 0.0, %v1093
  %v1095 = vpop.f32.mrf.mxu0
  %v1096 = vadd.f32 0.0, %v1095
  %1097 = vdwg.mxu0
  %v1098 = vadd.f32 %v1023, %v1094
  %v1099 = vadd.f32 %v1024, %v1096
  %v1100 = vtanh.pop %v1098
  %v1101 = vtanh.pop %v1099
  %v1102 = vmul.f32 %v1100, 0.5
  %v1103 = vmul.f32 %v1101, 0.5
  %v1104 = vadd.f32 %v1102, 0.5
  %v1105 = vadd.f32 %v1103, 0.5
  %v1106 = vmul.f32 %v1104, %v1014
  %v1107 = vmul.f32 %v1104, %v1101
  %1109 = vrot.lane.b32.xlu0 %v1107, 64
  %v1110 = vpop.permute.xlu0 %1109
  %v1112 = vadd.f32 %v1106, %v1110
  %v1113 = vtanh.pop %v1112
  %v1114 = vmul.f32 %v1105, %v1113
  %1116 = vrot.lane.b32.xlu0 %v1114, 64
  %v1117 = vpop.permute.xlu0 %1116
  %1119 = vst.msk [vmem:[#allocation2 + $0x38] sm:$0xff] %vm431, %v1117
  %1120 = vst.msk [vmem:[#allocation2] sm:$0xff] %vm433, %v1117
  %v1121 = vld [vmem:[#allocation2] sm:$0xff]
  %v1122 = vld [vmem:[#allocation2 + $0x8] sm:$0xff]
  %v1123 = vld [vmem:[#allocation2 + $0x10] sm:$0xff]
  %v1124 = vld [vmem:[#allocation2 + $0x18] sm:$0xff]
  %v1125 = vld [vmem:[#allocation2 + $0x20] sm:$0xff]
  %v1126 = vld [vmem:[#allocation2 + $0x28] sm:$0xff]
  %v1127 = vld [vmem:[#allocation2 + $0x30] sm:$0xff]
  %v1128 = vld [vmem:[#allocation2 + $0x38] sm:$0xff]
  %v1129 = vld [vmem:[%s5] sm:$0xff]
  %v1130 = vld [vmem:[%s5 + $0x8] sm:$0xff]
  %v1131 = vld [vmem:[%s5 + $0x10] sm:$0xff]
  %v1132 = vld [vmem:[%s5 + $0x18] sm:$0xff]
  %v1133 = vld [vmem:[%s5 + $0x20] sm:$0xff]
  %v1134 = vld [vmem:[%s5 + $0x28] sm:$0xff]
  %v1135 = vld [vmem:[%s5 + $0x30] sm:$0xff]
  %v1136 = vld [vmem:[%s5 + $0x38] sm:$0xff]
  %v1137 = vld [vmem:[%s5 + $0x40] sm:$0xff]
  %v1138 = vld [vmem:[%s5 + $0x48] sm:$0xff]
  %v1139 = vld [vmem:[%s5 + $0x50] sm:$0xff]
  %v1140 = vld [vmem:[%s5 + $0x58] sm:$0xff]
  %v1141 = vld [vmem:[%s5 + $0x60] sm:$0xff]
  %v1142 = vld [vmem:[%s5 + $0x68] sm:$0xff]
  %v1143 = vld [vmem:[%s5 + $0x70] sm:$0xff]
  %v1144 = vld [vmem:[%s5 + $0x78] sm:$0xff]
  %v1145 = vld [vmem:[%s7] sm:$0x3]
  %v1147 = vlaneseq
  %v1148 = vshrl.u32 %v1147, 7
  %v1149 = vsub.s32 0, %v1148
  %v1150 = vrot.slane %v1145, %v1149
  %v1151 = vlaneseq
  %v1152 = vshrl.u32 %v1151, 7
  %v1153 = vsub.s32 1, %v1152
  %v1154 = vrot.slane %v1145, %v1153
  %v1158 = vsel %vm335, %v1121, 0
  %v1161 = vsel %vm335, %v1122, 0
  %v1164 = vsel %vm335, %v1123, 0
  %v1167 = vsel %vm335, %v1124, 0
  %v1170 = vsel %vm335, %v1125, 0
  %v1173 = vsel %vm335, %v1126, 0
  %v1176 = vsel %vm335, %v1127, 0
  %v1179 = vsel %vm335, %v1128, 0
  %1181 = vmatprep.subr.mxu0 0.0
  %1182 = vmatpush1.msra.mxu0 0.0
  %1183 = vmatprep.subr.mxu0 0.0
  %1184 = vmatpush1.msra.mxu0 0.0
  %1185 = vmatprep.subr.mxu0 0.0
  %1186 = vmatpush1.msra.mxu0 0.0
  %1187 = vmatprep.subr.mxu0 0.0
  %1188 = vmatpush1.msra.mxu0 0.0
  %1189 = vmatprep.subr.mxu0 0.0
  %1190 = vmatpush1.msra.mxu0 0.0
  %1191 = vmatprep.subr.mxu0 0.0
  %1192 = vmatpush1.msra.mxu0 0.0
  %1193 = vmatprep.subr.mxu0 0.0
  %1194 = vmatpush1.msra.mxu0 0.0
  %1195 = vmatprep.subr.mxu0 0.0
  %1196 = vmatpush1.msra.mxu0 0.0
  %1197 = vmatprep.subr.mxu0 %v1144
  %1198 = vmatpush1.msra.mxu0 %v1143
  %1199 = vmatprep.subr.mxu0 %v1142
  %1200 = vmatpush1.msra.mxu0 %v1141
  %1201 = vmatprep.subr.mxu0 %v1140
  %1202 = vmatpush1.msra.mxu0 %v1139
  %1203 = vmatprep.subr.mxu0 %v1138
  %1204 = vmatpush1.msra.mxu0 %v1137
  %1205 = vmatprep.subr.mxu0 %v1136
  %1206 = vmatpush1.msra.mxu0 %v1135
  %1207 = vmatprep.subr.mxu0 %v1134
  %1208 = vmatpush1.msra.mxu0 %v1133
  %1209 = vmatprep.subr.mxu0 %v1132
  %1210 = vmatpush1.msra.mxu0 %v1131
  %1211 = vmatprep.subr.mxu0 %v1130
  %1212 = vmatpush1.msra.mxu0 %v1129
  %1213 = vmatprep.subr.mxu0 0.0
  %1214 = vmatpush2.msra.mxu0 0.0
  %1215 = vmatprep.subr.mxu0 0.0
  %1216 = vmatpush2.msra.mxu0 0.0
  %1217 = vmatprep.subr.mxu0 0.0
  %1218 = vmatpush2.msra.mxu0 0.0
  %1219 = vmatprep.subr.mxu0 0.0
  %1220 = vmatpush2.msra.mxu0 0.0
  %1221 = vmatprep.subr.mxu0 0.0
  %1222 = vmatpush2.msra.mxu0 0.0
  %1223 = vmatprep.subr.mxu0 0.0
  %1224 = vmatpush2.msra.mxu0 0.0
  %1225 = vmatprep.subr.mxu0 0.0
  %1226 = vmatpush2.msra.mxu0 0.0
  %1227 = vmatprep.subr.mxu0 0.0
  %1228 = vmatpush2.msra.mxu0 0.0
  %1229 = vmatprep.subr.mxu0 0.0
  %1230 = vmatpush2.msra.mxu0 0.0
  %1231 = vmatprep.subr.mxu0 0.0
  %1232 = vmatpush2.msra.mxu0 0.0
  %1233 = vmatprep.subr.mxu0 0.0
  %1234 = vmatpush2.msra.mxu0 0.0
  %1235 = vmatprep.subr.mxu0 0.0
  %1236 = vmatpush2.msra.mxu0 0.0
  %1237 = vmatprep.subr.mxu0 0.0
  %1238 = vmatpush2.msra.mxu0 0.0
  %1239 = vmatprep.subr.mxu0 0.0
  %1240 = vmatpush2.msra.mxu0 0.0
  %1241 = vmatprep.subr.mxu0 0.0
  %1242 = vmatpush2.msra.mxu0 0.0
  %1243 = vmatprep.subr.mxu0 0.0
  %1244 = vmatpush2.msra.mxu0 0.0
  %1245 = vmatprep.mubr.f32.mxu0 0.0
  %1246 = vmatmul.mubr.f32.gmra.mxu0 %v1158
  %v1247 = vpop.f32.mrf.mxu0
  %v1248 = vadd.f32 %v1150, %v1247
  %v1249 = vpop.f32.mrf.mxu0
  %v1250 = vadd.f32 %v1154, %v1249
  %1251 = vmatprep.mubr.f32.mxu0 0.0
  %1252 = vmatmul.mubr.f32.gmra.mxu0 %v1161
  %v1253 = vpop.f32.mrf.mxu0
  %v1254 = vadd.f32 %v1150, %v1253
  %v1255 = vpop.f32.mrf.mxu0
  %v1256 = vadd.f32 %v1154, %v1255
  %1257 = vmatprep.mubr.f32.mxu0 0.0
  %1258 = vmatmul.mubr.f32.gmra.mxu0 %v1164
  %v1259 = vpop.f32.mrf.mxu0
  %v1260 = vadd.f32 %v1150, %v1259
  %v1261 = vpop.f32.mrf.mxu0
  %v1262 = vadd.f32 %v1154, %v1261
  %1263 = vmatprep.mubr.f32.mxu0 0.0
  %1264 = vmatmul.mubr.f32.gmra.mxu0 %v1167
  %v1265 = vpop.f32.mrf.mxu0
  %v1266 = vadd.f32 %v1150, %v1265
  %v1267 = vpop.f32.mrf.mxu0
  %v1268 = vadd.f32 %v1154, %v1267
  %1269 = vmatprep.mubr.f32.mxu0 0.0
  %1270 = vmatmul.mubr.f32.gmra.mxu0 %v1170
  %v1271 = vpop.f32.mrf.mxu0
  %v1272 = vadd.f32 %v1150, %v1271
  %v1273 = vpop.f32.mrf.mxu0
  %v1274 = vadd.f32 %v1154, %v1273
  %1275 = vmatprep.mubr.f32.mxu0 0.0
  %1276 = vmatmul.mubr.f32.gmra.mxu0 %v1173
  %v1277 = vpop.f32.mrf.mxu0
  %v1278 = vadd.f32 %v1150, %v1277
  %v1279 = vpop.f32.mrf.mxu0
  %v1280 = vadd.f32 %v1154, %v1279
  %1281 = vmatprep.mubr.f32.mxu0 0.0
  %1282 = vmatmul.mubr.f32.gmra.mxu0 %v1176
  %v1283 = vpop.f32.mrf.mxu0
  %v1284 = vadd.f32 %v1150, %v1283
  %v1285 = vpop.f32.mrf.mxu0
  %v1286 = vadd.f32 %v1154, %v1285
  %1287 = vmatprep.mubr.f32.mxu0 0.0
  %1288 = vmatmul.mubr.f32.gmra.mxu0 %v1179
  %v1289 = vpop.f32.mrf.mxu0
  %v1290 = vadd.f32 %v1150, %v1289
  %v1291 = vpop.f32.mrf.mxu0
  %v1292 = vadd.f32 %v1154, %v1291
  %1293 = vdwg.mxu0
  %v1294 = vld [vmem:[%s6] sm:$0xff]
  %v1295 = vld [vmem:[%s6 + $0x8] sm:$0xff]
  %v1296 = vld [vmem:[%s6 + $0x10] sm:$0xff]
  %v1297 = vld [vmem:[%s6 + $0x18] sm:$0xff]
  %v1298 = vld [vmem:[%s6 + $0x20] sm:$0xff]
  %v1299 = vld [vmem:[%s6 + $0x28] sm:$0xff]
  %v1300 = vld [vmem:[%s6 + $0x30] sm:$0xff]
  %v1301 = vld [vmem:[%s6 + $0x38] sm:$0xff]
  %v1302 = vld [vmem:[%s6 + $0x40] sm:$0xff]
  %v1303 = vld [vmem:[%s6 + $0x48] sm:$0xff]
  %v1304 = vld [vmem:[%s6 + $0x50] sm:$0xff]
  %v1305 = vld [vmem:[%s6 + $0x58] sm:$0xff]
  %v1306 = vld [vmem:[%s6 + $0x60] sm:$0xff]
  %v1307 = vld [vmem:[%s6 + $0x68] sm:$0xff]
  %v1308 = vld [vmem:[%s6 + $0x70] sm:$0xff]
  %v1309 = vld [vmem:[%s6 + $0x78] sm:$0xff]
  %1310 = vmatprep.subr.mxu0 0.0
  %1311 = vmatpush1.msra.mxu0 0.0
  %1312 = vmatprep.subr.mxu0 0.0
  %1313 = vmatpush1.msra.mxu0 0.0
  %1314 = vmatprep.subr.mxu0 0.0
  %1315 = vmatpush1.msra.mxu0 0.0
  %1316 = vmatprep.subr.mxu0 0.0
  %1317 = vmatpush1.msra.mxu0 0.0
  %1318 = vmatprep.subr.mxu0 0.0
  %1319 = vmatpush1.msra.mxu0 0.0
  %1320 = vmatprep.subr.mxu0 0.0
  %1321 = vmatpush1.msra.mxu0 0.0
  %1322 = vmatprep.subr.mxu0 0.0
  %1323 = vmatpush1.msra.mxu0 0.0
  %1324 = vmatprep.subr.mxu0 0.0
  %1325 = vmatpush1.msra.mxu0 0.0
  %1326 = vmatprep.subr.mxu0 %v1309
  %1327 = vmatpush1.msra.mxu0 %v1308
  %1328 = vmatprep.subr.mxu0 %v1307
  %1329 = vmatpush1.msra.mxu0 %v1306
  %1330 = vmatprep.subr.mxu0 %v1305
  %1331 = vmatpush1.msra.mxu0 %v1304
  %1332 = vmatprep.subr.mxu0 %v1303
  %1333 = vmatpush1.msra.mxu0 %v1302
  %1334 = vmatprep.subr.mxu0 %v1301
  %1335 = vmatpush1.msra.mxu0 %v1300
  %1336 = vmatprep.subr.mxu0 %v1299
  %1337 = vmatpush1.msra.mxu0 %v1298
  %1338 = vmatprep.subr.mxu0 %v1297
  %1339 = vmatpush1.msra.mxu0 %v1296
  %1340 = vmatprep.subr.mxu0 %v1295
  %1341 = vmatpush1.msra.mxu0 %v1294
  %1342 = vmatprep.subr.mxu0 0.0
  %1343 = vmatpush2.msra.mxu0 0.0
  %1344 = vmatprep.subr.mxu0 0.0
  %1345 = vmatpush2.msra.mxu0 0.0
  %1346 = vmatprep.subr.mxu0 0.0
  %1347 = vmatpush2.msra.mxu0 0.0
  %1348 = vmatprep.subr.mxu0 0.0
  %1349 = vmatpush2.msra.mxu0 0.0
  %1350 = vmatprep.subr.mxu0 0.0
  %1351 = vmatpush2.msra.mxu0 0.0
  %1352 = vmatprep.subr.mxu0 0.0
  %1353 = vmatpush2.msra.mxu0 0.0
  %1354 = vmatprep.subr.mxu0 0.0
  %1355 = vmatpush2.msra.mxu0 0.0
  %1356 = vmatprep.subr.mxu0 0.0
  %1357 = vmatpush2.msra.mxu0 0.0
  %1358 = vmatprep.subr.mxu0 0.0
  %1359 = vmatpush2.msra.mxu0 0.0
  %1360 = vmatprep.subr.mxu0 0.0
  %1361 = vmatpush2.msra.mxu0 0.0
  %1362 = vmatprep.subr.mxu0 0.0
  %1363 = vmatpush2.msra.mxu0 0.0
  %1364 = vmatprep.subr.mxu0 0.0
  %1365 = vmatpush2.msra.mxu0 0.0
  %1366 = vmatprep.subr.mxu0 0.0
  %1367 = vmatpush2.msra.mxu0 0.0
  %1368 = vmatprep.subr.mxu0 0.0
  %1369 = vmatpush2.msra.mxu0 0.0
  %1370 = vmatprep.subr.mxu0 0.0
  %1371 = vmatpush2.msra.mxu0 0.0
  %1372 = vmatprep.subr.mxu0 0.0
  %1373 = vmatpush2.msra.mxu0 0.0
  %1374 = vmatprep.mubr.f32.mxu0 0.0
  %1375 = vmatmul.mubr.f32.gmra.mxu0 %v1158
  %v1376 = vpop.f32.mrf.mxu0
  %v1377 = vadd.f32 0.0, %v1376
  %v1378 = vpop.f32.mrf.mxu0
  %v1379 = vadd.f32 0.0, %v1378
  %1380 = vmatprep.mubr.f32.mxu0 0.0
  %1381 = vmatmul.mubr.f32.gmra.mxu0 %v1161
  %v1382 = vpop.f32.mrf.mxu0
  %v1383 = vadd.f32 0.0, %v1382
  %v1384 = vpop.f32.mrf.mxu0
  %v1385 = vadd.f32 0.0, %v1384
  %1386 = vmatprep.mubr.f32.mxu0 0.0
  %1387 = vmatmul.mubr.f32.gmra.mxu0 %v1164
  %v1388 = vpop.f32.mrf.mxu0
  %v1389 = vadd.f32 0.0, %v1388
  %v1390 = vpop.f32.mrf.mxu0
  %v1391 = vadd.f32 0.0, %v1390
  %1392 = vmatprep.mubr.f32.mxu0 0.0
  %1393 = vmatmul.mubr.f32.gmra.mxu0 %v1167
  %v1394 = vpop.f32.mrf.mxu0
  %v1395 = vadd.f32 0.0, %v1394
  %v1396 = vpop.f32.mrf.mxu0
  %v1397 = vadd.f32 0.0, %v1396
  %1398 = vmatprep.mubr.f32.mxu0 0.0
  %1399 = vmatmul.mubr.f32.gmra.mxu0 %v1170
  %v1400 = vpop.f32.mrf.mxu0
  %v1401 = vadd.f32 0.0, %v1400
  %v1402 = vpop.f32.mrf.mxu0
  %v1403 = vadd.f32 0.0, %v1402
  %1404 = vmatprep.mubr.f32.mxu0 0.0
  %1405 = vmatmul.mubr.f32.gmra.mxu0 %v1173
  %v1406 = vpop.f32.mrf.mxu0
  %v1407 = vadd.f32 0.0, %v1406
  %v1408 = vpop.f32.mrf.mxu0
  %v1409 = vadd.f32 0.0, %v1408
  %1410 = vmatprep.mubr.f32.mxu0 0.0
  %1411 = vmatmul.mubr.f32.gmra.mxu0 %v1176
  %v1412 = vpop.f32.mrf.mxu0
  %v1413 = vadd.f32 0.0, %v1412
  %v1414 = vpop.f32.mrf.mxu0
  %v1415 = vadd.f32 0.0, %v1414
  %1416 = vmatprep.mubr.f32.mxu0 0.0
  %1417 = vmatmul.mubr.f32.gmra.mxu0 %v1179
  %v1418 = vpop.f32.mrf.mxu0
  %v1419 = vadd.f32 0.0, %v1418
  %v1420 = vpop.f32.mrf.mxu0
  %v1421 = vadd.f32 0.0, %v1420
  %1422 = vdwg.mxu0
  %v1423 = vld [vmem:[%s8] sm:$0xff]
  %v1424 = vld [vmem:[%s8 + $0x8] sm:$0xff]
  %v1425 = vld [vmem:[%s8 + $0x10] sm:$0xff]
  %v1426 = vld [vmem:[%s8 + $0x18] sm:$0xff]
  %v1427 = vld [vmem:[%s8 + $0x20] sm:$0xff]
  %v1428 = vld [vmem:[%s8 + $0x28] sm:$0xff]
  %v1429 = vld [vmem:[%s8 + $0x30] sm:$0xff]
  %v1430 = vld [vmem:[%s8 + $0x38] sm:$0xff]
  %v1431 = vld [vmem:[%s8 + $0x40] sm:$0xff]
  %v1432 = vld [vmem:[%s8 + $0x48] sm:$0xff]
  %v1433 = vld [vmem:[%s8 + $0x50] sm:$0xff]
  %v1434 = vld [vmem:[%s8 + $0x58] sm:$0xff]
  %v1435 = vld [vmem:[%s8 + $0x60] sm:$0xff]
  %v1436 = vld [vmem:[%s8 + $0x68] sm:$0xff]
  %v1437 = vld [vmem:[%s8 + $0x70] sm:$0xff]
  %v1438 = vld [vmem:[%s8 + $0x78] sm:$0xff]
  %v1439 = vadd.f32 %v1248, %v1419
  %v1440 = vadd.f32 %v1250, %v1421
  %1441 = vmatprep.subr.mxu0 0.0
  %1442 = vmatpush1.msra.mxu0 0.0
  %1443 = vmatprep.subr.mxu0 0.0
  %1444 = vmatpush1.msra.mxu0 0.0
  %1445 = vmatprep.subr.mxu0 0.0
  %1446 = vmatpush1.msra.mxu0 0.0
  %1447 = vmatprep.subr.mxu0 0.0
  %1448 = vmatpush1.msra.mxu0 0.0
  %1449 = vmatprep.subr.mxu0 0.0
  %1450 = vmatpush1.msra.mxu0 0.0
  %1451 = vmatprep.subr.mxu0 0.0
  %1452 = vmatpush1.msra.mxu0 0.0
  %1453 = vmatprep.subr.mxu0 0.0
  %1454 = vmatpush1.msra.mxu0 0.0
  %1455 = vmatprep.subr.mxu0 0.0
  %1456 = vmatpush1.msra.mxu0 0.0
  %1457 = vmatprep.subr.mxu0 %v1438
  %1458 = vmatpush1.msra.mxu0 %v1437
  %1459 = vmatprep.subr.mxu0 %v1436
  %1460 = vmatpush1.msra.mxu0 %v1435
  %1461 = vmatprep.subr.mxu0 %v1434
  %1462 = vmatpush1.msra.mxu0 %v1433
  %1463 = vmatprep.subr.mxu0 %v1432
  %1464 = vmatpush1.msra.mxu0 %v1431
  %1465 = vmatprep.subr.mxu0 %v1430
  %1466 = vmatpush1.msra.mxu0 %v1429
  %1467 = vmatprep.subr.mxu0 %v1428
  %1468 = vmatpush1.msra.mxu0 %v1427
  %1469 = vmatprep.subr.mxu0 %v1426
  %1470 = vmatpush1.msra.mxu0 %v1425
  %1471 = vmatprep.subr.mxu0 %v1424
  %1472 = vmatpush1.msra.mxu0 %v1423
  %1473 = vmatprep.subr.mxu0 0.0
  %1474 = vmatpush2.msra.mxu0 0.0
  %1475 = vmatprep.subr.mxu0 0.0
  %1476 = vmatpush2.msra.mxu0 0.0
  %1477 = vmatprep.subr.mxu0 0.0
  %1478 = vmatpush2.msra.mxu0 0.0
  %1479 = vmatprep.subr.mxu0 0.0
  %1480 = vmatpush2.msra.mxu0 0.0
  %1481 = vmatprep.subr.mxu0 0.0
  %1482 = vmatpush2.msra.mxu0 0.0
  %1483 = vmatprep.subr.mxu0 0.0
  %1484 = vmatpush2.msra.mxu0 0.0
  %1485 = vmatprep.subr.mxu0 0.0
  %1486 = vmatpush2.msra.mxu0 0.0
  %1487 = vmatprep.subr.mxu0 0.0
  %1488 = vmatpush2.msra.mxu0 0.0
  %1489 = vmatprep.subr.mxu0 0.0
  %1490 = vmatpush2.msra.mxu0 0.0
  %1491 = vmatprep.subr.mxu0 0.0
  %1492 = vmatpush2.msra.mxu0 0.0
  %1493 = vmatprep.subr.mxu0 0.0
  %1494 = vmatpush2.msra.mxu0 0.0
  %1495 = vmatprep.subr.mxu0 0.0
  %1496 = vmatpush2.msra.mxu0 0.0
  %1497 = vmatprep.subr.mxu0 0.0
  %1498 = vmatpush2.msra.mxu0 0.0
  %1499 = vmatprep.subr.mxu0 0.0
  %1500 = vmatpush2.msra.mxu0 0.0
  %1501 = vmatprep.subr.mxu0 0.0
  %1502 = vmatpush2.msra.mxu0 0.0
  %1503 = vmatprep.subr.mxu0 0.0
  %1504 = vmatpush2.msra.mxu0 0.0
  %1505 = vmatprep.mubr.f32.mxu0 0.0
  %1506 = vmatmul.mubr.f32.gmra.mxu0 %v337
  %v1507 = vpop.f32.mrf.mxu0
  %v1508 = vadd.f32 0.0, %v1507
  %v1509 = vpop.f32.mrf.mxu0
  %v1510 = vadd.f32 0.0, %v1509
  %1511 = vdwg.mxu0
  %v1512 = vadd.f32 %v1439, %v1508
  %v1513 = vadd.f32 %v1440, %v1510
  %v1514 = vtanh.pop %v1512
  %v1515 = vtanh.pop %v1513
  %v1516 = vmul.f32 %v1514, 0.5
  %v1517 = vmul.f32 %v1515, 0.5
  %v1518 = vadd.f32 %v1516, 0.5
  %v1519 = vadd.f32 %v1517, 0.5
  %v1520 = vmul.f32 %v1518, 0.0
  %v1521 = vmul.f32 %v1518, %v1515
  %1523 = vrot.lane.b32.xlu0 %v1521, 64
  %v1524 = vpop.permute.xlu0 %1523
  %v1526 = vadd.f32 %v1520, %v1524
  %v1527 = vtanh.pop %v1526
  %v1528 = vmul.f32 %v1519, %v1527
  %1530 = vrot.lane.b32.xlu0 %v1528, 64
  %v1531 = vpop.permute.xlu0 %1530
  %1533 = vst.msk [vmem:[#allocation3] sm:$0xff] %vm431, %v1531
  %1534 = vst.msk [vmem:[#allocation3 + $0x38] sm:$0xff] %vm433, %v1531
  %v1535 = vadd.f32 %v1254, %v1413
  %v1536 = vadd.f32 %v1256, %v1415
  %v1537 = vsel %vm335, %v1531, 0
  %1539 = vmatprep.subr.mxu0 0.0
  %1540 = vmatpush1.msra.mxu0 0.0
  %1541 = vmatprep.subr.mxu0 0.0
  %1542 = vmatpush1.msra.mxu0 0.0
  %1543 = vmatprep.subr.mxu0 0.0
  %1544 = vmatpush1.msra.mxu0 0.0
  %1545 = vmatprep.subr.mxu0 0.0
  %1546 = vmatpush1.msra.mxu0 0.0
  %1547 = vmatprep.subr.mxu0 0.0
  %1548 = vmatpush1.msra.mxu0 0.0
  %1549 = vmatprep.subr.mxu0 0.0
  %1550 = vmatpush1.msra.mxu0 0.0
  %1551 = vmatprep.subr.mxu0 0.0
  %1552 = vmatpush1.msra.mxu0 0.0
  %1553 = vmatprep.subr.mxu0 0.0
  %1554 = vmatpush1.msra.mxu0 0.0
  %1555 = vmatprep.subr.mxu0 %v1438
  %1556 = vmatpush1.msra.mxu0 %v1437
  %1557 = vmatprep.subr.mxu0 %v1436
  %1558 = vmatpush1.msra.mxu0 %v1435
  %1559 = vmatprep.subr.mxu0 %v1434
  %1560 = vmatpush1.msra.mxu0 %v1433
  %1561 = vmatprep.subr.mxu0 %v1432
  %1562 = vmatpush1.msra.mxu0 %v1431
  %1563 = vmatprep.subr.mxu0 %v1430
  %1564 = vmatpush1.msra.mxu0 %v1429
  %1565 = vmatprep.subr.mxu0 %v1428
  %1566 = vmatpush1.msra.mxu0 %v1427
  %1567 = vmatprep.subr.mxu0 %v1426
  %1568 = vmatpush1.msra.mxu0 %v1425
  %1569 = vmatprep.subr.mxu0 %v1424
  %1570 = vmatpush1.msra.mxu0 %v1423
  %1571 = vmatprep.subr.mxu0 0.0
  %1572 = vmatpush2.msra.mxu0 0.0
  %1573 = vmatprep.subr.mxu0 0.0
  %1574 = vmatpush2.msra.mxu0 0.0
  %1575 = vmatprep.subr.mxu0 0.0
  %1576 = vmatpush2.msra.mxu0 0.0
  %1577 = vmatprep.subr.mxu0 0.0
  %1578 = vmatpush2.msra.mxu0 0.0
  %1579 = vmatprep.subr.mxu0 0.0
  %1580 = vmatpush2.msra.mxu0 0.0
  %1581 = vmatprep.subr.mxu0 0.0
  %1582 = vmatpush2.msra.mxu0 0.0
  %1583 = vmatprep.subr.mxu0 0.0
  %1584 = vmatpush2.msra.mxu0 0.0
  %1585 = vmatprep.subr.mxu0 0.0
  %1586 = vmatpush2.msra.mxu0 0.0
  %1587 = vmatprep.subr.mxu0 0.0
  %1588 = vmatpush2.msra.mxu0 0.0
  %1589 = vmatprep.subr.mxu0 0.0
  %1590 = vmatpush2.msra.mxu0 0.0
  %1591 = vmatprep.subr.mxu0 0.0
  %1592 = vmatpush2.msra.mxu0 0.0
  %1593 = vmatprep.subr.mxu0 0.0
  %1594 = vmatpush2.msra.mxu0 0.0
  %1595 = vmatprep.subr.mxu0 0.0
  %1596 = vmatpush2.msra.mxu0 0.0
  %1597 = vmatprep.subr.mxu0 0.0
  %1598 = vmatpush2.msra.mxu0 0.0
  %1599 = vmatprep.subr.mxu0 0.0
  %1600 = vmatpush2.msra.mxu0 0.0
  %1601 = vmatprep.subr.mxu0 0.0
  %1602 = vmatpush2.msra.mxu0 0.0
  %1603 = vmatprep.mubr.f32.mxu0 0.0
  %1604 = vmatmul.mubr.f32.gmra.mxu0 %v1537
  %v1605 = vpop.f32.mrf.mxu0
  %v1606 = vadd.f32 0.0, %v1605
  %v1607 = vpop.f32.mrf.mxu0
  %v1608 = vadd.f32 0.0, %v1607
  %1609 = vdwg.mxu0
  %v1610 = vadd.f32 %v1535, %v1606
  %v1611 = vadd.f32 %v1536, %v1608
  %v1612 = vtanh.pop %v1610
  %v1613 = vtanh.pop %v1611
  %v1614 = vmul.f32 %v1612, 0.5
  %v1615 = vmul.f32 %v1613, 0.5
  %v1616 = vadd.f32 %v1614, 0.5
  %v1617 = vadd.f32 %v1615, 0.5
  %v1618 = vmul.f32 %v1616, %v1526
  %v1619 = vmul.f32 %v1616, %v1613
  %1621 = vrot.lane.b32.xlu0 %v1619, 64
  %v1622 = vpop.permute.xlu0 %1621
  %v1624 = vadd.f32 %v1618, %v1622
  %v1625 = vtanh.pop %v1624
  %v1626 = vmul.f32 %v1617, %v1625
  %1628 = vrot.lane.b32.xlu0 %v1626, 64
  %v1629 = vpop.permute.xlu0 %1628
  %1631 = vst.msk [vmem:[#allocation3 + $0x8] sm:$0xff] %vm431, %v1629
  %1632 = vst.msk [vmem:[#allocation3 + $0x30] sm:$0xff] %vm433, %v1629
  %v1633 = vadd.f32 %v1260, %v1407
  %v1634 = vadd.f32 %v1262, %v1409
  %v1635 = vsel %vm335, %v1629, 0
  %1637 = vmatprep.subr.mxu0 0.0
  %1638 = vmatpush1.msra.mxu0 0.0
  %1639 = vmatprep.subr.mxu0 0.0
  %1640 = vmatpush1.msra.mxu0 0.0
  %1641 = vmatprep.subr.mxu0 0.0
  %1642 = vmatpush1.msra.mxu0 0.0
  %1643 = vmatprep.subr.mxu0 0.0
  %1644 = vmatpush1.msra.mxu0 0.0
  %1645 = vmatprep.subr.mxu0 0.0
  %1646 = vmatpush1.msra.mxu0 0.0
  %1647 = vmatprep.subr.mxu0 0.0
  %1648 = vmatpush1.msra.mxu0 0.0
  %1649 = vmatprep.subr.mxu0 0.0
  %1650 = vmatpush1.msra.mxu0 0.0
  %1651 = vmatprep.subr.mxu0 0.0
  %1652 = vmatpush1.msra.mxu0 0.0
  %1653 = vmatprep.subr.mxu0 %v1438
  %1654 = vmatpush1.msra.mxu0 %v1437
  %1655 = vmatprep.subr.mxu0 %v1436
  %1656 = vmatpush1.msra.mxu0 %v1435
  %1657 = vmatprep.subr.mxu0 %v1434
  %1658 = vmatpush1.msra.mxu0 %v1433
  %1659 = vmatprep.subr.mxu0 %v1432
  %1660 = vmatpush1.msra.mxu0 %v1431
  %1661 = vmatprep.subr.mxu0 %v1430
  %1662 = vmatpush1.msra.mxu0 %v1429
  %1663 = vmatprep.subr.mxu0 %v1428
  %1664 = vmatpush1.msra.mxu0 %v1427
  %1665 = vmatprep.subr.mxu0 %v1426
  %1666 = vmatpush1.msra.mxu0 %v1425
  %1667 = vmatprep.subr.mxu0 %v1424
  %1668 = vmatpush1.msra.mxu0 %v1423
  %1669 = vmatprep.subr.mxu0 0.0
  %1670 = vmatpush2.msra.mxu0 0.0
  %1671 = vmatprep.subr.mxu0 0.0
  %1672 = vmatpush2.msra.mxu0 0.0
  %1673 = vmatprep.subr.mxu0 0.0
  %1674 = vmatpush2.msra.mxu0 0.0
  %1675 = vmatprep.subr.mxu0 0.0
  %1676 = vmatpush2.msra.mxu0 0.0
  %1677 = vmatprep.subr.mxu0 0.0
  %1678 = vmatpush2.msra.mxu0 0.0
  %1679 = vmatprep.subr.mxu0 0.0
  %1680 = vmatpush2.msra.mxu0 0.0
  %1681 = vmatprep.subr.mxu0 0.0
  %1682 = vmatpush2.msra.mxu0 0.0
  %1683 = vmatprep.subr.mxu0 0.0
  %1684 = vmatpush2.msra.mxu0 0.0
  %1685 = vmatprep.subr.mxu0 0.0
  %1686 = vmatpush2.msra.mxu0 0.0
  %1687 = vmatprep.subr.mxu0 0.0
  %1688 = vmatpush2.msra.mxu0 0.0
  %1689 = vmatprep.subr.mxu0 0.0
  %1690 = vmatpush2.msra.mxu0 0.0
  %1691 = vmatprep.subr.mxu0 0.0
  %1692 = vmatpush2.msra.mxu0 0.0
  %1693 = vmatprep.subr.mxu0 0.0
  %1694 = vmatpush2.msra.mxu0 0.0
  %1695 = vmatprep.subr.mxu0 0.0
  %1696 = vmatpush2.msra.mxu0 0.0
  %1697 = vmatprep.subr.mxu0 0.0
  %1698 = vmatpush2.msra.mxu0 0.0
  %1699 = vmatprep.subr.mxu0 0.0
  %1700 = vmatpush2.msra.mxu0 0.0
  %1701 = vmatprep.mubr.f32.mxu0 0.0
  %1702 = vmatmul.mubr.f32.gmra.mxu0 %v1635
  %v1703 = vpop.f32.mrf.mxu0
  %v1704 = vadd.f32 0.0, %v1703
  %v1705 = vpop.f32.mrf.mxu0
  %v1706 = vadd.f32 0.0, %v1705
  %1707 = vdwg.mxu0
  %v1708 = vadd.f32 %v1633, %v1704
  %v1709 = vadd.f32 %v1634, %v1706
  %v1710 = vtanh.pop %v1708
  %v1711 = vtanh.pop %v1709
  %v1712 = vmul.f32 %v1710, 0.5
  %v1713 = vmul.f32 %v1711, 0.5
  %v1714 = vadd.f32 %v1712, 0.5
  %v1715 = vadd.f32 %v1713, 0.5
  %v1716 = vmul.f32 %v1714, %v1624
  %v1717 = vmul.f32 %v1714, %v1711
  %1719 = vrot.lane.b32.xlu0 %v1717, 64
  %v1720 = vpop.permute.xlu0 %1719
  %v1722 = vadd.f32 %v1716, %v1720
  %v1723 = vtanh.pop %v1722
  %v1724 = vmul.f32 %v1715, %v1723
  %1726 = vrot.lane.b32.xlu0 %v1724, 64
  %v1727 = vpop.permute.xlu0 %1726
  %1729 = vst.msk [vmem:[#allocation3 + $0x10] sm:$0xff] %vm431, %v1727
  %1730 = vst.msk [vmem:[#allocation3 + $0x28] sm:$0xff] %vm433, %v1727
  %v1731 = vadd.f32 %v1266, %v1401
  %v1732 = vadd.f32 %v1268, %v1403
  %v1733 = vsel %vm335, %v1727, 0
  %1735 = vmatprep.subr.mxu0 0.0
  %1736 = vmatpush1.msra.mxu0 0.0
  %1737 = vmatprep.subr.mxu0 0.0
  %1738 = vmatpush1.msra.mxu0 0.0
  %1739 = vmatprep.subr.mxu0 0.0
  %1740 = vmatpush1.msra.mxu0 0.0
  %1741 = vmatprep.subr.mxu0 0.0
  %1742 = vmatpush1.msra.mxu0 0.0
  %1743 = vmatprep.subr.mxu0 0.0
  %1744 = vmatpush1.msra.mxu0 0.0
  %1745 = vmatprep.subr.mxu0 0.0
  %1746 = vmatpush1.msra.mxu0 0.0
  %1747 = vmatprep.subr.mxu0 0.0
  %1748 = vmatpush1.msra.mxu0 0.0
  %1749 = vmatprep.subr.mxu0 0.0
  %1750 = vmatpush1.msra.mxu0 0.0
  %1751 = vmatprep.subr.mxu0 %v1438
  %1752 = vmatpush1.msra.mxu0 %v1437
  %1753 = vmatprep.subr.mxu0 %v1436
  %1754 = vmatpush1.msra.mxu0 %v1435
  %1755 = vmatprep.subr.mxu0 %v1434
  %1756 = vmatpush1.msra.mxu0 %v1433
  %1757 = vmatprep.subr.mxu0 %v1432
  %1758 = vmatpush1.msra.mxu0 %v1431
  %1759 = vmatprep.subr.mxu0 %v1430
  %1760 = vmatpush1.msra.mxu0 %v1429
  %1761 = vmatprep.subr.mxu0 %v1428
  %1762 = vmatpush1.msra.mxu0 %v1427
  %1763 = vmatprep.subr.mxu0 %v1426
  %1764 = vmatpush1.msra.mxu0 %v1425
  %1765 = vmatprep.subr.mxu0 %v1424
  %1766 = vmatpush1.msra.mxu0 %v1423
  %1767 = vmatprep.subr.mxu0 0.0
  %1768 = vmatpush2.msra.mxu0 0.0
  %1769 = vmatprep.subr.mxu0 0.0
  %1770 = vmatpush2.msra.mxu0 0.0
  %1771 = vmatprep.subr.mxu0 0.0
  %1772 = vmatpush2.msra.mxu0 0.0
  %1773 = vmatprep.subr.mxu0 0.0
  %1774 = vmatpush2.msra.mxu0 0.0
  %1775 = vmatprep.subr.mxu0 0.0
  %1776 = vmatpush2.msra.mxu0 0.0
  %1777 = vmatprep.subr.mxu0 0.0
  %1778 = vmatpush2.msra.mxu0 0.0
  %1779 = vmatprep.subr.mxu0 0.0
  %1780 = vmatpush2.msra.mxu0 0.0
  %1781 = vmatprep.subr.mxu0 0.0
  %1782 = vmatpush2.msra.mxu0 0.0
  %1783 = vmatprep.subr.mxu0 0.0
  %1784 = vmatpush2.msra.mxu0 0.0
  %1785 = vmatprep.subr.mxu0 0.0
  %1786 = vmatpush2.msra.mxu0 0.0
  %1787 = vmatprep.subr.mxu0 0.0
  %1788 = vmatpush2.msra.mxu0 0.0
  %1789 = vmatprep.subr.mxu0 0.0
  %1790 = vmatpush2.msra.mxu0 0.0
  %1791 = vmatprep.subr.mxu0 0.0
  %1792 = vmatpush2.msra.mxu0 0.0
  %1793 = vmatprep.subr.mxu0 0.0
  %1794 = vmatpush2.msra.mxu0 0.0
  %1795 = vmatprep.subr.mxu0 0.0
  %1796 = vmatpush2.msra.mxu0 0.0
  %1797 = vmatprep.subr.mxu0 0.0
  %1798 = vmatpush2.msra.mxu0 0.0
  %1799 = vmatprep.mubr.f32.mxu0 0.0
  %1800 = vmatmul.mubr.f32.gmra.mxu0 %v1733
  %v1801 = vpop.f32.mrf.mxu0
  %v1802 = vadd.f32 0.0, %v1801
  %v1803 = vpop.f32.mrf.mxu0
  %v1804 = vadd.f32 0.0, %v1803
  %1805 = vdwg.mxu0
  %v1806 = vadd.f32 %v1731, %v1802
  %v1807 = vadd.f32 %v1732, %v1804
  %v1808 = vtanh.pop %v1806
  %v1809 = vtanh.pop %v1807
  %v1810 = vmul.f32 %v1808, 0.5
  %v1811 = vmul.f32 %v1809, 0.5
  %v1812 = vadd.f32 %v1810, 0.5
  %v1813 = vadd.f32 %v1811, 0.5
  %v1814 = vmul.f32 %v1812, %v1722
  %v1815 = vmul.f32 %v1812, %v1809
  %1817 = vrot.lane.b32.xlu0 %v1815, 64
  %v1818 = vpop.permute.xlu0 %1817
  %v1820 = vadd.f32 %v1814, %v1818
  %v1821 = vtanh.pop %v1820
  %v1822 = vmul.f32 %v1813, %v1821
  %1824 = vrot.lane.b32.xlu0 %v1822, 64
  %v1825 = vpop.permute.xlu0 %1824
  %1827 = vst.msk [vmem:[#allocation3 + $0x18] sm:$0xff] %vm431, %v1825
  %1828 = vst.msk [vmem:[#allocation3 + $0x20] sm:$0xff] %vm433, %v1825
  %v1829 = vadd.f32 %v1272, %v1395
  %v1830 = vadd.f32 %v1274, %v1397
  %v1831 = vsel %vm335, %v1825, 0
  %1833 = vmatprep.subr.mxu0 0.0
  %1834 = vmatpush1.msra.mxu0 0.0
  %1835 = vmatprep.subr.mxu0 0.0
  %1836 = vmatpush1.msra.mxu0 0.0
  %1837 = vmatprep.subr.mxu0 0.0
  %1838 = vmatpush1.msra.mxu0 0.0
  %1839 = vmatprep.subr.mxu0 0.0
  %1840 = vmatpush1.msra.mxu0 0.0
  %1841 = vmatprep.subr.mxu0 0.0
  %1842 = vmatpush1.msra.mxu0 0.0
  %1843 = vmatprep.subr.mxu0 0.0
  %1844 = vmatpush1.msra.mxu0 0.0
  %1845 = vmatprep.subr.mxu0 0.0
  %1846 = vmatpush1.msra.mxu0 0.0
  %1847 = vmatprep.subr.mxu0 0.0
  %1848 = vmatpush1.msra.mxu0 0.0
  %1849 = vmatprep.subr.mxu0 %v1438
  %1850 = vmatpush1.msra.mxu0 %v1437
  %1851 = vmatprep.subr.mxu0 %v1436
  %1852 = vmatpush1.msra.mxu0 %v1435
  %1853 = vmatprep.subr.mxu0 %v1434
  %1854 = vmatpush1.msra.mxu0 %v1433
  %1855 = vmatprep.subr.mxu0 %v1432
  %1856 = vmatpush1.msra.mxu0 %v1431
  %1857 = vmatprep.subr.mxu0 %v1430
  %1858 = vmatpush1.msra.mxu0 %v1429
  %1859 = vmatprep.subr.mxu0 %v1428
  %1860 = vmatpush1.msra.mxu0 %v1427
  %1861 = vmatprep.subr.mxu0 %v1426
  %1862 = vmatpush1.msra.mxu0 %v1425
  %1863 = vmatprep.subr.mxu0 %v1424
  %1864 = vmatpush1.msra.mxu0 %v1423
  %1865 = vmatprep.subr.mxu0 0.0
  %1866 = vmatpush2.msra.mxu0 0.0
  %1867 = vmatprep.subr.mxu0 0.0
  %1868 = vmatpush2.msra.mxu0 0.0
  %1869 = vmatprep.subr.mxu0 0.0
  %1870 = vmatpush2.msra.mxu0 0.0
  %1871 = vmatprep.subr.mxu0 0.0
  %1872 = vmatpush2.msra.mxu0 0.0
  %1873 = vmatprep.subr.mxu0 0.0
  %1874 = vmatpush2.msra.mxu0 0.0
  %1875 = vmatprep.subr.mxu0 0.0
  %1876 = vmatpush2.msra.mxu0 0.0
  %1877 = vmatprep.subr.mxu0 0.0
  %1878 = vmatpush2.msra.mxu0 0.0
  %1879 = vmatprep.subr.mxu0 0.0
  %1880 = vmatpush2.msra.mxu0 0.0
  %1881 = vmatprep.subr.mxu0 0.0
  %1882 = vmatpush2.msra.mxu0 0.0
  %1883 = vmatprep.subr.mxu0 0.0
  %1884 = vmatpush2.msra.mxu0 0.0
  %1885 = vmatprep.subr.mxu0 0.0
  %1886 = vmatpush2.msra.mxu0 0.0
  %1887 = vmatprep.subr.mxu0 0.0
  %1888 = vmatpush2.msra.mxu0 0.0
  %1889 = vmatprep.subr.mxu0 0.0
  %1890 = vmatpush2.msra.mxu0 0.0
  %1891 = vmatprep.subr.mxu0 0.0
  %1892 = vmatpush2.msra.mxu0 0.0
  %1893 = vmatprep.subr.mxu0 0.0
  %1894 = vmatpush2.msra.mxu0 0.0
  %1895 = vmatprep.subr.mxu0 0.0
  %1896 = vmatpush2.msra.mxu0 0.0
  %1897 = vmatprep.mubr.f32.mxu0 0.0
  %1898 = vmatmul.mubr.f32.gmra.mxu0 %v1831
  %v1899 = vpop.f32.mrf.mxu0
  %v1900 = vadd.f32 0.0, %v1899
  %v1901 = vpop.f32.mrf.mxu0
  %v1902 = vadd.f32 0.0, %v1901
  %1903 = vdwg.mxu0
  %v1904 = vadd.f32 %v1829, %v1900
  %v1905 = vadd.f32 %v1830, %v1902
  %v1906 = vtanh.pop %v1904
  %v1907 = vtanh.pop %v1905
  %v1908 = vmul.f32 %v1906, 0.5
  %v1909 = vmul.f32 %v1907, 0.5
  %v1910 = vadd.f32 %v1908, 0.5
  %v1911 = vadd.f32 %v1909, 0.5
  %v1912 = vmul.f32 %v1910, %v1820
  %v1913 = vmul.f32 %v1910, %v1907
  %1915 = vrot.lane.b32.xlu0 %v1913, 64
  %v1916 = vpop.permute.xlu0 %1915
  %v1918 = vadd.f32 %v1912, %v1916
  %v1919 = vtanh.pop %v1918
  %v1920 = vmul.f32 %v1911, %v1919
  %1922 = vrot.lane.b32.xlu0 %v1920, 64
  %v1923 = vpop.permute.xlu0 %1922
  %1925 = vst.msk [vmem:[#allocation3 + $0x20] sm:$0xff] %vm431, %v1923
  %1926 = vst.msk [vmem:[#allocation3 + $0x18] sm:$0xff] %vm433, %v1923
  %v1927 = vadd.f32 %v1278, %v1389
  %v1928 = vadd.f32 %v1280, %v1391
  %v1929 = vsel %vm335, %v1923, 0
  %1931 = vmatprep.subr.mxu0 0.0
  %1932 = vmatpush1.msra.mxu0 0.0
  %1933 = vmatprep.subr.mxu0 0.0
  %1934 = vmatpush1.msra.mxu0 0.0
  %1935 = vmatprep.subr.mxu0 0.0
  %1936 = vmatpush1.msra.mxu0 0.0
  %1937 = vmatprep.subr.mxu0 0.0
  %1938 = vmatpush1.msra.mxu0 0.0
  %1939 = vmatprep.subr.mxu0 0.0
  %1940 = vmatpush1.msra.mxu0 0.0
  %1941 = vmatprep.subr.mxu0 0.0
  %1942 = vmatpush1.msra.mxu0 0.0
  %1943 = vmatprep.subr.mxu0 0.0
  %1944 = vmatpush1.msra.mxu0 0.0
  %1945 = vmatprep.subr.mxu0 0.0
  %1946 = vmatpush1.msra.mxu0 0.0
  %1947 = vmatprep.subr.mxu0 %v1438
  %1948 = vmatpush1.msra.mxu0 %v1437
  %1949 = vmatprep.subr.mxu0 %v1436
  %1950 = vmatpush1.msra.mxu0 %v1435
  %1951 = vmatprep.subr.mxu0 %v1434
  %1952 = vmatpush1.msra.mxu0 %v1433
  %1953 = vmatprep.subr.mxu0 %v1432
  %1954 = vmatpush1.msra.mxu0 %v1431
  %1955 = vmatprep.subr.mxu0 %v1430
  %1956 = vmatpush1.msra.mxu0 %v1429
  %1957 = vmatprep.subr.mxu0 %v1428
  %1958 = vmatpush1.msra.mxu0 %v1427
  %1959 = vmatprep.subr.mxu0 %v1426
  %1960 = vmatpush1.msra.mxu0 %v1425
  %1961 = vmatprep.subr.mxu0 %v1424
  %1962 = vmatpush1.msra.mxu0 %v1423
  %1963 = vmatprep.subr.mxu0 0.0
  %1964 = vmatpush2.msra.mxu0 0.0
  %1965 = vmatprep.subr.mxu0 0.0
  %1966 = vmatpush2.msra.mxu0 0.0
  %1967 = vmatprep.subr.mxu0 0.0
  %1968 = vmatpush2.msra.mxu0 0.0
  %1969 = vmatprep.subr.mxu0 0.0
  %1970 = vmatpush2.msra.mxu0 0.0
  %1971 = vmatprep.subr.mxu0 0.0
  %1972 = vmatpush2.msra.mxu0 0.0
  %1973 = vmatprep.subr.mxu0 0.0
  %1974 = vmatpush2.msra.mxu0 0.0
  %1975 = vmatprep.subr.mxu0 0.0
  %1976 = vmatpush2.msra.mxu0 0.0
  %1977 = vmatprep.subr.mxu0 0.0
  %1978 = vmatpush2.msra.mxu0 0.0
  %1979 = vmatprep.subr.mxu0 0.0
  %1980 = vmatpush2.msra.mxu0 0.0
  %1981 = vmatprep.subr.mxu0 0.0
  %1982 = vmatpush2.msra.mxu0 0.0
  %1983 = vmatprep.subr.mxu0 0.0
  %1984 = vmatpush2.msra.mxu0 0.0
  %1985 = vmatprep.subr.mxu0 0.0
  %1986 = vmatpush2.msra.mxu0 0.0
  %1987 = vmatprep.subr.mxu0 0.0
  %1988 = vmatpush2.msra.mxu0 0.0
  %1989 = vmatprep.subr.mxu0 0.0
  %1990 = vmatpush2.msra.mxu0 0.0
  %1991 = vmatprep.subr.mxu0 0.0
  %1992 = vmatpush2.msra.mxu0 0.0
  %1993 = vmatprep.subr.mxu0 0.0
  %1994 = vmatpush2.msra.mxu0 0.0
  %1995 = vmatprep.mubr.f32.mxu0 0.0
  %1996 = vmatmul.mubr.f32.gmra.mxu0 %v1929
  %v1997 = vpop.f32.mrf.mxu0
  %v1998 = vadd.f32 0.0, %v1997
  %v1999 = vpop.f32.mrf.mxu0
  %v2000 = vadd.f32 0.0, %v1999
  %2001 = vdwg.mxu0
  %v2002 = vadd.f32 %v1927, %v1998
  %v2003 = vadd.f32 %v1928, %v2000
  %v2004 = vtanh.pop %v2002
  %v2005 = vtanh.pop %v2003
  %v2006 = vmul.f32 %v2004, 0.5
  %v2007 = vmul.f32 %v2005, 0.5
  %v2008 = vadd.f32 %v2006, 0.5
  %v2009 = vadd.f32 %v2007, 0.5
  %v2010 = vmul.f32 %v2008, %v1918
  %v2011 = vmul.f32 %v2008, %v2005
  %2013 = vrot.lane.b32.xlu0 %v2011, 64
  %v2014 = vpop.permute.xlu0 %2013
  %v2016 = vadd.f32 %v2010, %v2014
  %v2017 = vtanh.pop %v2016
  %v2018 = vmul.f32 %v2009, %v2017
  %2020 = vrot.lane.b32.xlu0 %v2018, 64
  %v2021 = vpop.permute.xlu0 %2020
  %2023 = vst.msk [vmem:[#allocation3 + $0x28] sm:$0xff] %vm431, %v2021
  %2024 = vst.msk [vmem:[#allocation3 + $0x10] sm:$0xff] %vm433, %v2021
  %v2025 = vadd.f32 %v1284, %v1383
  %v2026 = vadd.f32 %v1286, %v1385
  %v2027 = vsel %vm335, %v2021, 0
  %2029 = vmatprep.subr.mxu0 0.0
  %2030 = vmatpush1.msra.mxu0 0.0
  %2031 = vmatprep.subr.mxu0 0.0
  %2032 = vmatpush1.msra.mxu0 0.0
  %2033 = vmatprep.subr.mxu0 0.0
  %2034 = vmatpush1.msra.mxu0 0.0
  %2035 = vmatprep.subr.mxu0 0.0
  %2036 = vmatpush1.msra.mxu0 0.0
  %2037 = vmatprep.subr.mxu0 0.0
  %2038 = vmatpush1.msra.mxu0 0.0
  %2039 = vmatprep.subr.mxu0 0.0
  %2040 = vmatpush1.msra.mxu0 0.0
  %2041 = vmatprep.subr.mxu0 0.0
  %2042 = vmatpush1.msra.mxu0 0.0
  %2043 = vmatprep.subr.mxu0 0.0
  %2044 = vmatpush1.msra.mxu0 0.0
  %2045 = vmatprep.subr.mxu0 %v1438
  %2046 = vmatpush1.msra.mxu0 %v1437
  %2047 = vmatprep.subr.mxu0 %v1436
  %2048 = vmatpush1.msra.mxu0 %v1435
  %2049 = vmatprep.subr.mxu0 %v1434
  %2050 = vmatpush1.msra.mxu0 %v1433
  %2051 = vmatprep.subr.mxu0 %v1432
  %2052 = vmatpush1.msra.mxu0 %v1431
  %2053 = vmatprep.subr.mxu0 %v1430
  %2054 = vmatpush1.msra.mxu0 %v1429
  %2055 = vmatprep.subr.mxu0 %v1428
  %2056 = vmatpush1.msra.mxu0 %v1427
  %2057 = vmatprep.subr.mxu0 %v1426
  %2058 = vmatpush1.msra.mxu0 %v1425
  %2059 = vmatprep.subr.mxu0 %v1424
  %2060 = vmatpush1.msra.mxu0 %v1423
  %2061 = vmatprep.subr.mxu0 0.0
  %2062 = vmatpush2.msra.mxu0 0.0
  %2063 = vmatprep.subr.mxu0 0.0
  %2064 = vmatpush2.msra.mxu0 0.0
  %2065 = vmatprep.subr.mxu0 0.0
  %2066 = vmatpush2.msra.mxu0 0.0
  %2067 = vmatprep.subr.mxu0 0.0
  %2068 = vmatpush2.msra.mxu0 0.0
  %2069 = vmatprep.subr.mxu0 0.0
  %2070 = vmatpush2.msra.mxu0 0.0
  %2071 = vmatprep.subr.mxu0 0.0
  %2072 = vmatpush2.msra.mxu0 0.0
  %2073 = vmatprep.subr.mxu0 0.0
  %2074 = vmatpush2.msra.mxu0 0.0
  %2075 = vmatprep.subr.mxu0 0.0
  %2076 = vmatpush2.msra.mxu0 0.0
  %2077 = vmatprep.subr.mxu0 0.0
  %2078 = vmatpush2.msra.mxu0 0.0
  %2079 = vmatprep.subr.mxu0 0.0
  %2080 = vmatpush2.msra.mxu0 0.0
  %2081 = vmatprep.subr.mxu0 0.0
  %2082 = vmatpush2.msra.mxu0 0.0
  %2083 = vmatprep.subr.mxu0 0.0
  %2084 = vmatpush2.msra.mxu0 0.0
  %2085 = vmatprep.subr.mxu0 0.0
  %2086 = vmatpush2.msra.mxu0 0.0
  %2087 = vmatprep.subr.mxu0 0.0
  %2088 = vmatpush2.msra.mxu0 0.0
  %2089 = vmatprep.subr.mxu0 0.0
  %2090 = vmatpush2.msra.mxu0 0.0
  %2091 = vmatprep.subr.mxu0 0.0
  %2092 = vmatpush2.msra.mxu0 0.0
  %2093 = vmatprep.mubr.f32.mxu0 0.0
  %2094 = vmatmul.mubr.f32.gmra.mxu0 %v2027
  %v2095 = vpop.f32.mrf.mxu0
  %v2096 = vadd.f32 0.0, %v2095
  %v2097 = vpop.f32.mrf.mxu0
  %v2098 = vadd.f32 0.0, %v2097
  %2099 = vdwg.mxu0
  %v2100 = vadd.f32 %v2025, %v2096
  %v2101 = vadd.f32 %v2026, %v2098
  %v2102 = vtanh.pop %v2100
  %v2103 = vtanh.pop %v2101
  %v2104 = vmul.f32 %v2102, 0.5
  %v2105 = vmul.f32 %v2103, 0.5
  %v2106 = vadd.f32 %v2104, 0.5
  %v2107 = vadd.f32 %v2105, 0.5
  %v2108 = vmul.f32 %v2106, %v2016
  %v2109 = vmul.f32 %v2106, %v2103
  %2111 = vrot.lane.b32.xlu0 %v2109, 64
  %v2112 = vpop.permute.xlu0 %2111
  %v2114 = vadd.f32 %v2108, %v2112
  %v2115 = vtanh.pop %v2114
  %v2116 = vmul.f32 %v2107, %v2115
  %2118 = vrot.lane.b32.xlu0 %v2116, 64
  %v2119 = vpop.permute.xlu0 %2118
  %2121 = vst.msk [vmem:[#allocation3 + $0x30] sm:$0xff] %vm431, %v2119
  %2122 = vst.msk [vmem:[#allocation3 + $0x8] sm:$0xff] %vm433, %v2119
  %v2123 = vadd.f32 %v1290, %v1377
  %v2124 = vadd.f32 %v1292, %v1379
  %v2125 = vsel %vm335, %v2119, 0
  %2127 = vmatprep.subr.mxu0 0.0
  %2128 = vmatpush1.msra.mxu0 0.0
  %2129 = vmatprep.subr.mxu0 0.0
  %2130 = vmatpush1.msra.mxu0 0.0
  %2131 = vmatprep.subr.mxu0 0.0
  %2132 = vmatpush1.msra.mxu0 0.0
  %2133 = vmatprep.subr.mxu0 0.0
  %2134 = vmatpush1.msra.mxu0 0.0
  %2135 = vmatprep.subr.mxu0 0.0
  %2136 = vmatpush1.msra.mxu0 0.0
  %2137 = vmatprep.subr.mxu0 0.0
  %2138 = vmatpush1.msra.mxu0 0.0
  %2139 = vmatprep.subr.mxu0 0.0
  %2140 = vmatpush1.msra.mxu0 0.0
  %2141 = vmatprep.subr.mxu0 0.0
  %2142 = vmatpush1.msra.mxu0 0.0
  %2143 = vmatprep.subr.mxu0 %v1438
  %2144 = vmatpush1.msra.mxu0 %v1437
  %2145 = vmatprep.subr.mxu0 %v1436
  %2146 = vmatpush1.msra.mxu0 %v1435
  %2147 = vmatprep.subr.mxu0 %v1434
  %2148 = vmatpush1.msra.mxu0 %v1433
  %2149 = vmatprep.subr.mxu0 %v1432
  %2150 = vmatpush1.msra.mxu0 %v1431
  %2151 = vmatprep.subr.mxu0 %v1430
  %2152 = vmatpush1.msra.mxu0 %v1429
  %2153 = vmatprep.subr.mxu0 %v1428
  %2154 = vmatpush1.msra.mxu0 %v1427
  %2155 = vmatprep.subr.mxu0 %v1426
  %2156 = vmatpush1.msra.mxu0 %v1425
  %2157 = vmatprep.subr.mxu0 %v1424
  %2158 = vmatpush1.msra.mxu0 %v1423
  %2159 = vmatprep.subr.mxu0 0.0
  %2160 = vmatpush2.msra.mxu0 0.0
  %2161 = vmatprep.subr.mxu0 0.0
  %2162 = vmatpush2.msra.mxu0 0.0
  %2163 = vmatprep.subr.mxu0 0.0
  %2164 = vmatpush2.msra.mxu0 0.0
  %2165 = vmatprep.subr.mxu0 0.0
  %2166 = vmatpush2.msra.mxu0 0.0
  %2167 = vmatprep.subr.mxu0 0.0
  %2168 = vmatpush2.msra.mxu0 0.0
  %2169 = vmatprep.subr.mxu0 0.0
  %2170 = vmatpush2.msra.mxu0 0.0
  %2171 = vmatprep.subr.mxu0 0.0
  %2172 = vmatpush2.msra.mxu0 0.0
  %2173 = vmatprep.subr.mxu0 0.0
  %2174 = vmatpush2.msra.mxu0 0.0
  %2175 = vmatprep.subr.mxu0 0.0
  %2176 = vmatpush2.msra.mxu0 0.0
  %2177 = vmatprep.subr.mxu0 0.0
  %2178 = vmatpush2.msra.mxu0 0.0
  %2179 = vmatprep.subr.mxu0 0.0
  %2180 = vmatpush2.msra.mxu0 0.0
  %2181 = vmatprep.subr.mxu0 0.0
  %2182 = vmatpush2.msra.mxu0 0.0
  %2183 = vmatprep.subr.mxu0 0.0
  %2184 = vmatpush2.msra.mxu0 0.0
  %2185 = vmatprep.subr.mxu0 0.0
  %2186 = vmatpush2.msra.mxu0 0.0
  %2187 = vmatprep.subr.mxu0 0.0
  %2188 = vmatpush2.msra.mxu0 0.0
  %2189 = vmatprep.subr.mxu0 0.0
  %2190 = vmatpush2.msra.mxu0 0.0
  %2191 = vmatprep.mubr.f32.mxu0 0.0
  %2192 = vmatmul.mubr.f32.gmra.mxu0 %v2125
  %v2193 = vpop.f32.mrf.mxu0
  %v2194 = vadd.f32 0.0, %v2193
  %v2195 = vpop.f32.mrf.mxu0
  %v2196 = vadd.f32 0.0, %v2195
  %2197 = vdwg.mxu0
  %v2198 = vadd.f32 %v2123, %v2194
  %v2199 = vadd.f32 %v2124, %v2196
  %v2200 = vtanh.pop %v2198
  %v2201 = vtanh.pop %v2199
  %v2202 = vmul.f32 %v2200, 0.5
  %v2203 = vmul.f32 %v2201, 0.5
  %v2204 = vadd.f32 %v2202, 0.5
  %v2205 = vadd.f32 %v2203, 0.5
  %v2206 = vmul.f32 %v2204, %v2114
  %v2207 = vmul.f32 %v2204, %v2201
  %2209 = vrot.lane.b32.xlu0 %v2207, 64
  %v2210 = vpop.permute.xlu0 %2209
  %v2212 = vadd.f32 %v2206, %v2210
  %v2213 = vtanh.pop %v2212
  %v2214 = vmul.f32 %v2205, %v2213
  %2216 = vrot.lane.b32.xlu0 %v2214, 64
  %v2217 = vpop.permute.xlu0 %2216
  %2219 = vst.msk [vmem:[#allocation3 + $0x38] sm:$0xff] %vm431, %v2217
  %2220 = vst.msk [vmem:[#allocation3] sm:$0xff] %vm433, %v2217
  %v2221 = vld [vmem:[#allocation3] sm:$0xff]
  %v2222 = vld [vmem:[#allocation3 + $0x8] sm:$0xff]
  %v2223 = vld [vmem:[#allocation3 + $0x10] sm:$0xff]
  %v2224 = vld [vmem:[#allocation3 + $0x18] sm:$0xff]
  %v2225 = vld [vmem:[#allocation3 + $0x20] sm:$0xff]
  %v2226 = vld [vmem:[#allocation3 + $0x28] sm:$0xff]
  %v2227 = vld [vmem:[#allocation3 + $0x30] sm:$0xff]
  %v2228 = vld [vmem:[#allocation3 + $0x38] sm:$0xff]
  %v2229 = vld [vmem:[%s9] sm:$0xff]
  %v2230 = vld [vmem:[%s9 + $0x8] sm:$0xff]
  %v2231 = vld [vmem:[%s9 + $0x10] sm:$0xff]
  %v2232 = vld [vmem:[%s9 + $0x18] sm:$0xff]
  %v2233 = vld [vmem:[%s9 + $0x20] sm:$0xff]
  %v2234 = vld [vmem:[%s9 + $0x28] sm:$0xff]
  %v2235 = vld [vmem:[%s9 + $0x30] sm:$0xff]
  %v2236 = vld [vmem:[%s9 + $0x38] sm:$0xff]
  %v2237 = vld [vmem:[%s10] sm:$0x1]
  %v2239 = vlaneseq
  %v2240 = vshrl.u32 %v2239, 7
  %v2241 = vsub.s32 0, %v2240
  %v2242 = vrot.slane %v2237, %v2241
  %v2245 = vsel %vm335, %v2221, 0
  %v2248 = vsel %vm335, %v2222, 0
  %v2251 = vsel %vm335, %v2223, 0
  %v2254 = vsel %vm335, %v2224, 0
  %v2257 = vsel %vm335, %v2225, 0
  %v2260 = vsel %vm335, %v2226, 0
  %v2263 = vsel %vm335, %v2227, 0
  %v2266 = vsel %vm335, %v2228, 0
  %2268 = vmatprep.subr.mxu0 0.0
  %2269 = vmatpush1.msra.mxu0 0.0
  %2270 = vmatprep.subr.mxu0 0.0
  %2271 = vmatpush1.msra.mxu0 0.0
  %2272 = vmatprep.subr.mxu0 0.0
  %2273 = vmatpush1.msra.mxu0 0.0
  %2274 = vmatprep.subr.mxu0 0.0
  %2275 = vmatpush1.msra.mxu0 0.0
  %2276 = vmatprep.subr.mxu0 0.0
  %2277 = vmatpush1.msra.mxu0 0.0
  %2278 = vmatprep.subr.mxu0 0.0
  %2279 = vmatpush1.msra.mxu0 0.0
  %2280 = vmatprep.subr.mxu0 0.0
  %2281 = vmatpush1.msra.mxu0 0.0
  %2282 = vmatprep.subr.mxu0 0.0
  %2283 = vmatpush1.msra.mxu0 0.0
  %2284 = vmatprep.subr.mxu0 0.0
  %2285 = vmatpush1.msra.mxu0 %v2236
  %2286 = vmatprep.subr.mxu0 0.0
  %2287 = vmatpush1.msra.mxu0 %v2235
  %2288 = vmatprep.subr.mxu0 0.0
  %2289 = vmatpush1.msra.mxu0 %v2234
  %2290 = vmatprep.subr.mxu0 0.0
  %2291 = vmatpush1.msra.mxu0 %v2233
  %2292 = vmatprep.subr.mxu0 0.0
  %2293 = vmatpush1.msra.mxu0 %v2232
  %2294 = vmatprep.subr.mxu0 0.0
  %2295 = vmatpush1.msra.mxu0 %v2231
  %2296 = vmatprep.subr.mxu0 0.0
  %2297 = vmatpush1.msra.mxu0 %v2230
  %2298 = vmatprep.subr.mxu0 0.0
  %2299 = vmatpush1.msra.mxu0 %v2229
  %2300 = vmatprep.subr.mxu0 0.0
  %2301 = vmatpush2.msra.mxu0 0.0
  %2302 = vmatprep.subr.mxu0 0.0
  %2303 = vmatpush2.msra.mxu0 0.0
  %2304 = vmatprep.subr.mxu0 0.0
  %2305 = vmatpush2.msra.mxu0 0.0
  %2306 = vmatprep.subr.mxu0 0.0
  %2307 = vmatpush2.msra.mxu0 0.0
  %2308 = vmatprep.subr.mxu0 0.0
  %2309 = vmatpush2.msra.mxu0 0.0
  %2310 = vmatprep.subr.mxu0 0.0
  %2311 = vmatpush2.msra.mxu0 0.0
  %2312 = vmatprep.subr.mxu0 0.0
  %2313 = vmatpush2.msra.mxu0 0.0
  %2314 = vmatprep.subr.mxu0 0.0
  %2315 = vmatpush2.msra.mxu0 0.0
  %2316 = vmatprep.subr.mxu0 0.0
  %2317 = vmatpush2.msra.mxu0 0.0
  %2318 = vmatprep.subr.mxu0 0.0
  %2319 = vmatpush2.msra.mxu0 0.0
  %2320 = vmatprep.subr.mxu0 0.0
  %2321 = vmatpush2.msra.mxu0 0.0
  %2322 = vmatprep.subr.mxu0 0.0
  %2323 = vmatpush2.msra.mxu0 0.0
  %2324 = vmatprep.subr.mxu0 0.0
  %2325 = vmatpush2.msra.mxu0 0.0
  %2326 = vmatprep.subr.mxu0 0.0
  %2327 = vmatpush2.msra.mxu0 0.0
  %2328 = vmatprep.subr.mxu0 0.0
  %2329 = vmatpush2.msra.mxu0 0.0
  %2330 = vmatprep.subr.mxu0 0.0
  %2331 = vmatpush2.msra.mxu0 0.0
  %2332 = vmatprep.mubr.f32.mxu0 0.0
  %2333 = vmatmul.mubr.f32.gmra.mxu0 %v2245
  %v2334 = vpop.f32.mrf.mxu0
  %v2335 = vadd.f32 %v2242, %v2334
  %v2336 = vpop.f32.mrf.mxu0
  %2337 = vmatprep.mubr.f32.mxu0 0.0
  %2338 = vmatmul.mubr.f32.gmra.mxu0 %v2248
  %v2339 = vpop.f32.mrf.mxu0
  %v2340 = vadd.f32 %v2242, %v2339
  %v2341 = vpop.f32.mrf.mxu0
  %2342 = vmatprep.mubr.f32.mxu0 0.0
  %2343 = vmatmul.mubr.f32.gmra.mxu0 %v2251
  %v2344 = vpop.f32.mrf.mxu0
  %v2345 = vadd.f32 %v2242, %v2344
  %v2346 = vpop.f32.mrf.mxu0
  %2347 = vmatprep.mubr.f32.mxu0 0.0
  %2348 = vmatmul.mubr.f32.gmra.mxu0 %v2254
  %v2349 = vpop.f32.mrf.mxu0
  %v2350 = vadd.f32 %v2242, %v2349
  %v2351 = vpop.f32.mrf.mxu0
  %2352 = vmatprep.mubr.f32.mxu0 0.0
  %2353 = vmatmul.mubr.f32.gmra.mxu0 %v2257
  %v2354 = vpop.f32.mrf.mxu0
  %v2355 = vadd.f32 %v2242, %v2354
  %v2356 = vpop.f32.mrf.mxu0
  %2357 = vmatprep.mubr.f32.mxu0 0.0
  %2358 = vmatmul.mubr.f32.gmra.mxu0 %v2260
  %v2359 = vpop.f32.mrf.mxu0
  %v2360 = vadd.f32 %v2242, %v2359
  %v2361 = vpop.f32.mrf.mxu0
  %2362 = vmatprep.mubr.f32.mxu0 0.0
  %2363 = vmatmul.mubr.f32.gmra.mxu0 %v2263
  %v2364 = vpop.f32.mrf.mxu0
  %v2365 = vadd.f32 %v2242, %v2364
  %v2366 = vpop.f32.mrf.mxu0
  %2367 = vmatprep.mubr.f32.mxu0 0.0
  %2368 = vmatmul.mubr.f32.gmra.mxu0 %v2266
  %v2369 = vpop.f32.mrf.mxu0
  %v2370 = vadd.f32 %v2242, %v2369
  %v2371 = vpop.f32.mrf.mxu0
  %2372 = vdwg.mxu0
  %2373 = vst [vmem:[%s11] sm:$0xff] %v2335
  %2374 = vst [vmem:[%s11 + $0x8] sm:$0xff] %v2340
  %2375 = vst [vmem:[%s11 + $0x10] sm:$0xff] %v2345
  %2376 = vst [vmem:[%s11 + $0x18] sm:$0xff] %v2350
  %2377 = vst [vmem:[%s11 + $0x20] sm:$0xff] %v2355
  %2378 = vst [vmem:[%s11 + $0x28] sm:$0xff] %v2360
  %2379 = vst [vmem:[%s11 + $0x30] sm:$0xff] %v2365
  %2380 = vst [vmem:[%s11 + $0x38] sm:$0xff] %v2370
  // Predicated region
  $region46: #{lstm_classifier_forward.1} parent=0 // pred_check
    _
  $region47: #{lstm_classifier_forward.1} parent=0 // pred_check_branch
    %2382 = sbr.rel (0) target = $region49
  $region48: #{lstm_classifier_forward.1} parent=0 // pred_region
    _
  $region49: #{lstm_classifier_forward.1} parent=0 // pred_fallthru
    _
  // Predicated region
  $region50: #{lstm_classifier_forward.1} parent=0 // pred_check
    _
  $region51: #{lstm_classifier_forward.1} parent=0 // pred_check_branch
    %2384 = sbr.rel (0) target = $region53
  $region52: #{lstm_classifier_forward.1} parent=0 // pred_region
    _
  $region53: #{lstm_classifier_forward.1} parent=0 // pred_fallthru
    _

</llo_original>
